<compile_context>
chip_gen: v5e
topology: v5e:2x2
jax: 0.10.0
libtpu: 0.0.40
codegen_flags: <defaults>
</compile_context>

<pallas_src>
import jax
import jax.numpy as jnp
import numpy as np
from jax.experimental import pallas as pl
from jax.experimental.pallas import tpu as pltpu

KERNELS = (1, 3, 5)
REDUCTION = 5
L_MIN = 32
BN_EPS = 1e-5
PAD = max(KERNELS) // 2            # halo width (2, for the 5x5 branch)
FEAT_DTYPE = jnp.bfloat16          # dtype of the streamed branch feature maps
VMEM_CAP = 48 * 1024 * 1024        # explicit scoped-VMEM budget (fits v7x 64MiB)
# TODO(synk): BatchNorm is implemented in inference mode (running stats);
# training-mode batch statistics are not reproduced.


# --------------------------------------------------------------------------
# pass 1: branch convs (shifted matmuls) + BN shift + ReLU + pool partial sums
# --------------------------------------------------------------------------
def _make_conv_pool_kernel(tile_h, width, channels):
    def kernel(x_ref, w_ref, shift_ref, feats_ref, ssum_ref):
        t = pl.program_id(1)

        @pl.when(t == 0)
        def _init():
            ssum_ref[...] = jnp.zeros_like(ssum_ref)

        # (tile_h + 2P, W + 2P, C): slice in f32 (robust), matmul in bf16 (MXU).
        xs = x_ref[0, 0].astype(jnp.float32)
        # 5 column-shifted views; row shifts below are free leading-dim slices.
        xcols = [xs[:, c0:c0 + width, :] for c0 in range(2 * PAD + 1)]
        shift_all = shift_ref[...]                            # (K, C) f32

        s_part = jnp.zeros((1, channels), jnp.float32)
        tap = 0
        for bi, k in enumerate(KERNELS):
            off = PAD - k // 2
            acc = jnp.zeros((tile_h * width, channels), jnp.float32)
            for di in range(k):
                for dj in range(k):
                    patch = xcols[off + dj][off + di:off + di + tile_h]
                    patch = patch.reshape(tile_h * width, channels)
                    acc = acc + jnp.dot(patch.astype(jnp.bfloat16), w_ref[tap],
                                        preferred_element_type=jnp.float32)
                    tap += 1
            # BN scale already folded into the weights; only shift + ReLU here.
            y = jnp.maximum(acc + shift_all[bi].reshape(1, channels), 0.0)
            feats_ref[bi, 0] = y.astype(FEAT_DTYPE)           # stream out now
            s_part = s_part + jnp.sum(y, axis=0, keepdims=True)

        ssum_ref[...] += s_part.reshape(1, 1, channels)

    return kernel


# --------------------------------------------------------------------------
# pass A: squeeze FC -> excite FCs -> branch softmax (tiny, whole-array VMEM)
# --------------------------------------------------------------------------
def _make_attention_kernel(inv_hw):
    n_branch = len(KERNELS)

    def kernel(ssum_ref, fcw_ref, fcb_ref, fcsw_ref, fcsb_ref, watt_ref):
        S = ssum_ref[...] * inv_hw                                        # (B, C)
        Z = jnp.dot(S, fcw_ref[...],
                    preferred_element_type=jnp.float32) + fcb_ref[...]    # (B, d)
        fcsw = fcsw_ref[...]
        fcsb = fcsb_ref[...]
        C = fcsb.shape[-1]
        atts = []
        for k in range(n_branch):
            a = jnp.dot(Z, fcsw[k], preferred_element_type=jnp.float32)
            atts.append(a + fcsb[k].reshape(1, C))                        # (B, C)
        m = atts[0]
        for k in range(1, n_branch):
            m = jnp.maximum(m, atts[k])
        exps = [jnp.exp(a - m) for a in atts]
        denom = exps[0]
        for k in range(1, n_branch):
            denom = denom + exps[k]
        inv = pl.reciprocal(denom, approx=True)
        for k in range(n_branch):
            watt_ref[k] = exps[k] * inv                                   # (B, C)

    return kernel


# --------------------------------------------------------------------------
# pass 2: weighted recombination  V = sum_k softmax_k * feat_k  (tiled)
# --------------------------------------------------------------------------
def _recombine_kernel(f_ref, w_ref, o_ref):
    w_all = w_ref[...]                                        # (1, K, C) f32
    C = w_all.shape[-1]
    acc = f_ref[0, 0].astype(jnp.float32) * w_all[0, 0].reshape(1, C)
    for k in range(1, len(KERNELS)):
        acc = acc + f_ref[k, 0].astype(jnp.float32) * w_all[0, k].reshape(1, C)
    o_ref[0] = acc


def _row_tile(h, max_tile=8):
    for t in range(min(h, max_tile), 0, -1):
        if h % t == 0:
            return t
    return h


def init_params(key, channel):
    d = max(L_MIN, channel // REDUCTION)

    def nxt():
        nonlocal key
        key, sub = jax.random.split(key)
        return sub

    convs = []
    for k in KERNELS:
        convs.append(dict(
            w=0.1 * jax.random.normal(nxt(), (k, k, channel, channel), jnp.float32),
            b=0.1 * jax.random.normal(nxt(), (channel,), jnp.float32),
            gamma=jax.random.uniform(nxt(), (channel,), jnp.float32, 0.5, 1.5),
            beta=0.1 * jax.random.normal(nxt(), (channel,), jnp.float32),
            mean=0.1 * jax.random.normal(nxt(), (channel,), jnp.float32),
            var=jax.random.uniform(nxt(), (channel,), jnp.float32, 0.5, 1.5),
        ))
    return dict(
        convs=convs,
        fc_w=0.1 * jax.random.normal(nxt(), (channel, d), jnp.float32),
        fc_b=0.1 * jax.random.normal(nxt(), (d,), jnp.float32),
        fcs_w=0.1 * jax.random.normal(nxt(), (len(KERNELS), d, channel), jnp.float32),
        fcs_b=0.1 * jax.random.normal(nxt(), (len(KERNELS), channel), jnp.float32),
    )


def sk_attention_pallas(x_nchw, params):
    B, C, H, W = x_nchw.shape
    d = params['fc_w'].shape[1]
    K = len(KERNELS)
    TH = _row_tile(H)
    T = H // TH
    HW = H * W

    x_nhwc = jnp.transpose(x_nchw, (0, 2, 3, 1)).astype(jnp.float32)
    xp = jnp.pad(x_nhwc, ((0, 0), (PAD, PAD), (PAD, PAD), (0, 0)))
    # overlapping (row-tile + halo) slabs, bf16: (B, T, TH+2P, W+2P, C)
    slabs = jnp.stack([xp[:, t * TH:t * TH + TH + 2 * PAD] for t in range(T)],
                      axis=1).astype(jnp.bfloat16)

    # Fold the BN scale into the conv weights, pack per-tap (Cin, Cout) matrices
    # ordered (branch, di, dj); keep only the additive shift per branch.
    taps, shifts = [], []
    for k, cp in zip(KERNELS, params['convs']):
        s = cp['gamma'] / jnp.sqrt(cp['var'] + BN_EPS)
        wk = cp['w'] * s[None, None, None, :]
        shifts.append(s * (cp['b'] - cp['mean']) + cp['beta'])
        for di in range(k):
            for dj in range(k):
                taps.append(wk[di, dj])
    w_taps = jnp.stack(taps, 0).astype(jnp.bfloat16)          # (35, C, C)
    shift = jnp.stack(shifts, 0).astype(jnp.float32)          # (K, C)
    NT = w_taps.shape[0]

    # -------- pass 1: branch convs + BN + ReLU + partial pool sums ----------
    feats, ssum = pl.pallas_call(
        _make_conv_pool_kernel(TH, W, C),
        grid_spec=pltpu.PrefetchScalarGridSpec(
            num_scalar_prefetch=0,
            grid=(B, T),
            in_specs=[
                pl.BlockSpec((1, 1, TH + 2 * PAD, W + 2 * PAD, C),
                             lambda b, t: (b, t, 0, 0, 0)),
                pl.BlockSpec((NT, C, C), lambda b, t: (0, 0, 0)),
                pl.BlockSpec((K, C), lambda b, t: (0, 0)),
            ],
            out_specs=[
                pl.BlockSpec((K, 1, TH * W, C), lambda b, t: (0, b, t, 0)),
                pl.BlockSpec((1, 1, C), lambda b, t: (b, 0, 0)),
            ]),
        out_shape=[
            jax.ShapeDtypeStruct((K, B, HW, C), FEAT_DTYPE),
            jax.ShapeDtypeStruct((B, 1, C), jnp.float32),
        ],
        compiler_params=pltpu.CompilerParams(
            dimension_semantics=("parallel", "arbitrary"),
            vmem_limit_bytes=VMEM_CAP),
        cost_estimate=pl.CostEstimate(
            flops=2 * B * HW * C * C * NT,
            transcendentals=0,
            bytes_accessed=(slabs.size * 2 + w_taps.size * 2 + shift.size * 4
                            + K * B * HW * C * 2 + B * C * 4)),
    )(slabs, w_taps, shift)

    # -------- tiny squeeze/excite + branch softmax ---------------------------
    vmem = pl.BlockSpec(memory_space=pltpu.MemorySpace.VMEM)
    watt = pl.pallas_call(
        _make_attention_kernel(1.0 / HW),
        out_shape=jax.ShapeDtypeStruct((K, B, C), jnp.float32),
        in_specs=[vmem] * 5,
        out_specs=vmem,
    )(ssum.reshape(B, C),
      params['fc_w'].astype(jnp.float32),
      params['fc_b'].reshape(1, d).astype(jnp.float32),
      params['fcs_w'].astype(jnp.float32),
      params['fcs_b'].astype(jnp.float32))
    watt = jnp.transpose(watt, (1, 0, 2))                     # (B, K, C)

    # -------- pass 2: weighted recombination --------------------------------
    out = pl.pallas_call(
        _recombine_kernel,
        grid_spec=pltpu.PrefetchScalarGridSpec(
            num_scalar_prefetch=0,
            grid=(B, T),
            in_specs=[
                pl.BlockSpec((K, 1, TH * W, C), lambda b, t: (0, b, t, 0)),
                pl.BlockSpec((1, K, C), lambda b, t: (b, 0, 0)),
            ],
            out_specs=pl.BlockSpec((1, TH * W, C), lambda b, t: (b, t, 0))),
        out_shape=jax.ShapeDtypeStruct((B, HW, C), jnp.float32),
        compiler_params=pltpu.CompilerParams(
            dimension_semantics=("parallel", "parallel"),
            vmem_limit_bytes=VMEM_CAP),
    )(feats, watt)

    return jnp.transpose(out.reshape(B, H, W, C), (0, 3, 1, 2))


def sk_attention_reference(x_nchw, params):
    """Pure-JAX f32 reference mirroring the PyTorch forward (inference-mode BN)."""
    B, C, H, W = x_nchw.shape
    x_nhwc = jnp.transpose(x_nchw, (0, 2, 3, 1)).astype(jnp.float32)

    def im2col(x, k):
        p = k // 2
        xp = jnp.pad(x, ((0, 0), (p, p), (p, p), (0, 0)))
        cols = [xp[:, di:di + H, dj:dj + W, :] for di in range(k) for dj in range(k)]
        return jnp.concatenate(cols, axis=-1).reshape(B, H * W, k * k * C)

    feats = []
    for k, cp in zip(KERNELS, params['convs']):
        pk = im2col(x_nhwc, k)
        conv = pk @ cp['w'].reshape(k * k * C, C) + cp['b']
        bn = cp['gamma'] * (conv - cp['mean']) / jnp.sqrt(cp['var'] + BN_EPS) + cp['beta']
        feats.append(jnp.maximum(bn, 0.0))                    # (B, HW, C)
    U = sum(feats)
    S = U.mean(axis=1)                                        # (B, C)
    Z = S @ params['fc_w'] + params['fc_b']                   # (B, d)
    atts = jnp.stack([Z @ params['fcs_w'][i] + params['fcs_b'][i]
                      for i in range(len(KERNELS))], 0)       # (K, B, C)
    watt = jax.nn.softmax(atts, axis=0)
    V = (watt[:, :, None, :] * jnp.stack(feats, 0)).sum(0)    # (B, HW, C)
    return jnp.transpose(V.reshape(B, H, W, C), (0, 3, 1, 2))


if __name__ == "__main__":
    key = jax.random.PRNGKey(0)
    key, xkey, pkey = jax.random.split(key, 3)
    B, C, H, W = 2, 4, 16, 16
    x = jax.random.normal(xkey, (B, C, H, W), jnp.float32)
    params = init_params(pkey, C)

    out = jax.jit(sk_attention_pallas)(x, params)
    out = jax.block_until_ready(out)

    ref = jax.block_until_ready(sk_attention_reference(x, params))
    assert out.shape == (B, C, H, W)
    assert np.all(np.isfinite(np.asarray(out)))
    assert np.allclose(np.asarray(out), np.asarray(ref), atol=5e-2, rtol=5e-2)
    print("KERNEL_OK")
</pallas_src>

<mosaic_0001>
module attributes {stable_mosaic.version = 11 : i64} {
  func.func @kernel(%arg0: i32, %arg1: i32, %arg2: memref<1x1x12x20x4xbf16, #tpu.memory_space<vmem>>, %arg3: memref<35x4x4xbf16, #tpu.memory_space<vmem>>, %arg4: memref<3x4xf32, #tpu.memory_space<vmem>>, %arg5: memref<3x1x128x4xbf16, #tpu.memory_space<vmem>>, %arg6: memref<1x1x4xf32, #tpu.memory_space<vmem>>) attributes {dimension_semantics = [#tpu.dimension_semantics<parallel>, #tpu.dimension_semantics<arbitrary>], iteration_bounds = array<i64: 2, 2>, scalar_prefetch = 0 : i64, scratch_operands = 0 : i64, tpu.core_type = #tpu.core_type<tc>, window_params = [{transform_indices = @transform_0, window_bounds = array<i64: 1, 1, 12, 20, 4>}, {pipeline_mode = #tpu.pipeline_mode<synchronous>, transform_indices = @transform_1, window_bounds = array<i64: 35, 4, 4>}, {pipeline_mode = #tpu.pipeline_mode<synchronous>, transform_indices = @transform_2, window_bounds = array<i64: 3, 4>}, {transform_indices = @transform_3, window_bounds = array<i64: 3, 1, 128, 4>}, {transform_indices = @transform_4, window_bounds = array<i64: 1, 1, 4>}]} {
    %c0_i32 = arith.constant 0 : i32
    %0 = arith.cmpi eq, %arg1, %c0_i32 : i32
    %1 = arith.extui %0 : i1 to i32
    %c0_i32_0 = arith.constant 0 : i32
    %2 = arith.cmpi ne, %1, %c0_i32_0 : i32
    scf.if %2 {
      %cst_140 = arith.constant 0.000000e+00 : f32
      %307 = vector.broadcast %cst_140 : f32 to vector<1x1x4xf32>
      %c0_141 = arith.constant 0 : index
      %c0_142 = arith.constant 0 : index
      %c0_143 = arith.constant 0 : index
      %308 = vector.load %arg6[%c0_141, %c0_142, %c0_143] : memref<1x1x4xf32, #tpu.memory_space<vmem>>, vector<1x1x4xf32>
      tpu.vector_store %arg6[%c0_141, %c0_142, %c0_143], %307 {strides = array<i32>} : memref<1x1x4xf32, #tpu.memory_space<vmem>>, vector<1x1x4xf32>,
    } else {
    }
    %c0 = arith.constant 0 : index
    %c0_1 = arith.constant 0 : index
    %c0_2 = arith.constant 0 : index
    %c0_3 = arith.constant 0 : index
    %c0_4 = arith.constant 0 : index
    %3 = vector.load %arg2[%c0, %c0_1, %c0_2, %c0_3, %c0_4] : memref<1x1x12x20x4xbf16, #tpu.memory_space<vmem>>, vector<1x1x12x20x4xbf16>
    %4 = vector.shape_cast %3 : vector<1x1x12x20x4xbf16> to vector<12x20x4xbf16>
    %5 = arith.extf %4 : vector<12x20x4xbf16> to vector<12x20x4xf32>
    %6 = vector.extract_strided_slice %5 {offsets = [0, 0, 0], sizes = [12, 16, 4], strides = [1, 1, 1]} : vector<12x20x4xf32> to vector<12x16x4xf32>
    %7 = vector.extract_strided_slice %5 {offsets = [0, 1, 0], sizes = [12, 16, 4], strides = [1, 1, 1]} : vector<12x20x4xf32> to vector<12x16x4xf32>
    %8 = vector.extract_strided_slice %5 {offsets = [0, 2, 0], sizes = [12, 16, 4], strides = [1, 1, 1]} : vector<12x20x4xf32> to vector<12x16x4xf32>
    %9 = vector.extract_strided_slice %5 {offsets = [0, 3, 0], sizes = [12, 16, 4], strides = [1, 1, 1]} : vector<12x20x4xf32> to vector<12x16x4xf32>
    %10 = vector.extract_strided_slice %5 {offsets = [0, 4, 0], sizes = [12, 16, 4], strides = [1, 1, 1]} : vector<12x20x4xf32> to vector<12x16x4xf32>
    %c0_5 = arith.constant 0 : index
    %c0_6 = arith.constant 0 : index
    %11 = vector.load %arg4[%c0_5, %c0_6] : memref<3x4xf32, #tpu.memory_space<vmem>>, vector<3x4xf32>
    %cst = arith.constant 0.000000e+00 : f32
    %12 = vector.broadcast %cst : f32 to vector<1x4xf32>
    %cst_7 = arith.constant 0.000000e+00 : f32
    %13 = vector.broadcast %cst_7 : f32 to vector<128x4xf32>
    %14 = vector.extract_strided_slice %8 {offsets = [2, 0, 0], sizes = [8, 16, 4], strides = [1, 1, 1]} : vector<12x16x4xf32> to vector<8x16x4xf32>
    %15 = vector.shape_cast %14 : vector<8x16x4xf32> to vector<128x4xf32>
    %16 = arith.truncf %15 : vector<128x4xf32> to vector<128x4xbf16>
    %c0_8 = arith.constant 0 : index
    %c0_9 = arith.constant 0 : index
    %c0_10 = arith.constant 0 : index
    %17 = vector.load %arg3[%c0_8, %c0_9, %c0_10] : memref<35x4x4xbf16, #tpu.memory_space<vmem>>, vector<1x4x4xbf16>
    %18 = vector.shape_cast %17 : vector<1x4x4xbf16> to vector<4x4xbf16>
    %cst_11 = arith.constant dense<0.000000e+00> : vector<128x4xf32>
    %19 = tpu.matmul %16, %18, %cst_11 {dimension_numbers = #tpu.dot_dimension_numbers<[1], [0], [0], [1], [0, 0, 1, 1], [], []>} : vector<128x4xbf16>, vector<4x4xbf16>, vector<128x4xf32> -> vector<128x4xf32>
    %20 = arith.addf %13, %19 : vector<128x4xf32>
    %21 = vector.extract_strided_slice %11 {offsets = [0, 0], sizes = [1, 4], strides = [1, 1]} : vector<3x4xf32> to vector<1x4xf32>
    %22 = vector.shape_cast %21 : vector<1x4xf32> to vector<4xf32>
    %23 = vector.shape_cast %22 : vector<4xf32> to vector<1x4xf32>
    %24 = vector.broadcast %23 : vector<1x4xf32> to vector<128x4xf32>
    %25 = arith.addf %20, %24 : vector<128x4xf32>
    %cst_12 = arith.constant 0.000000e+00 : f32
    %26 = vector.broadcast %cst_12 : f32 to vector<128x4xf32>
    %27 = arith.maximumf %25, %26 : vector<128x4xf32>
    %28 = arith.truncf %27 : vector<128x4xf32> to vector<128x4xbf16>
    %c0_13 = arith.constant 0 : index
    %c0_14 = arith.constant 0 : index
    %c0_15 = arith.constant 0 : index
    %c0_16 = arith.constant 0 : index
    %29 = vector.load %arg5[%c0_13, %c0_14, %c0_15, %c0_16] : memref<3x1x128x4xbf16, #tpu.memory_space<vmem>>, vector<1x1x128x4xbf16>
    %30 = vector.shape_cast %29 : vector<1x1x128x4xbf16> to vector<128x4xbf16>
    %31 = vector.shape_cast %28 : vector<128x4xbf16> to vector<1x1x128x4xbf16>
    tpu.vector_store %arg5[%c0_13, %c0_14, %c0_15, %c0_16], %31 {strides = array<i32>} : memref<3x1x128x4xbf16, #tpu.memory_space<vmem>>, vector<1x1x128x4xbf16>,
    %cst_17 = arith.constant dense<0.000000e+00> : vector<4xf32>
    %32 = vector.multi_reduction <add>, %27, %cst_17 [0] : vector<128x4xf32> to vector<4xf32>
    %33 = vector.shape_cast %32 : vector<4xf32> to vector<1x4xf32>
    %34 = arith.addf %12, %33 : vector<1x4xf32>
    %cst_18 = arith.constant 0.000000e+00 : f32
    %35 = vector.broadcast %cst_18 : f32 to vector<128x4xf32>
    %36 = vector.extract_strided_slice %7 {offsets = [1, 0, 0], sizes = [8, 16, 4], strides = [1, 1, 1]} : vector<12x16x4xf32> to vector<8x16x4xf32>
    %37 = vector.shape_cast %36 : vector<8x16x4xf32> to vector<128x4xf32>
    %38 = arith.truncf %37 : vector<128x4xf32> to vector<128x4xbf16>
    %c1 = arith.constant 1 : index
    %c0_19 = arith.constant 0 : index
    %c0_20 = arith.constant 0 : index
    %39 = vector.load %arg3[%c1, %c0_19, %c0_20] : memref<35x4x4xbf16, #tpu.memory_space<vmem>>, vector<1x4x4xbf16>
    %40 = vector.shape_cast %39 : vector<1x4x4xbf16> to vector<4x4xbf16>
    %cst_21 = arith.constant dense<0.000000e+00> : vector<128x4xf32>
    %41 = tpu.matmul %38, %40, %cst_21 {dimension_numbers = #tpu.dot_dimension_numbers<[1], [0], [0], [1], [0, 0, 1, 1], [], []>} : vector<128x4xbf16>, vector<4x4xbf16>, vector<128x4xf32> -> vector<128x4xf32>
    %42 = arith.addf %35, %41 : vector<128x4xf32>
    %43 = vector.extract_strided_slice %8 {offsets = [1, 0, 0], sizes = [8, 16, 4], strides = [1, 1, 1]} : vector<12x16x4xf32> to vector<8x16x4xf32>
    %44 = vector.shape_cast %43 : vector<8x16x4xf32> to vector<128x4xf32>
    %45 = arith.truncf %44 : vector<128x4xf32> to vector<128x4xbf16>
    %c2 = arith.constant 2 : index
    %c0_22 = arith.constant 0 : index
    %c0_23 = arith.constant 0 : index
    %46 = vector.load %arg3[%c2, %c0_22, %c0_23] : memref<35x4x4xbf16, #tpu.memory_space<vmem>>, vector<1x4x4xbf16>
    %47 = vector.shape_cast %46 : vector<1x4x4xbf16> to vector<4x4xbf16>
    %cst_24 = arith.constant dense<0.000000e+00> : vector<128x4xf32>
    %48 = tpu.matmul %45, %47, %cst_24 {dimension_numbers = #tpu.dot_dimension_numbers<[1], [0], [0], [1], [0, 0, 1, 1], [], []>} : vector<128x4xbf16>, vector<4x4xbf16>, vector<128x4xf32> -> vector<128x4xf32>
    %49 = arith.addf %42, %48 : vector<128x4xf32>
    %50 = vector.extract_strided_slice %9 {offsets = [1, 0, 0], sizes = [8, 16, 4], strides = [1, 1, 1]} : vector<12x16x4xf32> to vector<8x16x4xf32>
    %51 = vector.shape_cast %50 : vector<8x16x4xf32> to vector<128x4xf32>
    %52 = arith.truncf %51 : vector<128x4xf32> to vector<128x4xbf16>
    %c3 = arith.constant 3 : index
    %c0_25 = arith.constant 0 : index
    %c0_26 = arith.constant 0 : index
    %53 = vector.load %arg3[%c3, %c0_25, %c0_26] : memref<35x4x4xbf16, #tpu.memory_space<vmem>>, vector<1x4x4xbf16>
    %54 = vector.shape_cast %53 : vector<1x4x4xbf16> to vector<4x4xbf16>
    %cst_27 = arith.constant dense<0.000000e+00> : vector<128x4xf32>
    %55 = tpu.matmul %52, %54, %cst_27 {dimension_numbers = #tpu.dot_dimension_numbers<[1], [0], [0], [1], [0, 0, 1, 1], [], []>} : vector<128x4xbf16>, vector<4x4xbf16>, vector<128x4xf32> -> vector<128x4xf32>
    %56 = arith.addf %49, %55 : vector<128x4xf32>
    %57 = vector.extract_strided_slice %7 {offsets = [2, 0, 0], sizes = [8, 16, 4], strides = [1, 1, 1]} : vector<12x16x4xf32> to vector<8x16x4xf32>
    %58 = vector.shape_cast %57 : vector<8x16x4xf32> to vector<128x4xf32>
    %59 = arith.truncf %58 : vector<128x4xf32> to vector<128x4xbf16>
    %c4 = arith.constant 4 : index
    %c0_28 = arith.constant 0 : index
    %c0_29 = arith.constant 0 : index
    %60 = vector.load %arg3[%c4, %c0_28, %c0_29] : memref<35x4x4xbf16, #tpu.memory_space<vmem>>, vector<1x4x4xbf16>
    %61 = vector.shape_cast %60 : vector<1x4x4xbf16> to vector<4x4xbf16>
    %cst_30 = arith.constant dense<0.000000e+00> : vector<128x4xf32>
    %62 = tpu.matmul %59, %61, %cst_30 {dimension_numbers = #tpu.dot_dimension_numbers<[1], [0], [0], [1], [0, 0, 1, 1], [], []>} : vector<128x4xbf16>, vector<4x4xbf16>, vector<128x4xf32> -> vector<128x4xf32>
    %63 = arith.addf %56, %62 : vector<128x4xf32>
    %64 = vector.extract_strided_slice %8 {offsets = [2, 0, 0], sizes = [8, 16, 4], strides = [1, 1, 1]} : vector<12x16x4xf32> to vector<8x16x4xf32>
    %65 = vector.shape_cast %64 : vector<8x16x4xf32> to vector<128x4xf32>
    %66 = arith.truncf %65 : vector<128x4xf32> to vector<128x4xbf16>
    %c5 = arith.constant 5 : index
    %c0_31 = arith.constant 0 : index
    %c0_32 = arith.constant 0 : index
    %67 = vector.load %arg3[%c5, %c0_31, %c0_32] : memref<35x4x4xbf16, #tpu.memory_space<vmem>>, vector<1x4x4xbf16>
    %68 = vector.shape_cast %67 : vector<1x4x4xbf16> to vector<4x4xbf16>
    %cst_33 = arith.constant dense<0.000000e+00> : vector<128x4xf32>
    %69 = tpu.matmul %66, %68, %cst_33 {dimension_numbers = #tpu.dot_dimension_numbers<[1], [0], [0], [1], [0, 0, 1, 1], [], []>} : vector<128x4xbf16>, vector<4x4xbf16>, vector<128x4xf32> -> vector<128x4xf32>
    %70 = arith.addf %63, %69 : vector<128x4xf32>
    %71 = vector.extract_strided_slice %9 {offsets = [2, 0, 0], sizes = [8, 16, 4], strides = [1, 1, 1]} : vector<12x16x4xf32> to vector<8x16x4xf32>
    %72 = vector.shape_cast %71 : vector<8x16x4xf32> to vector<128x4xf32>
    %73 = arith.truncf %72 : vector<128x4xf32> to vector<128x4xbf16>
    %c6 = arith.constant 6 : index
    %c0_34 = arith.constant 0 : index
    %c0_35 = arith.constant 0 : index
    %74 = vector.load %arg3[%c6, %c0_34, %c0_35] : memref<35x4x4xbf16, #tpu.memory_space<vmem>>, vector<1x4x4xbf16>
    %75 = vector.shape_cast %74 : vector<1x4x4xbf16> to vector<4x4xbf16>
    %cst_36 = arith.constant dense<0.000000e+00> : vector<128x4xf32>
    %76 = tpu.matmul %73, %75, %cst_36 {dimension_numbers = #tpu.dot_dimension_numbers<[1], [0], [0], [1], [0, 0, 1, 1], [], []>} : vector<128x4xbf16>, vector<4x4xbf16>, vector<128x4xf32> -> vector<128x4xf32>
    %77 = arith.addf %70, %76 : vector<128x4xf32>
    %78 = vector.extract_strided_slice %7 {offsets = [3, 0, 0], sizes = [8, 16, 4], strides = [1, 1, 1]} : vector<12x16x4xf32> to vector<8x16x4xf32>
    %79 = vector.shape_cast %78 : vector<8x16x4xf32> to vector<128x4xf32>
    %80 = arith.truncf %79 : vector<128x4xf32> to vector<128x4xbf16>
    %c7 = arith.constant 7 : index
    %c0_37 = arith.constant 0 : index
    %c0_38 = arith.constant 0 : index
    %81 = vector.load %arg3[%c7, %c0_37, %c0_38] : memref<35x4x4xbf16, #tpu.memory_space<vmem>>, vector<1x4x4xbf16>
    %82 = vector.shape_cast %81 : vector<1x4x4xbf16> to vector<4x4xbf16>
    %cst_39 = arith.constant dense<0.000000e+00> : vector<128x4xf32>
    %83 = tpu.matmul %80, %82, %cst_39 {dimension_numbers = #tpu.dot_dimension_numbers<[1], [0], [0], [1], [0, 0, 1, 1], [], []>} : vector<128x4xbf16>, vector<4x4xbf16>, vector<128x4xf32> -> vector<128x4xf32>
    %84 = arith.addf %77, %83 : vector<128x4xf32>
    %85 = vector.extract_strided_slice %8 {offsets = [3, 0, 0], sizes = [8, 16, 4], strides = [1, 1, 1]} : vector<12x16x4xf32> to vector<8x16x4xf32>
    %86 = vector.shape_cast %85 : vector<8x16x4xf32> to vector<128x4xf32>
    %87 = arith.truncf %86 : vector<128x4xf32> to vector<128x4xbf16>
    %c8 = arith.constant 8 : index
    %c0_40 = arith.constant 0 : index
    %c0_41 = arith.constant 0 : index
    %88 = vector.load %arg3[%c8, %c0_40, %c0_41] : memref<35x4x4xbf16, #tpu.memory_space<vmem>>, vector<1x4x4xbf16>
    %89 = vector.shape_cast %88 : vector<1x4x4xbf16> to vector<4x4xbf16>
    %cst_42 = arith.constant dense<0.000000e+00> : vector<128x4xf32>
    %90 = tpu.matmul %87, %89, %cst_42 {dimension_numbers = #tpu.dot_dimension_numbers<[1], [0], [0], [1], [0, 0, 1, 1], [], []>} : vector<128x4xbf16>, vector<4x4xbf16>, vector<128x4xf32> -> vector<128x4xf32>
    %91 = arith.addf %84, %90 : vector<128x4xf32>
    %92 = vector.extract_strided_slice %9 {offsets = [3, 0, 0], sizes = [8, 16, 4], strides = [1, 1, 1]} : vector<12x16x4xf32> to vector<8x16x4xf32>
    %93 = vector.shape_cast %92 : vector<8x16x4xf32> to vector<128x4xf32>
    %94 = arith.truncf %93 : vector<128x4xf32> to vector<128x4xbf16>
    %c9 = arith.constant 9 : index
    %c0_43 = arith.constant 0 : index
    %c0_44 = arith.constant 0 : index
    %95 = vector.load %arg3[%c9, %c0_43, %c0_44] : memref<35x4x4xbf16, #tpu.memory_space<vmem>>, vector<1x4x4xbf16>
    %96 = vector.shape_cast %95 : vector<1x4x4xbf16> to vector<4x4xbf16>
    %cst_45 = arith.constant dense<0.000000e+00> : vector<128x4xf32>
    %97 = tpu.matmul %94, %96, %cst_45 {dimension_numbers = #tpu.dot_dimension_numbers<[1], [0], [0], [1], [0, 0, 1, 1], [], []>} : vector<128x4xbf16>, vector<4x4xbf16>, vector<128x4xf32> -> vector<128x4xf32>
    %98 = arith.addf %91, %97 : vector<128x4xf32>
    %99 = vector.extract_strided_slice %11 {offsets = [1, 0], sizes = [1, 4], strides = [1, 1]} : vector<3x4xf32> to vector<1x4xf32>
    %100 = vector.shape_cast %99 : vector<1x4xf32> to vector<4xf32>
    %101 = vector.shape_cast %100 : vector<4xf32> to vector<1x4xf32>
    %102 = vector.broadcast %101 : vector<1x4xf32> to vector<128x4xf32>
    %103 = arith.addf %98, %102 : vector<128x4xf32>
    %cst_46 = arith.constant 0.000000e+00 : f32
    %104 = vector.broadcast %cst_46 : f32 to vector<128x4xf32>
    %105 = arith.maximumf %103, %104 : vector<128x4xf32>
    %106 = arith.truncf %105 : vector<128x4xf32> to vector<128x4xbf16>
    %c1_47 = arith.constant 1 : index
    %c0_48 = arith.constant 0 : index
    %c0_49 = arith.constant 0 : index
    %c0_50 = arith.constant 0 : index
    %107 = vector.load %arg5[%c1_47, %c0_48, %c0_49, %c0_50] : memref<3x1x128x4xbf16, #tpu.memory_space<vmem>>, vector<1x1x128x4xbf16>
    %108 = vector.shape_cast %107 : vector<1x1x128x4xbf16> to vector<128x4xbf16>
    %109 = vector.shape_cast %106 : vector<128x4xbf16> to vector<1x1x128x4xbf16>
    tpu.vector_store %arg5[%c1_47, %c0_48, %c0_49, %c0_50], %109 {strides = array<i32>} : memref<3x1x128x4xbf16, #tpu.memory_space<vmem>>, vector<1x1x128x4xbf16>,
    %cst_51 = arith.constant dense<0.000000e+00> : vector<4xf32>
    %110 = vector.multi_reduction <add>, %105, %cst_51 [0] : vector<128x4xf32> to vector<4xf32>
    %111 = vector.shape_cast %110 : vector<4xf32> to vector<1x4xf32>
    %112 = arith.addf %34, %111 : vector<1x4xf32>
    %cst_52 = arith.constant 0.000000e+00 : f32
    %113 = vector.broadcast %cst_52 : f32 to vector<128x4xf32>
    %114 = vector.extract_strided_slice %6 {offsets = [0, 0, 0], sizes = [8, 16, 4], strides = [1, 1, 1]} : vector<12x16x4xf32> to vector<8x16x4xf32>
    %115 = vector.shape_cast %114 : vector<8x16x4xf32> to vector<128x4xf32>
    %116 = arith.truncf %115 : vector<128x4xf32> to vector<128x4xbf16>
    %c10 = arith.constant 10 : index
    %c0_53 = arith.constant 0 : index
    %c0_54 = arith.constant 0 : index
    %117 = vector.load %arg3[%c10, %c0_53, %c0_54] : memref<35x4x4xbf16, #tpu.memory_space<vmem>>, vector<1x4x4xbf16>
    %118 = vector.shape_cast %117 : vector<1x4x4xbf16> to vector<4x4xbf16>
    %cst_55 = arith.constant dense<0.000000e+00> : vector<128x4xf32>
    %119 = tpu.matmul %116, %118, %cst_55 {dimension_numbers = #tpu.dot_dimension_numbers<[1], [0], [0], [1], [0, 0, 1, 1], [], []>} : vector<128x4xbf16>, vector<4x4xbf16>, vector<128x4xf32> -> vector<128x4xf32>
    %120 = arith.addf %113, %119 : vector<128x4xf32>
    %121 = vector.extract_strided_slice %7 {offsets = [0, 0, 0], sizes = [8, 16, 4], strides = [1, 1, 1]} : vector<12x16x4xf32> to vector<8x16x4xf32>
    %122 = vector.shape_cast %121 : vector<8x16x4xf32> to vector<128x4xf32>
    %123 = arith.truncf %122 : vector<128x4xf32> to vector<128x4xbf16>
    %c11 = arith.constant 11 : index
    %c0_56 = arith.constant 0 : index
    %c0_57 = arith.constant 0 : index
    %124 = vector.load %arg3[%c11, %c0_56, %c0_57] : memref<35x4x4xbf16, #tpu.memory_space<vmem>>, vector<1x4x4xbf16>
    %125 = vector.shape_cast %124 : vector<1x4x4xbf16> to vector<4x4xbf16>
    %cst_58 = arith.constant dense<0.000000e+00> : vector<128x4xf32>
    %126 = tpu.matmul %123, %125, %cst_58 {dimension_numbers = #tpu.dot_dimension_numbers<[1], [0], [0], [1], [0, 0, 1, 1], [], []>} : vector<128x4xbf16>, vector<4x4xbf16>, vector<128x4xf32> -> vector<128x4xf32>
    %127 = arith.addf %120, %126 : vector<128x4xf32>
    %128 = vector.extract_strided_slice %8 {offsets = [0, 0, 0], sizes = [8, 16, 4], strides = [1, 1, 1]} : vector<12x16x4xf32> to vector<8x16x4xf32>
    %129 = vector.shape_cast %128 : vector<8x16x4xf32> to vector<128x4xf32>
    %130 = arith.truncf %129 : vector<128x4xf32> to vector<128x4xbf16>
    %c12 = arith.constant 12 : index
    %c0_59 = arith.constant 0 : index
    %c0_60 = arith.constant 0 : index
    %131 = vector.load %arg3[%c12, %c0_59, %c0_60] : memref<35x4x4xbf16, #tpu.memory_space<vmem>>, vector<1x4x4xbf16>
    %132 = vector.shape_cast %131 : vector<1x4x4xbf16> to vector<4x4xbf16>
    %cst_61 = arith.constant dense<0.000000e+00> : vector<128x4xf32>
    %133 = tpu.matmul %130, %132, %cst_61 {dimension_numbers = #tpu.dot_dimension_numbers<[1], [0], [0], [1], [0, 0, 1, 1], [], []>} : vector<128x4xbf16>, vector<4x4xbf16>, vector<128x4xf32> -> vector<128x4xf32>
    %134 = arith.addf %127, %133 : vector<128x4xf32>
    %135 = vector.extract_strided_slice %9 {offsets = [0, 0, 0], sizes = [8, 16, 4], strides = [1, 1, 1]} : vector<12x16x4xf32> to vector<8x16x4xf32>
    %136 = vector.shape_cast %135 : vector<8x16x4xf32> to vector<128x4xf32>
    %137 = arith.truncf %136 : vector<128x4xf32> to vector<128x4xbf16>
    %c13 = arith.constant 13 : index
    %c0_62 = arith.constant 0 : index
    %c0_63 = arith.constant 0 : index
    %138 = vector.load %arg3[%c13, %c0_62, %c0_63] : memref<35x4x4xbf16, #tpu.memory_space<vmem>>, vector<1x4x4xbf16>
    %139 = vector.shape_cast %138 : vector<1x4x4xbf16> to vector<4x4xbf16>
    %cst_64 = arith.constant dense<0.000000e+00> : vector<128x4xf32>
    %140 = tpu.matmul %137, %139, %cst_64 {dimension_numbers = #tpu.dot_dimension_numbers<[1], [0], [0], [1], [0, 0, 1, 1], [], []>} : vector<128x4xbf16>, vector<4x4xbf16>, vector<128x4xf32> -> vector<128x4xf32>
    %141 = arith.addf %134, %140 : vector<128x4xf32>
    %142 = vector.extract_strided_slice %10 {offsets = [0, 0, 0], sizes = [8, 16, 4], strides = [1, 1, 1]} : vector<12x16x4xf32> to vector<8x16x4xf32>
    %143 = vector.shape_cast %142 : vector<8x16x4xf32> to vector<128x4xf32>
    %144 = arith.truncf %143 : vector<128x4xf32> to vector<128x4xbf16>
    %c14 = arith.constant 14 : index
    %c0_65 = arith.constant 0 : index
    %c0_66 = arith.constant 0 : index
    %145 = vector.load %arg3[%c14, %c0_65, %c0_66] : memref<35x4x4xbf16, #tpu.memory_space<vmem>>, vector<1x4x4xbf16>
    %146 = vector.shape_cast %145 : vector<1x4x4xbf16> to vector<4x4xbf16>
    %cst_67 = arith.constant dense<0.000000e+00> : vector<128x4xf32>
    %147 = tpu.matmul %144, %146, %cst_67 {dimension_numbers = #tpu.dot_dimension_numbers<[1], [0], [0], [1], [0, 0, 1, 1], [], []>} : vector<128x4xbf16>, vector<4x4xbf16>, vector<128x4xf32> -> vector<128x4xf32>
    %148 = arith.addf %141, %147 : vector<128x4xf32>
    %149 = vector.extract_strided_slice %6 {offsets = [1, 0, 0], sizes = [8, 16, 4], strides = [1, 1, 1]} : vector<12x16x4xf32> to vector<8x16x4xf32>
    %150 = vector.shape_cast %149 : vector<8x16x4xf32> to vector<128x4xf32>
    %151 = arith.truncf %150 : vector<128x4xf32> to vector<128x4xbf16>
    %c15 = arith.constant 15 : index
    %c0_68 = arith.constant 0 : index
    %c0_69 = arith.constant 0 : index
    %152 = vector.load %arg3[%c15, %c0_68, %c0_69] : memref<35x4x4xbf16, #tpu.memory_space<vmem>>, vector<1x4x4xbf16>
    %153 = vector.shape_cast %152 : vector<1x4x4xbf16> to vector<4x4xbf16>
    %cst_70 = arith.constant dense<0.000000e+00> : vector<128x4xf32>
    %154 = tpu.matmul %151, %153, %cst_70 {dimension_numbers = #tpu.dot_dimension_numbers<[1], [0], [0], [1], [0, 0, 1, 1], [], []>} : vector<128x4xbf16>, vector<4x4xbf16>, vector<128x4xf32> -> vector<128x4xf32>
    %155 = arith.addf %148, %154 : vector<128x4xf32>
    %156 = vector.extract_strided_slice %7 {offsets = [1, 0, 0], sizes = [8, 16, 4], strides = [1, 1, 1]} : vector<12x16x4xf32> to vector<8x16x4xf32>
    %157 = vector.shape_cast %156 : vector<8x16x4xf32> to vector<128x4xf32>
    %158 = arith.truncf %157 : vector<128x4xf32> to vector<128x4xbf16>
    %c16 = arith.constant 16 : index
    %c0_71 = arith.constant 0 : index
    %c0_72 = arith.constant 0 : index
    %159 = vector.load %arg3[%c16, %c0_71, %c0_72] : memref<35x4x4xbf16, #tpu.memory_space<vmem>>, vector<1x4x4xbf16>
    %160 = vector.shape_cast %159 : vector<1x4x4xbf16> to vector<4x4xbf16>
    %cst_73 = arith.constant dense<0.000000e+00> : vector<128x4xf32>
    %161 = tpu.matmul %158, %160, %cst_73 {dimension_numbers = #tpu.dot_dimension_numbers<[1], [0], [0], [1], [0, 0, 1, 1], [], []>} : vector<128x4xbf16>, vector<4x4xbf16>, vector<128x4xf32> -> vector<128x4xf32>
    %162 = arith.addf %155, %161 : vector<128x4xf32>
    %163 = vector.extract_strided_slice %8 {offsets = [1, 0, 0], sizes = [8, 16, 4], strides = [1, 1, 1]} : vector<12x16x4xf32> to vector<8x16x4xf32>
    %164 = vector.shape_cast %163 : vector<8x16x4xf32> to vector<128x4xf32>
    %165 = arith.truncf %164 : vector<128x4xf32> to vector<128x4xbf16>
    %c17 = arith.constant 17 : index
    %c0_74 = arith.constant 0 : index
    %c0_75 = arith.constant 0 : index
    %166 = vector.load %arg3[%c17, %c0_74, %c0_75] : memref<35x4x4xbf16, #tpu.memory_space<vmem>>, vector<1x4x4xbf16>
    %167 = vector.shape_cast %166 : vector<1x4x4xbf16> to vector<4x4xbf16>
    %cst_76 = arith.constant dense<0.000000e+00> : vector<128x4xf32>
    %168 = tpu.matmul %165, %167, %cst_76 {dimension_numbers = #tpu.dot_dimension_numbers<[1], [0], [0], [1], [0, 0, 1, 1], [], []>} : vector<128x4xbf16>, vector<4x4xbf16>, vector<128x4xf32> -> vector<128x4xf32>
    %169 = arith.addf %162, %168 : vector<128x4xf32>
    %170 = vector.extract_strided_slice %9 {offsets = [1, 0, 0], sizes = [8, 16, 4], strides = [1, 1, 1]} : vector<12x16x4xf32> to vector<8x16x4xf32>
    %171 = vector.shape_cast %170 : vector<8x16x4xf32> to vector<128x4xf32>
    %172 = arith.truncf %171 : vector<128x4xf32> to vector<128x4xbf16>
    %c18 = arith.constant 18 : index
    %c0_77 = arith.constant 0 : index
    %c0_78 = arith.constant 0 : index
    %173 = vector.load %arg3[%c18, %c0_77, %c0_78] : memref<35x4x4xbf16, #tpu.memory_space<vmem>>, vector<1x4x4xbf16>
    %174 = vector.shape_cast %173 : vector<1x4x4xbf16> to vector<4x4xbf16>
    %cst_79 = arith.constant dense<0.000000e+00> : vector<128x4xf32>
    %175 = tpu.matmul %172, %174, %cst_79 {dimension_numbers = #tpu.dot_dimension_numbers<[1], [0], [0], [1], [0, 0, 1, 1], [], []>} : vector<128x4xbf16>, vector<4x4xbf16>, vector<128x4xf32> -> vector<128x4xf32>
    %176 = arith.addf %169, %175 : vector<128x4xf32>
    %177 = vector.extract_strided_slice %10 {offsets = [1, 0, 0], sizes = [8, 16, 4], strides = [1, 1, 1]} : vector<12x16x4xf32> to vector<8x16x4xf32>
    %178 = vector.shape_cast %177 : vector<8x16x4xf32> to vector<128x4xf32>
    %179 = arith.truncf %178 : vector<128x4xf32> to vector<128x4xbf16>
    %c19 = arith.constant 19 : index
    %c0_80 = arith.constant 0 : index
    %c0_81 = arith.constant 0 : index
    %180 = vector.load %arg3[%c19, %c0_80, %c0_81] : memref<35x4x4xbf16, #tpu.memory_space<vmem>>, vector<1x4x4xbf16>
    %181 = vector.shape_cast %180 : vector<1x4x4xbf16> to vector<4x4xbf16>
    %cst_82 = arith.constant dense<0.000000e+00> : vector<128x4xf32>
    %182 = tpu.matmul %179, %181, %cst_82 {dimension_numbers = #tpu.dot_dimension_numbers<[1], [0], [0], [1], [0, 0, 1, 1], [], []>} : vector<128x4xbf16>, vector<4x4xbf16>, vector<128x4xf32> -> vector<128x4xf32>
    %183 = arith.addf %176, %182 : vector<128x4xf32>
    %184 = vector.extract_strided_slice %6 {offsets = [2, 0, 0], sizes = [8, 16, 4], strides = [1, 1, 1]} : vector<12x16x4xf32> to vector<8x16x4xf32>
    %185 = vector.shape_cast %184 : vector<8x16x4xf32> to vector<128x4xf32>
    %186 = arith.truncf %185 : vector<128x4xf32> to vector<128x4xbf16>
    %c20 = arith.constant 20 : index
    %c0_83 = arith.constant 0 : index
    %c0_84 = arith.constant 0 : index
    %187 = vector.load %arg3[%c20, %c0_83, %c0_84] : memref<35x4x4xbf16, #tpu.memory_space<vmem>>, vector<1x4x4xbf16>
    %188 = vector.shape_cast %187 : vector<1x4x4xbf16> to vector<4x4xbf16>
    %cst_85 = arith.constant dense<0.000000e+00> : vector<128x4xf32>
    %189 = tpu.matmul %186, %188, %cst_85 {dimension_numbers = #tpu.dot_dimension_numbers<[1], [0], [0], [1], [0, 0, 1, 1], [], []>} : vector<128x4xbf16>, vector<4x4xbf16>, vector<128x4xf32> -> vector<128x4xf32>
    %190 = arith.addf %183, %189 : vector<128x4xf32>
    %191 = vector.extract_strided_slice %7 {offsets = [2, 0, 0], sizes = [8, 16, 4], strides = [1, 1, 1]} : vector<12x16x4xf32> to vector<8x16x4xf32>
    %192 = vector.shape_cast %191 : vector<8x16x4xf32> to vector<128x4xf32>
    %193 = arith.truncf %192 : vector<128x4xf32> to vector<128x4xbf16>
    %c21 = arith.constant 21 : index
    %c0_86 = arith.constant 0 : index
    %c0_87 = arith.constant 0 : index
    %194 = vector.load %arg3[%c21, %c0_86, %c0_87] : memref<35x4x4xbf16, #tpu.memory_space<vmem>>, vector<1x4x4xbf16>
    %195 = vector.shape_cast %194 : vector<1x4x4xbf16> to vector<4x4xbf16>
    %cst_88 = arith.constant dense<0.000000e+00> : vector<128x4xf32>
    %196 = tpu.matmul %193, %195, %cst_88 {dimension_numbers = #tpu.dot_dimension_numbers<[1], [0], [0], [1], [0, 0, 1, 1], [], []>} : vector<128x4xbf16>, vector<4x4xbf16>, vector<128x4xf32> -> vector<128x4xf32>
    %197 = arith.addf %190, %196 : vector<128x4xf32>
    %198 = vector.extract_strided_slice %8 {offsets = [2, 0, 0], sizes = [8, 16, 4], strides = [1, 1, 1]} : vector<12x16x4xf32> to vector<8x16x4xf32>
    %199 = vector.shape_cast %198 : vector<8x16x4xf32> to vector<128x4xf32>
    %200 = arith.truncf %199 : vector<128x4xf32> to vector<128x4xbf16>
    %c22 = arith.constant 22 : index
    %c0_89 = arith.constant 0 : index
    %c0_90 = arith.constant 0 : index
    %201 = vector.load %arg3[%c22, %c0_89, %c0_90] : memref<35x4x4xbf16, #tpu.memory_space<vmem>>, vector<1x4x4xbf16>
    %202 = vector.shape_cast %201 : vector<1x4x4xbf16> to vector<4x4xbf16>
    %cst_91 = arith.constant dense<0.000000e+00> : vector<128x4xf32>
    %203 = tpu.matmul %200, %202, %cst_91 {dimension_numbers = #tpu.dot_dimension_numbers<[1], [0], [0], [1], [0, 0, 1, 1], [], []>} : vector<128x4xbf16>, vector<4x4xbf16>, vector<128x4xf32> -> vector<128x4xf32>
    %204 = arith.addf %197, %203 : vector<128x4xf32>
    %205 = vector.extract_strided_slice %9 {offsets = [2, 0, 0], sizes = [8, 16, 4], strides = [1, 1, 1]} : vector<12x16x4xf32> to vector<8x16x4xf32>
    %206 = vector.shape_cast %205 : vector<8x16x4xf32> to vector<128x4xf32>
    %207 = arith.truncf %206 : vector<128x4xf32> to vector<128x4xbf16>
    %c23 = arith.constant 23 : index
    %c0_92 = arith.constant 0 : index
    %c0_93 = arith.constant 0 : index
    %208 = vector.load %arg3[%c23, %c0_92, %c0_93] : memref<35x4x4xbf16, #tpu.memory_space<vmem>>, vector<1x4x4xbf16>
    %209 = vector.shape_cast %208 : vector<1x4x4xbf16> to vector<4x4xbf16>
    %cst_94 = arith.constant dense<0.000000e+00> : vector<128x4xf32>
    %210 = tpu.matmul %207, %209, %cst_94 {dimension_numbers = #tpu.dot_dimension_numbers<[1], [0], [0], [1], [0, 0, 1, 1], [], []>} : vector<128x4xbf16>, vector<4x4xbf16>, vector<128x4xf32> -> vector<128x4xf32>
    %211 = arith.addf %204, %210 : vector<128x4xf32>
    %212 = vector.extract_strided_slice %10 {offsets = [2, 0, 0], sizes = [8, 16, 4], strides = [1, 1, 1]} : vector<12x16x4xf32> to vector<8x16x4xf32>
    %213 = vector.shape_cast %212 : vector<8x16x4xf32> to vector<128x4xf32>
    %214 = arith.truncf %213 : vector<128x4xf32> to vector<128x4xbf16>
    %c24 = arith.constant 24 : index
    %c0_95 = arith.constant 0 : index
    %c0_96 = arith.constant 0 : index
    %215 = vector.load %arg3[%c24, %c0_95, %c0_96] : memref<35x4x4xbf16, #tpu.memory_space<vmem>>, vector<1x4x4xbf16>
    %216 = vector.shape_cast %215 : vector<1x4x4xbf16> to vector<4x4xbf16>
    %cst_97 = arith.constant dense<0.000000e+00> : vector<128x4xf32>
    %217 = tpu.matmul %214, %216, %cst_97 {dimension_numbers = #tpu.dot_dimension_numbers<[1], [0], [0], [1], [0, 0, 1, 1], [], []>} : vector<128x4xbf16>, vector<4x4xbf16>, vector<128x4xf32> -> vector<128x4xf32>
    %218 = arith.addf %211, %217 : vector<128x4xf32>
    %219 = vector.extract_strided_slice %6 {offsets = [3, 0, 0], sizes = [8, 16, 4], strides = [1, 1, 1]} : vector<12x16x4xf32> to vector<8x16x4xf32>
    %220 = vector.shape_cast %219 : vector<8x16x4xf32> to vector<128x4xf32>
    %221 = arith.truncf %220 : vector<128x4xf32> to vector<128x4xbf16>
    %c25 = arith.constant 25 : index
    %c0_98 = arith.constant 0 : index
    %c0_99 = arith.constant 0 : index
    %222 = vector.load %arg3[%c25, %c0_98, %c0_99] : memref<35x4x4xbf16, #tpu.memory_space<vmem>>, vector<1x4x4xbf16>
    %223 = vector.shape_cast %222 : vector<1x4x4xbf16> to vector<4x4xbf16>
    %cst_100 = arith.constant dense<0.000000e+00> : vector<128x4xf32>
    %224 = tpu.matmul %221, %223, %cst_100 {dimension_numbers = #tpu.dot_dimension_numbers<[1], [0], [0], [1], [0, 0, 1, 1], [], []>} : vector<128x4xbf16>, vector<4x4xbf16>, vector<128x4xf32> -> vector<128x4xf32>
    %225 = arith.addf %218, %224 : vector<128x4xf32>
    %226 = vector.extract_strided_slice %7 {offsets = [3, 0, 0], sizes = [8, 16, 4], strides = [1, 1, 1]} : vector<12x16x4xf32> to vector<8x16x4xf32>
    %227 = vector.shape_cast %226 : vector<8x16x4xf32> to vector<128x4xf32>
    %228 = arith.truncf %227 : vector<128x4xf32> to vector<128x4xbf16>
    %c26 = arith.constant 26 : index
    %c0_101 = arith.constant 0 : index
    %c0_102 = arith.constant 0 : index
    %229 = vector.load %arg3[%c26, %c0_101, %c0_102] : memref<35x4x4xbf16, #tpu.memory_space<vmem>>, vector<1x4x4xbf16>
    %230 = vector.shape_cast %229 : vector<1x4x4xbf16> to vector<4x4xbf16>
    %cst_103 = arith.constant dense<0.000000e+00> : vector<128x4xf32>
    %231 = tpu.matmul %228, %230, %cst_103 {dimension_numbers = #tpu.dot_dimension_numbers<[1], [0], [0], [1], [0, 0, 1, 1], [], []>} : vector<128x4xbf16>, vector<4x4xbf16>, vector<128x4xf32> -> vector<128x4xf32>
    %232 = arith.addf %225, %231 : vector<128x4xf32>
    %233 = vector.extract_strided_slice %8 {offsets = [3, 0, 0], sizes = [8, 16, 4], strides = [1, 1, 1]} : vector<12x16x4xf32> to vector<8x16x4xf32>
    %234 = vector.shape_cast %233 : vector<8x16x4xf32> to vector<128x4xf32>
    %235 = arith.truncf %234 : vector<128x4xf32> to vector<128x4xbf16>
    %c27 = arith.constant 27 : index
    %c0_104 = arith.constant 0 : index
    %c0_105 = arith.constant 0 : index
    %236 = vector.load %arg3[%c27, %c0_104, %c0_105] : memref<35x4x4xbf16, #tpu.memory_space<vmem>>, vector<1x4x4xbf16>
    %237 = vector.shape_cast %236 : vector<1x4x4xbf16> to vector<4x4xbf16>
    %cst_106 = arith.constant dense<0.000000e+00> : vector<128x4xf32>
    %238 = tpu.matmul %235, %237, %cst_106 {dimension_numbers = #tpu.dot_dimension_numbers<[1], [0], [0], [1], [0, 0, 1, 1], [], []>} : vector<128x4xbf16>, vector<4x4xbf16>, vector<128x4xf32> -> vector<128x4xf32>
    %239 = arith.addf %232, %238 : vector<128x4xf32>
    %240 = vector.extract_strided_slice %9 {offsets = [3, 0, 0], sizes = [8, 16, 4], strides = [1, 1, 1]} : vector<12x16x4xf32> to vector<8x16x4xf32>
    %241 = vector.shape_cast %240 : vector<8x16x4xf32> to vector<128x4xf32>
    %242 = arith.truncf %241 : vector<128x4xf32> to vector<128x4xbf16>
    %c28 = arith.constant 28 : index
    %c0_107 = arith.constant 0 : index
    %c0_108 = arith.constant 0 : index
    %243 = vector.load %arg3[%c28, %c0_107, %c0_108] : memref<35x4x4xbf16, #tpu.memory_space<vmem>>, vector<1x4x4xbf16>
    %244 = vector.shape_cast %243 : vector<1x4x4xbf16> to vector<4x4xbf16>
    %cst_109 = arith.constant dense<0.000000e+00> : vector<128x4xf32>
    %245 = tpu.matmul %242, %244, %cst_109 {dimension_numbers = #tpu.dot_dimension_numbers<[1], [0], [0], [1], [0, 0, 1, 1], [], []>} : vector<128x4xbf16>, vector<4x4xbf16>, vector<128x4xf32> -> vector<128x4xf32>
    %246 = arith.addf %239, %245 : vector<128x4xf32>
    %247 = vector.extract_strided_slice %10 {offsets = [3, 0, 0], sizes = [8, 16, 4], strides = [1, 1, 1]} : vector<12x16x4xf32> to vector<8x16x4xf32>
    %248 = vector.shape_cast %247 : vector<8x16x4xf32> to vector<128x4xf32>
    %249 = arith.truncf %248 : vector<128x4xf32> to vector<128x4xbf16>
    %c29 = arith.constant 29 : index
    %c0_110 = arith.constant 0 : index
    %c0_111 = arith.constant 0 : index
    %250 = vector.load %arg3[%c29, %c0_110, %c0_111] : memref<35x4x4xbf16, #tpu.memory_space<vmem>>, vector<1x4x4xbf16>
    %251 = vector.shape_cast %250 : vector<1x4x4xbf16> to vector<4x4xbf16>
    %cst_112 = arith.constant dense<0.000000e+00> : vector<128x4xf32>
    %252 = tpu.matmul %249, %251, %cst_112 {dimension_numbers = #tpu.dot_dimension_numbers<[1], [0], [0], [1], [0, 0, 1, 1], [], []>} : vector<128x4xbf16>, vector<4x4xbf16>, vector<128x4xf32> -> vector<128x4xf32>
    %253 = arith.addf %246, %252 : vector<128x4xf32>
    %254 = vector.extract_strided_slice %6 {offsets = [4, 0, 0], sizes = [8, 16, 4], strides = [1, 1, 1]} : vector<12x16x4xf32> to vector<8x16x4xf32>
    %255 = vector.shape_cast %254 : vector<8x16x4xf32> to vector<128x4xf32>
    %256 = arith.truncf %255 : vector<128x4xf32> to vector<128x4xbf16>
    %c30 = arith.constant 30 : index
    %c0_113 = arith.constant 0 : index
    %c0_114 = arith.constant 0 : index
    %257 = vector.load %arg3[%c30, %c0_113, %c0_114] : memref<35x4x4xbf16, #tpu.memory_space<vmem>>, vector<1x4x4xbf16>
    %258 = vector.shape_cast %257 : vector<1x4x4xbf16> to vector<4x4xbf16>
    %cst_115 = arith.constant dense<0.000000e+00> : vector<128x4xf32>
    %259 = tpu.matmul %256, %258, %cst_115 {dimension_numbers = #tpu.dot_dimension_numbers<[1], [0], [0], [1], [0, 0, 1, 1], [], []>} : vector<128x4xbf16>, vector<4x4xbf16>, vector<128x4xf32> -> vector<128x4xf32>
    %260 = arith.addf %253, %259 : vector<128x4xf32>
    %261 = vector.extract_strided_slice %7 {offsets = [4, 0, 0], sizes = [8, 16, 4], strides = [1, 1, 1]} : vector<12x16x4xf32> to vector<8x16x4xf32>
    %262 = vector.shape_cast %261 : vector<8x16x4xf32> to vector<128x4xf32>
    %263 = arith.truncf %262 : vector<128x4xf32> to vector<128x4xbf16>
    %c31 = arith.constant 31 : index
    %c0_116 = arith.constant 0 : index
    %c0_117 = arith.constant 0 : index
    %264 = vector.load %arg3[%c31, %c0_116, %c0_117] : memref<35x4x4xbf16, #tpu.memory_space<vmem>>, vector<1x4x4xbf16>
    %265 = vector.shape_cast %264 : vector<1x4x4xbf16> to vector<4x4xbf16>
    %cst_118 = arith.constant dense<0.000000e+00> : vector<128x4xf32>
    %266 = tpu.matmul %263, %265, %cst_118 {dimension_numbers = #tpu.dot_dimension_numbers<[1], [0], [0], [1], [0, 0, 1, 1], [], []>} : vector<128x4xbf16>, vector<4x4xbf16>, vector<128x4xf32> -> vector<128x4xf32>
    %267 = arith.addf %260, %266 : vector<128x4xf32>
    %268 = vector.extract_strided_slice %8 {offsets = [4, 0, 0], sizes = [8, 16, 4], strides = [1, 1, 1]} : vector<12x16x4xf32> to vector<8x16x4xf32>
    %269 = vector.shape_cast %268 : vector<8x16x4xf32> to vector<128x4xf32>
    %270 = arith.truncf %269 : vector<128x4xf32> to vector<128x4xbf16>
    %c32 = arith.constant 32 : index
    %c0_119 = arith.constant 0 : index
    %c0_120 = arith.constant 0 : index
    %271 = vector.load %arg3[%c32, %c0_119, %c0_120] : memref<35x4x4xbf16, #tpu.memory_space<vmem>>, vector<1x4x4xbf16>
    %272 = vector.shape_cast %271 : vector<1x4x4xbf16> to vector<4x4xbf16>
    %cst_121 = arith.constant dense<0.000000e+00> : vector<128x4xf32>
    %273 = tpu.matmul %270, %272, %cst_121 {dimension_numbers = #tpu.dot_dimension_numbers<[1], [0], [0], [1], [0, 0, 1, 1], [], []>} : vector<128x4xbf16>, vector<4x4xbf16>, vector<128x4xf32> -> vector<128x4xf32>
    %274 = arith.addf %267, %273 : vector<128x4xf32>
    %275 = vector.extract_strided_slice %9 {offsets = [4, 0, 0], sizes = [8, 16, 4], strides = [1, 1, 1]} : vector<12x16x4xf32> to vector<8x16x4xf32>
    %276 = vector.shape_cast %275 : vector<8x16x4xf32> to vector<128x4xf32>
    %277 = arith.truncf %276 : vector<128x4xf32> to vector<128x4xbf16>
    %c33 = arith.constant 33 : index
    %c0_122 = arith.constant 0 : index
    %c0_123 = arith.constant 0 : index
    %278 = vector.load %arg3[%c33, %c0_122, %c0_123] : memref<35x4x4xbf16, #tpu.memory_space<vmem>>, vector<1x4x4xbf16>
    %279 = vector.shape_cast %278 : vector<1x4x4xbf16> to vector<4x4xbf16>
    %cst_124 = arith.constant dense<0.000000e+00> : vector<128x4xf32>
    %280 = tpu.matmul %277, %279, %cst_124 {dimension_numbers = #tpu.dot_dimension_numbers<[1], [0], [0], [1], [0, 0, 1, 1], [], []>} : vector<128x4xbf16>, vector<4x4xbf16>, vector<128x4xf32> -> vector<128x4xf32>
    %281 = arith.addf %274, %280 : vector<128x4xf32>
    %282 = vector.extract_strided_slice %10 {offsets = [4, 0, 0], sizes = [8, 16, 4], strides = [1, 1, 1]} : vector<12x16x4xf32> to vector<8x16x4xf32>
    %283 = vector.shape_cast %282 : vector<8x16x4xf32> to vector<128x4xf32>
    %284 = arith.truncf %283 : vector<128x4xf32> to vector<128x4xbf16>
    %c34 = arith.constant 34 : index
    %c0_125 = arith.constant 0 : index
    %c0_126 = arith.constant 0 : index
    %285 = vector.load %arg3[%c34, %c0_125, %c0_126] : memref<35x4x4xbf16, #tpu.memory_space<vmem>>, vector<1x4x4xbf16>
    %286 = vector.shape_cast %285 : vector<1x4x4xbf16> to vector<4x4xbf16>
    %cst_127 = arith.constant dense<0.000000e+00> : vector<128x4xf32>
    %287 = tpu.matmul %284, %286, %cst_127 {dimension_numbers = #tpu.dot_dimension_numbers<[1], [0], [0], [1], [0, 0, 1, 1], [], []>} : vector<128x4xbf16>, vector<4x4xbf16>, vector<128x4xf32> -> vector<128x4xf32>
    %288 = arith.addf %281, %287 : vector<128x4xf32>
    %289 = vector.extract_strided_slice %11 {offsets = [2, 0], sizes = [1, 4], strides = [1, 1]} : vector<3x4xf32> to vector<1x4xf32>
    %290 = vector.shape_cast %289 : vector<1x4xf32> to vector<4xf32>
    %291 = vector.shape_cast %290 : vector<4xf32> to vector<1x4xf32>
    %292 = vector.broadcast %291 : vector<1x4xf32> to vector<128x4xf32>
    %293 = arith.addf %288, %292 : vector<128x4xf32>
    %cst_128 = arith.constant 0.000000e+00 : f32
    %294 = vector.broadcast %cst_128 : f32 to vector<128x4xf32>
    %295 = arith.maximumf %293, %294 : vector<128x4xf32>
    %296 = arith.truncf %295 : vector<128x4xf32> to vector<128x4xbf16>
    %c2_129 = arith.constant 2 : index
    %c0_130 = arith.constant 0 : index
    %c0_131 = arith.constant 0 : index
    %c0_132 = arith.constant 0 : index
    %297 = vector.load %arg5[%c2_129, %c0_130, %c0_131, %c0_132] : memref<3x1x128x4xbf16, #tpu.memory_space<vmem>>, vector<1x1x128x4xbf16>
    %298 = vector.shape_cast %297 : vector<1x1x128x4xbf16> to vector<128x4xbf16>
    %299 = vector.shape_cast %296 : vector<128x4xbf16> to vector<1x1x128x4xbf16>
    tpu.vector_store %arg5[%c2_129, %c0_130, %c0_131, %c0_132], %299 {strides = array<i32>} : memref<3x1x128x4xbf16, #tpu.memory_space<vmem>>, vector<1x1x128x4xbf16>,
    %cst_133 = arith.constant dense<0.000000e+00> : vector<4xf32>
    %300 = vector.multi_reduction <add>, %295, %cst_133 [0] : vector<128x4xf32> to vector<4xf32>
    %301 = vector.shape_cast %300 : vector<4xf32> to vector<1x4xf32>
    %302 = arith.addf %112, %301 : vector<1x4xf32>
    %c0_134 = arith.constant 0 : index
    %c0_135 = arith.constant 0 : index
    %c0_136 = arith.constant 0 : index
    %303 = vector.load %arg6[%c0_134, %c0_135, %c0_136] : memref<1x1x4xf32, #tpu.memory_space<vmem>>, vector<1x1x4xf32>
    %304 = vector.shape_cast %302 : vector<1x4xf32> to vector<1x1x4xf32>
    %305 = arith.addf %303, %304 : vector<1x1x4xf32>
    %c0_137 = arith.constant 0 : index
    %c0_138 = arith.constant 0 : index
    %c0_139 = arith.constant 0 : index
    %306 = vector.load %arg6[%c0_137, %c0_138, %c0_139] : memref<1x1x4xf32, #tpu.memory_space<vmem>>, vector<1x1x4xf32>
    tpu.vector_store %arg6[%c0_137, %c0_138, %c0_139], %305 {strides = array<i32>} : memref<1x1x4xf32, #tpu.memory_space<vmem>>, vector<1x1x4xf32>,
    return
  }
  func.func @transform_0(%arg0: i32, %arg1: i32) -> (i32, i32, i32, i32, i32) {
    %c0_i32 = arith.constant 0 : i32
    %c0_i32_0 = arith.constant 0 : i32
    %c0_i32_1 = arith.constant 0 : i32
    %c0_i32_2 = arith.constant 0 : i32
    return %arg0, %arg1, %c0_i32, %c0_i32_0, %c0_i32_1 : i32, i32, i32, i32, i32
  }
  func.func @transform_1(%arg0: i32, %arg1: i32) -> (i32, i32, i32) {
    %c0_i32 = arith.constant 0 : i32
    %c0_i32_0 = arith.constant 0 : i32
    %c0_i32_1 = arith.constant 0 : i32
    %c0_i32_2 = arith.constant 0 : i32
    return %c0_i32, %c0_i32_0, %c0_i32_1 : i32, i32, i32
  }
  func.func @transform_2(%arg0: i32, %arg1: i32) -> (i32, i32) {
    %c0_i32 = arith.constant 0 : i32
    %c0_i32_0 = arith.constant 0 : i32
    %c0_i32_1 = arith.constant 0 : i32
    return %c0_i32, %c0_i32_0 : i32, i32
  }
  func.func @transform_3(%arg0: i32, %arg1: i32) -> (i32, i32, i32, i32) {
    %c0_i32 = arith.constant 0 : i32
    %c0_i32_0 = arith.constant 0 : i32
    %c0_i32_1 = arith.constant 0 : i32
    return %c0_i32, %arg0, %arg1, %c0_i32_0 : i32, i32, i32, i32
  }
  func.func @transform_4(%arg0: i32, %arg1: i32) -> (i32, i32, i32) {
    %c0_i32 = arith.constant 0 : i32
    %c0_i32_0 = arith.constant 0 : i32
    %c0_i32_1 = arith.constant 0 : i32
    return %arg0, %c0_i32, %c0_i32_0 : i32, i32, i32
  }
}

module attributes {stable_mosaic.version = 11 : i64} {
  func.func @kernel(%arg0: memref<2x4xf32, #tpu.memory_space<vmem>>, %arg1: memref<4x32xf32, #tpu.memory_space<vmem>>, %arg2: memref<1x32xf32, #tpu.memory_space<vmem>>, %arg3: memref<3x32x4xf32, #tpu.memory_space<vmem>>, %arg4: memref<3x4xf32, #tpu.memory_space<vmem>>, %arg5: memref<3x2x4xf32, #tpu.memory_space<vmem>>) attributes {dimension_semantics = [], scalar_prefetch = 0 : i64, scratch_operands = 0 : i64, tpu.core_type = #tpu.core_type<tc>} {
    %c0 = arith.constant 0 : index
    %c0_0 = arith.constant 0 : index
    %0 = vector.load %arg0[%c0, %c0_0] : memref<2x4xf32, #tpu.memory_space<vmem>>, vector<2x4xf32>
    %cst = arith.constant 3.906250e-03 : f32
    %1 = vector.broadcast %cst : f32 to vector<2x4xf32>
    %2 = arith.mulf %0, %1 : vector<2x4xf32>
    %c0_1 = arith.constant 0 : index
    %c0_2 = arith.constant 0 : index
    %3 = vector.load %arg1[%c0_1, %c0_2] : memref<4x32xf32, #tpu.memory_space<vmem>>, vector<4x32xf32>
    %cst_3 = arith.constant dense<0.000000e+00> : vector<2x32xf32>
    %4 = tpu.matmul %2, %3, %cst_3 {dimension_numbers = #tpu.dot_dimension_numbers<[1], [0], [0], [1], [0, 0, 1, 1], [], []>} : vector<2x4xf32>, vector<4x32xf32>, vector<2x32xf32> -> vector<2x32xf32>
    %c0_4 = arith.constant 0 : index
    %c0_5 = arith.constant 0 : index
    %5 = vector.load %arg2[%c0_4, %c0_5] : memref<1x32xf32, #tpu.memory_space<vmem>>, vector<1x32xf32>
    %6 = vector.broadcast %5 : vector<1x32xf32> to vector<2x32xf32>
    %7 = arith.addf %4, %6 : vector<2x32xf32>
    %c0_6 = arith.constant 0 : index
    %c0_7 = arith.constant 0 : index
    %c0_8 = arith.constant 0 : index
    %8 = vector.load %arg3[%c0_6, %c0_7, %c0_8] : memref<3x32x4xf32, #tpu.memory_space<vmem>>, vector<3x32x4xf32>
    %c0_9 = arith.constant 0 : index
    %c0_10 = arith.constant 0 : index
    %9 = vector.load %arg4[%c0_9, %c0_10] : memref<3x4xf32, #tpu.memory_space<vmem>>, vector<3x4xf32>
    %10 = vector.extract_strided_slice %8 {offsets = [0, 0, 0], sizes = [1, 32, 4], strides = [1, 1, 1]} : vector<3x32x4xf32> to vector<1x32x4xf32>
    %11 = vector.shape_cast %10 : vector<1x32x4xf32> to vector<32x4xf32>
    %cst_11 = arith.constant dense<0.000000e+00> : vector<2x4xf32>
    %12 = tpu.matmul %7, %11, %cst_11 {dimension_numbers = #tpu.dot_dimension_numbers<[1], [0], [0], [1], [0, 0, 1, 1], [], []>} : vector<2x32xf32>, vector<32x4xf32>, vector<2x4xf32> -> vector<2x4xf32>
    %13 = vector.extract_strided_slice %9 {offsets = [0, 0], sizes = [1, 4], strides = [1, 1]} : vector<3x4xf32> to vector<1x4xf32>
    %14 = vector.shape_cast %13 : vector<1x4xf32> to vector<4xf32>
    %15 = vector.shape_cast %14 : vector<4xf32> to vector<1x4xf32>
    %16 = vector.broadcast %15 : vector<1x4xf32> to vector<2x4xf32>
    %17 = arith.addf %12, %16 : vector<2x4xf32>
    %18 = vector.extract_strided_slice %8 {offsets = [1, 0, 0], sizes = [1, 32, 4], strides = [1, 1, 1]} : vector<3x32x4xf32> to vector<1x32x4xf32>
    %19 = vector.shape_cast %18 : vector<1x32x4xf32> to vector<32x4xf32>
    %cst_12 = arith.constant dense<0.000000e+00> : vector<2x4xf32>
    %20 = tpu.matmul %7, %19, %cst_12 {dimension_numbers = #tpu.dot_dimension_numbers<[1], [0], [0], [1], [0, 0, 1, 1], [], []>} : vector<2x32xf32>, vector<32x4xf32>, vector<2x4xf32> -> vector<2x4xf32>
    %21 = vector.extract_strided_slice %9 {offsets = [1, 0], sizes = [1, 4], strides = [1, 1]} : vector<3x4xf32> to vector<1x4xf32>
    %22 = vector.shape_cast %21 : vector<1x4xf32> to vector<4xf32>
    %23 = vector.shape_cast %22 : vector<4xf32> to vector<1x4xf32>
    %24 = vector.broadcast %23 : vector<1x4xf32> to vector<2x4xf32>
    %25 = arith.addf %20, %24 : vector<2x4xf32>
    %26 = vector.extract_strided_slice %8 {offsets = [2, 0, 0], sizes = [1, 32, 4], strides = [1, 1, 1]} : vector<3x32x4xf32> to vector<1x32x4xf32>
    %27 = vector.shape_cast %26 : vector<1x32x4xf32> to vector<32x4xf32>
    %cst_13 = arith.constant dense<0.000000e+00> : vector<2x4xf32>
    %28 = tpu.matmul %7, %27, %cst_13 {dimension_numbers = #tpu.dot_dimension_numbers<[1], [0], [0], [1], [0, 0, 1, 1], [], []>} : vector<2x32xf32>, vector<32x4xf32>, vector<2x4xf32> -> vector<2x4xf32>
    %29 = vector.extract_strided_slice %9 {offsets = [2, 0], sizes = [1, 4], strides = [1, 1]} : vector<3x4xf32> to vector<1x4xf32>
    %30 = vector.shape_cast %29 : vector<1x4xf32> to vector<4xf32>
    %31 = vector.shape_cast %30 : vector<4xf32> to vector<1x4xf32>
    %32 = vector.broadcast %31 : vector<1x4xf32> to vector<2x4xf32>
    %33 = arith.addf %28, %32 : vector<2x4xf32>
    %34 = arith.maximumf %17, %25 : vector<2x4xf32>
    %35 = arith.maximumf %34, %33 : vector<2x4xf32>
    %36 = arith.subf %17, %35 : vector<2x4xf32>
    %37 = math.exp %36 : vector<2x4xf32>
    %38 = arith.subf %25, %35 : vector<2x4xf32>
    %39 = math.exp %38 : vector<2x4xf32>
    %40 = arith.subf %33, %35 : vector<2x4xf32>
    %41 = math.exp %40 : vector<2x4xf32>
    %42 = arith.addf %37, %39 : vector<2x4xf32>
    %43 = arith.addf %42, %41 : vector<2x4xf32>
    %44 = tpu.reciprocal %43 {approx = true} : vector<2x4xf32> -> vector<2x4xf32>
    %45 = arith.mulf %37, %44 : vector<2x4xf32>
    %c0_14 = arith.constant 0 : index
    %c0_15 = arith.constant 0 : index
    %c0_16 = arith.constant 0 : index
    %46 = vector.load %arg5[%c0_14, %c0_15, %c0_16] : memref<3x2x4xf32, #tpu.memory_space<vmem>>, vector<1x2x4xf32>
    %47 = vector.shape_cast %46 : vector<1x2x4xf32> to vector<2x4xf32>
    %48 = vector.shape_cast %45 : vector<2x4xf32> to vector<1x2x4xf32>
    tpu.vector_store %arg5[%c0_14, %c0_15, %c0_16], %48 {strides = array<i32>} : memref<3x2x4xf32, #tpu.memory_space<vmem>>, vector<1x2x4xf32>,
    %49 = arith.mulf %39, %44 : vector<2x4xf32>
    %c1 = arith.constant 1 : index
    %c0_17 = arith.constant 0 : index
    %c0_18 = arith.constant 0 : index
    %50 = vector.load %arg5[%c1, %c0_17, %c0_18] : memref<3x2x4xf32, #tpu.memory_space<vmem>>, vector<1x2x4xf32>
    %51 = vector.shape_cast %50 : vector<1x2x4xf32> to vector<2x4xf32>
    %52 = vector.shape_cast %49 : vector<2x4xf32> to vector<1x2x4xf32>
    tpu.vector_store %arg5[%c1, %c0_17, %c0_18], %52 {strides = array<i32>} : memref<3x2x4xf32, #tpu.memory_space<vmem>>, vector<1x2x4xf32>,
    %53 = arith.mulf %41, %44 : vector<2x4xf32>
    %c2 = arith.constant 2 : index
    %c0_19 = arith.constant 0 : index
    %c0_20 = arith.constant 0 : index
    %54 = vector.load %arg5[%c2, %c0_19, %c0_20] : memref<3x2x4xf32, #tpu.memory_space<vmem>>, vector<1x2x4xf32>
    %55 = vector.shape_cast %54 : vector<1x2x4xf32> to vector<2x4xf32>
    %56 = vector.shape_cast %53 : vector<2x4xf32> to vector<1x2x4xf32>
    tpu.vector_store %arg5[%c2, %c0_19, %c0_20], %56 {strides = array<i32>} : memref<3x2x4xf32, #tpu.memory_space<vmem>>, vector<1x2x4xf32>,
    return
  }
}

module attributes {stable_mosaic.version = 11 : i64} {
  func.func @_recombine_kernel(%arg0: i32, %arg1: i32, %arg2: memref<3x1x128x4xbf16, #tpu.memory_space<vmem>>, %arg3: memref<1x3x4xf32, #tpu.memory_space<vmem>>, %arg4: memref<1x128x4xf32, #tpu.memory_space<vmem>>) attributes {dimension_semantics = [#tpu.dimension_semantics<parallel>, #tpu.dimension_semantics<parallel>], iteration_bounds = array<i64: 2, 2>, scalar_prefetch = 0 : i64, scratch_operands = 0 : i64, tpu.core_type = #tpu.core_type<tc>, window_params = [{transform_indices = @transform_0, window_bounds = array<i64: 3, 1, 128, 4>}, {transform_indices = @transform_1, window_bounds = array<i64: 1, 3, 4>}, {transform_indices = @transform_2, window_bounds = array<i64: 1, 128, 4>}]} {
    %c0 = arith.constant 0 : index
    %c0_0 = arith.constant 0 : index
    %c0_1 = arith.constant 0 : index
    %0 = vector.load %arg3[%c0, %c0_0, %c0_1] : memref<1x3x4xf32, #tpu.memory_space<vmem>>, vector<1x3x4xf32>
    %c0_2 = arith.constant 0 : index
    %c0_3 = arith.constant 0 : index
    %c0_4 = arith.constant 0 : index
    %c0_5 = arith.constant 0 : index
    %1 = vector.load %arg2[%c0_2, %c0_3, %c0_4, %c0_5] : memref<3x1x128x4xbf16, #tpu.memory_space<vmem>>, vector<1x1x128x4xbf16>
    %2 = vector.shape_cast %1 : vector<1x1x128x4xbf16> to vector<128x4xbf16>
    %3 = arith.extf %2 : vector<128x4xbf16> to vector<128x4xf32>
    %4 = vector.extract_strided_slice %0 {offsets = [0, 0, 0], sizes = [1, 1, 4], strides = [1, 1, 1]} : vector<1x3x4xf32> to vector<1x1x4xf32>
    %5 = vector.shape_cast %4 : vector<1x1x4xf32> to vector<4xf32>
    %6 = vector.shape_cast %5 : vector<4xf32> to vector<1x4xf32>
    %7 = vector.broadcast %6 : vector<1x4xf32> to vector<128x4xf32>
    %8 = arith.mulf %3, %7 : vector<128x4xf32>
    %c1 = arith.constant 1 : index
    %c0_6 = arith.constant 0 : index
    %c0_7 = arith.constant 0 : index
    %c0_8 = arith.constant 0 : index
    %9 = vector.load %arg2[%c1, %c0_6, %c0_7, %c0_8] : memref<3x1x128x4xbf16, #tpu.memory_space<vmem>>, vector<1x1x128x4xbf16>
    %10 = vector.shape_cast %9 : vector<1x1x128x4xbf16> to vector<128x4xbf16>
    %11 = arith.extf %10 : vector<128x4xbf16> to vector<128x4xf32>
    %12 = vector.extract_strided_slice %0 {offsets = [0, 1, 0], sizes = [1, 1, 4], strides = [1, 1, 1]} : vector<1x3x4xf32> to vector<1x1x4xf32>
    %13 = vector.shape_cast %12 : vector<1x1x4xf32> to vector<4xf32>
    %14 = vector.shape_cast %13 : vector<4xf32> to vector<1x4xf32>
    %15 = vector.broadcast %14 : vector<1x4xf32> to vector<128x4xf32>
    %16 = arith.mulf %11, %15 : vector<128x4xf32>
    %17 = arith.addf %8, %16 : vector<128x4xf32>
    %c2 = arith.constant 2 : index
    %c0_9 = arith.constant 0 : index
    %c0_10 = arith.constant 0 : index
    %c0_11 = arith.constant 0 : index
    %18 = vector.load %arg2[%c2, %c0_9, %c0_10, %c0_11] : memref<3x1x128x4xbf16, #tpu.memory_space<vmem>>, vector<1x1x128x4xbf16>
    %19 = vector.shape_cast %18 : vector<1x1x128x4xbf16> to vector<128x4xbf16>
    %20 = arith.extf %19 : vector<128x4xbf16> to vector<128x4xf32>
    %21 = vector.extract_strided_slice %0 {offsets = [0, 2, 0], sizes = [1, 1, 4], strides = [1, 1, 1]} : vector<1x3x4xf32> to vector<1x1x4xf32>
    %22 = vector.shape_cast %21 : vector<1x1x4xf32> to vector<4xf32>
    %23 = vector.shape_cast %22 : vector<4xf32> to vector<1x4xf32>
    %24 = vector.broadcast %23 : vector<1x4xf32> to vector<128x4xf32>
    %25 = arith.mulf %20, %24 : vector<128x4xf32>
    %26 = arith.addf %17, %25 : vector<128x4xf32>
    %c0_12 = arith.constant 0 : index
    %c0_13 = arith.constant 0 : index
    %c0_14 = arith.constant 0 : index
    %27 = vector.load %arg4[%c0_12, %c0_13, %c0_14] : memref<1x128x4xf32, #tpu.memory_space<vmem>>, vector<1x128x4xf32>
    %28 = vector.shape_cast %27 : vector<1x128x4xf32> to vector<128x4xf32>
    %29 = vector.shape_cast %26 : vector<128x4xf32> to vector<1x128x4xf32>
    tpu.vector_store %arg4[%c0_12, %c0_13, %c0_14], %29 {strides = array<i32>} : memref<1x128x4xf32, #tpu.memory_space<vmem>>, vector<1x128x4xf32>,
    return
  }
  func.func @transform_0(%arg0: i32, %arg1: i32) -> (i32, i32, i32, i32) {
    %c0_i32 = arith.constant 0 : i32
    %c0_i32_0 = arith.constant 0 : i32
    %c0_i32_1 = arith.constant 0 : i32
    return %c0_i32, %arg0, %arg1, %c0_i32_0 : i32, i32, i32, i32
  }
  func.func @transform_1(%arg0: i32, %arg1: i32) -> (i32, i32, i32) {
    %c0_i32 = arith.constant 0 : i32
    %c0_i32_0 = arith.constant 0 : i32
    %c0_i32_1 = arith.constant 0 : i32
    return %arg0, %c0_i32, %c0_i32_0 : i32, i32, i32
  }
  func.func @transform_2(%arg0: i32, %arg1: i32) -> (i32, i32, i32) {
    %c0_i32 = arith.constant 0 : i32
    %c0_i32_0 = arith.constant 0 : i32
    return %arg0, %arg1, %c0_i32 : i32, i32, i32
  }
}

</mosaic_0001>

<llo_original>
// kernel: sk_attention_pallas.4
$region0: #{sk_attention_pallas.4}
  #allocation0 [shape = 'u32[]', space=smem, size = 0x4, offset = 0x4, fixed_abs, tag = 'smem constant byte address 0x4 - core index']
  #allocation1 [shape = 'u32[72,128]{1,0:T(1,128)}', space=vmem, size = 0x9000, scoped, tag = 'internal scratch']
  %s0 = inlined_call_operand.vmem [shape: f32[2,4], index: 0, kind: input, shape index: {}]
  %s1 = inlined_call_operand.vmem [shape: f32[4,32], index: 1, kind: input, shape index: {}]
  %s2 = inlined_call_operand.vmem [shape: f32[1,32], index: 2, kind: input, shape index: {}]
  %s3 = inlined_call_operand.vmem [shape: f32[3,32,4], index: 3, kind: input, shape index: {}]
  %s4 = inlined_call_operand.vmem [shape: f32[3,4], index: 4, kind: input, shape index: {}]
  %s5 = inlined_call_operand.vmem [shape: f32[3,2,4], index: 5, kind: output, shape index: {}]
  %s6 = sld [smem:[#allocation0]]
  $region30: #{sk_attention_pallas.4} parent=0
    _
  %s8 = ssub.s32 1, %s6
  %s9 = scalar_select 0, %s8, %s6
  // Predicated region
  $region2: #{sk_attention_pallas.4} parent=0 // pred_check
    _
  $region3: #{sk_attention_pallas.4} parent=0 // pred_check_branch
    %11 = sbr.rel (0) target = $region5
  $region4: #{sk_attention_pallas.4} parent=0 // pred_region
    _
  $region5: #{sk_attention_pallas.4} parent=0 // pred_fallthru
    _
  // Predicated region
  $region6: #{sk_attention_pallas.4} parent=0 // pred_check
    _
  $region7: #{sk_attention_pallas.4} parent=0 // pred_check_branch
    %13 = sbr.rel (0) target = $region9
  $region8: #{sk_attention_pallas.4} parent=0 // pred_region
    _
  $region9: #{sk_attention_pallas.4} parent=0 // pred_fallthru
    _
  // Predicated region
  $region10: #{sk_attention_pallas.4} parent=0 // pred_check
    _
  $region11: #{sk_attention_pallas.4} parent=0 // pred_check_branch
    %15 = sbr.rel (0) target = $region13
  $region12: #{sk_attention_pallas.4} parent=0 // pred_region
    _
  $region13: #{sk_attention_pallas.4} parent=0 // pred_fallthru
    _
  // Predicated region
  $region14: #{sk_attention_pallas.4} parent=0 // pred_check
    _
  $region15: #{sk_attention_pallas.4} parent=0 // pred_check_branch
    %17 = sbr.rel (0) target = $region17
  $region16: #{sk_attention_pallas.4} parent=0 // pred_region
    _
  $region17: #{sk_attention_pallas.4} parent=0 // pred_fallthru
    _
  // Predicated region
  $region18: #{sk_attention_pallas.4} parent=0 // pred_check
    _
  $region19: #{sk_attention_pallas.4} parent=0 // pred_check_branch
    %19 = sbr.rel (0) target = $region21
  $region20: #{sk_attention_pallas.4} parent=0 // pred_region
    _
  $region21: #{sk_attention_pallas.4} parent=0 // pred_fallthru
    _
  %v20 = vld [vmem:[%s0] sm:$0x3]
  %v21 = vmul.f32 %v20, 0.00390625
  %v22 = vld [vmem:[%s1] sm:$0xf]
  %v23 = vld [vmem:[%s2] sm:$0x1]
  %v25 = vperm.slane %v23, 0
  %vm27 = vcmask 31744
  %v29 = vsel %vm27, %v21, 0
  %vm31 = vcmask 1043456
  %v33 = vsel %vm31, %v22, 0
  %35 = vmatpush.msra.mxu0 0.0
  %36 = vmatpush.msra.mxu0 0.0
  %37 = vmatpush.msra.mxu0 0.0
  %38 = vmatpush.msra.mxu0 0.0
  %39 = vmatpush.msra.mxu0 0.0
  %40 = vmatpush.msra.mxu0 0.0
  %41 = vmatpush.msra.mxu0 0.0
  %42 = vmatpush.msra.mxu0 0.0
  %43 = vmatpush.msra.mxu0 0.0
  %44 = vmatpush.msra.mxu0 0.0
  %45 = vmatpush.msra.mxu0 0.0
  %46 = vmatpush.msra.mxu0 0.0
  %47 = vmatpush.msra.mxu0 0.0
  %48 = vmatpush.msra.mxu0 0.0
  %49 = vmatpush.msra.mxu0 0.0
  %50 = vmatpush.msra.mxu0 %v33
  %51 = vmatmul.f32.gmra.mxu0 %v29
  %v52 = vpop.f32.mrf.mxu0
  %v53 = vadd.f32 %v25, %v52
  %54 = vdwg.mxu0
  %v55 = vld [vmem:[%s3] sm:$0xff]
  %v56 = vld [vmem:[%s3 + $0x8] sm:$0xff]
  %v57 = vld [vmem:[%s3 + $0x10] sm:$0xff]
  %v58 = vld [vmem:[%s3 + $0x18] sm:$0xff]
  %v59 = vld [vmem:[%s3 + $0x20] sm:$0xff]
  %v60 = vld [vmem:[%s3 + $0x28] sm:$0xff]
  %v61 = vld [vmem:[%s3 + $0x30] sm:$0xff]
  %v62 = vld [vmem:[%s3 + $0x38] sm:$0xff]
  %v63 = vld [vmem:[%s3 + $0x40] sm:$0xff]
  %v64 = vld [vmem:[%s3 + $0x48] sm:$0xff]
  %v65 = vld [vmem:[%s3 + $0x50] sm:$0xff]
  %v66 = vld [vmem:[%s3 + $0x58] sm:$0xff]
  %v67 = vld [vmem:[%s4] sm:$0x7]
  %v68 = vperm.slane %v67, 0
  %vm69 = vcmask 261120
  %v71 = vsel %vm69, %v53, 0
  %73 = vmatpush.msra.mxu0 0.0
  %74 = vmatpush.msra.mxu0 0.0
  %75 = vmatpush.msra.mxu0 0.0
  %76 = vmatpush.msra.mxu0 0.0
  %77 = vmatpush.msra.mxu0 0.0
  %78 = vmatpush.msra.mxu0 0.0
  %79 = vmatpush.msra.mxu0 0.0
  %80 = vmatpush.msra.mxu0 0.0
  %81 = vmatpush.msra.mxu0 0.0
  %82 = vmatpush.msra.mxu0 0.0
  %83 = vmatpush.msra.mxu0 0.0
  %84 = vmatpush.msra.mxu0 0.0
  %85 = vmatpush.msra.mxu0 %v58
  %86 = vmatpush.msra.mxu0 %v57
  %87 = vmatpush.msra.mxu0 %v56
  %88 = vmatpush.msra.mxu0 %v55
  %89 = vmatmul.f32.gmra.mxu0 %v71
  %v90 = vpop.f32.mrf.mxu0
  %v91 = vadd.f32 %v68, %v90
  %92 = vdwg.mxu0
  %v93 = vperm.slane %v67, 1
  %94 = vmatpush.msra.mxu0 0.0
  %95 = vmatpush.msra.mxu0 0.0
  %96 = vmatpush.msra.mxu0 0.0
  %97 = vmatpush.msra.mxu0 0.0
  %98 = vmatpush.msra.mxu0 0.0
  %99 = vmatpush.msra.mxu0 0.0
  %100 = vmatpush.msra.mxu0 0.0
  %101 = vmatpush.msra.mxu0 0.0
  %102 = vmatpush.msra.mxu0 0.0
  %103 = vmatpush.msra.mxu0 0.0
  %104 = vmatpush.msra.mxu0 0.0
  %105 = vmatpush.msra.mxu0 0.0
  %106 = vmatpush.msra.mxu0 %v62
  %107 = vmatpush.msra.mxu0 %v61
  %108 = vmatpush.msra.mxu0 %v60
  %109 = vmatpush.msra.mxu0 %v59
  %110 = vmatmul.f32.gmra.mxu0 %v71
  %v111 = vpop.f32.mrf.mxu0
  %v112 = vadd.f32 %v93, %v111
  %113 = vdwg.mxu0
  %v114 = vperm.slane %v67, 2
  %115 = vmatpush.msra.mxu0 0.0
  %116 = vmatpush.msra.mxu0 0.0
  %117 = vmatpush.msra.mxu0 0.0
  %118 = vmatpush.msra.mxu0 0.0
  %119 = vmatpush.msra.mxu0 0.0
  %120 = vmatpush.msra.mxu0 0.0
  %121 = vmatpush.msra.mxu0 0.0
  %122 = vmatpush.msra.mxu0 0.0
  %123 = vmatpush.msra.mxu0 0.0
  %124 = vmatpush.msra.mxu0 0.0
  %125 = vmatpush.msra.mxu0 0.0
  %126 = vmatpush.msra.mxu0 0.0
  %127 = vmatpush.msra.mxu0 %v66
  %128 = vmatpush.msra.mxu0 %v65
  %129 = vmatpush.msra.mxu0 %v64
  %130 = vmatpush.msra.mxu0 %v63
  %131 = vmatmul.f32.gmra.mxu0 %v71
  %v132 = vpop.f32.mrf.mxu0
  %v133 = vadd.f32 %v114, %v132
  %134 = vdwg.mxu0
  %v135 = vmax.f32 %v91, %v112
  %v136 = vmax.f32 %v135, %v133
  %v137 = vsub.f32 %v91, %v136
  %v138 = vmul.f32 %v137, 1.442695
  %v139 = vpow.pop %v138
  %v140 = vsub.f32 %v112, %v136
  %v141 = vmul.f32 %v140, 1.442695
  %v142 = vpow.pop %v141
  %v143 = vsub.f32 %v133, %v136
  %v144 = vmul.f32 %v143, 1.442695
  %v145 = vpow.pop %v144
  %v146 = vadd.f32 %v139, %v142
  %v147 = vadd.f32 %v146, %v145
  %v148 = vrcp.pop %v147
  %v149 = vmul.f32 %v139, %v148
  %vm150 = vcmask 25600
  %151 = vst.msk [vmem:[%s5] sm:$0x3] %vm150, %v149
  %v152 = vmul.f32 %v142, %v148
  %s153 = scalar_lea.vmem %s5, 2
  %154 = vst.msk [vmem:[%s153] sm:$0x3] %vm150, %v152
  %v155 = vmul.f32 %v145, %v148
  %s156 = scalar_lea.vmem %s5, 4
  %157 = vst.msk [vmem:[%s156] sm:$0x3] %vm150, %v155
  // Predicated region
  $region22: #{sk_attention_pallas.4} parent=0 // pred_check
    _
  $region23: #{sk_attention_pallas.4} parent=0 // pred_check_branch
    %159 = sbr.rel (0) target = $region25
  $region24: #{sk_attention_pallas.4} parent=0 // pred_region
    _
  $region25: #{sk_attention_pallas.4} parent=0 // pred_fallthru
    _
  // Predicated region
  $region26: #{sk_attention_pallas.4} parent=0 // pred_check
    _
  $region27: #{sk_attention_pallas.4} parent=0 // pred_check_branch
    %161 = sbr.rel (0) target = $region29
  $region28: #{sk_attention_pallas.4} parent=0 // pred_region
    _
  $region29: #{sk_attention_pallas.4} parent=0 // pred_fallthru
    _

// kernel: sk_attention_pallas.5
$region0: #{sk_attention_pallas.5}
  #allocation0 [shape = 'u32[]', space=smem, size = 0x4, offset = 0x4, fixed_abs, tag = 'smem constant byte address 0x4 - core index']
  #allocation1 [shape = 'u32[72,128]{1,0:T(1,128)}', space=vmem, size = 0x9000, scoped, tag = 'internal scratch']
  %s0 = inlined_call_operand.vmem [shape: bf16[3,2,256,4], index: 0, kind: input, shape index: {}]
  %s1 = inlined_call_operand.vmem [shape: f32[2,3,4], index: 1, kind: input, shape index: {}]
  %s2 = inlined_call_operand.vmem [shape: f32[2,256,4], index: 2, kind: output, shape index: {}]
  %s3 = sld [smem:[#allocation0]]
  $region82: #{sk_attention_pallas.5} parent=0
    _
  %s5 = ssub.s32 1, %s3
  %s6 = scalar_select 0, %s5, %s3
  $region1: #{sk_attention_pallas.5} parent=0
    #allocation2 [shape = 'u8[196608]{0}', space=vmem, size = 0x30000, scoped, tag = 'input window, operand 0']
    loop: start=0, step=1, limit=6
    $region2: #{sk_attention_pallas.5} parent=1 // loop_pre_header
      _
    $region3: #{sk_attention_pallas.5} parent=1 // loop_header
      %s8 = sphi 0, %s12
      %p9 = scmp.ge.s32.totalorder %s8, 6
      %s15 = sphi 0, %s27
      %s16 = sphi 0, %s23
      %s17 = sphi 0, %s15
      %s18 = sphi 0, %s16
      %s19 = sphi 0, %s17
      %s20 = sphi 0, %s18
      %s32 = sphi 0, %s34
      %s35 = sphi 0, %s32
      %s36 = sphi 0, %s35
      %s52 = sphi 0, %s36
      %s58 = sphi 0, %s60
      %s61 = sphi 0, %s58
      %s62 = sphi 0, %s61
      %s78 = sphi 0, %s62
      %s86 = sphi 0, %s88
      %s89 = sphi 0, %s86
      %s90 = sphi 0, %s89
      %s106 = sphi 0, %s90
    $region4: #{sk_attention_pallas.5} parent=1 // loop_header_branch
      %11 = sbr.rel (%p9) target = $region8
    $region5: #{sk_attention_pallas.5} parent=1 // loop_body
      %s13 = ssub.s32 %s8, 1
      %s14 = ssub.s32 %s8, 2
      %s21 = sadd.s32 1, %s16
      %p22 = scmp.ge.s32.totalorder %s21, 2
      %s23 = scalar_select %p22, 0, %s21
      %s24 = sadd.s32 1, %s15
      %s25 = scalar_select %p22, %s24, %s15
      %p26 = scmp.ge.s32.totalorder %s25, 2
      %s27 = scalar_select %p26, 0, %s25
      %s28 = ssub.s32 %s15, %s27
      %s29 = ssub.s32 %s16, %s23
      %s30 = sor.u32 %s28, %s29
      %p31 = scmp.eq.s32.totalorder %s30, 0
      %s33 = sadd.s32 %s32, 1
      %s34 = scalar_select %p31, %s32, %s33
      %p37 = pneg %p31
      %p38 = scmp.eq.s32.totalorder %s8, 3
      %p39 = por %p37, %p38
      %p40 = scmp.ne.s32.totalorder %s32, %s35
      %p41 = scmp.eq.s32.totalorder %s8, 0
      %p42 = por %p40, %p41
      %p43 = scmp.ne.s32.totalorder %s32, %s35
      %p44 = scmp.eq.s32.totalorder %s13, 3
      %p45 = por %p43, %p44
      %p46 = scmp.ne.s32.totalorder %s35, %s36
      %p47 = scmp.eq.s32.totalorder %s13, 0
      %p48 = por %p46, %p47
      %p49 = scmp.ne.s32.totalorder %s35, %s36
      %p50 = scmp.eq.s32.totalorder %s14, 3
      %p51 = por %p49, %p50
      %p53 = scmp.ne.s32.totalorder %s36, %s52
      %p54 = scmp.eq.s32.totalorder %s14, 0
      %p55 = por %p53, %p54
      %s56 = ssub.s32 %s15, %s27
      %p57 = scmp.eq.s32.totalorder %s56, 0
      %s59 = sadd.s32 %s58, 1
      %s60 = scalar_select %p57, %s58, %s59
      %p63 = pneg %p57
      %p64 = scmp.eq.s32.totalorder %s8, 3
      %p65 = por %p63, %p64
      %p66 = scmp.ne.s32.totalorder %s58, %s61
      %p67 = scmp.eq.s32.totalorder %s8, 0
      %p68 = por %p66, %p67
      %p69 = scmp.ne.s32.totalorder %s58, %s61
      %p70 = scmp.eq.s32.totalorder %s13, 3
      %p71 = por %p69, %p70
      %p72 = scmp.ne.s32.totalorder %s61, %s62
      %p73 = scmp.eq.s32.totalorder %s13, 0
      %p74 = por %p72, %p73
      %p75 = scmp.ne.s32.totalorder %s61, %s62
      %p76 = scmp.eq.s32.totalorder %s14, 3
      %p77 = por %p75, %p76
      %p79 = scmp.ne.s32.totalorder %s62, %s78
      %p80 = scmp.eq.s32.totalorder %s14, 0
      %p81 = por %p79, %p80
      %s82 = ssub.s32 %s15, %s27
      %s83 = ssub.s32 %s16, %s23
      %s84 = sor.u32 %s82, %s83
      %p85 = scmp.eq.s32.totalorder %s84, 0
      %s87 = sadd.s32 %s86, 1
      %s88 = scalar_select %p85, %s86, %s87
      %p91 = pneg %p85
      %p92 = scmp.eq.s32.totalorder %s8, 3
      %p93 = por %p91, %p92
      %p94 = scmp.ne.s32.totalorder %s86, %s89
      %p95 = scmp.eq.s32.totalorder %s8, 0
      %p96 = por %p94, %p95
      %p97 = scmp.ne.s32.totalorder %s86, %s89
      %p98 = scmp.eq.s32.totalorder %s13, 3
      %p99 = por %p97, %p98
      %p100 = scmp.ne.s32.totalorder %s89, %s90
      %p101 = scmp.eq.s32.totalorder %s13, 0
      %p102 = por %p100, %p101
      %p103 = scmp.ne.s32.totalorder %s89, %s90
      %p104 = scmp.eq.s32.totalorder %s14, 3
      %p105 = por %p103, %p104
      %p107 = scmp.ne.s32.totalorder %s90, %s106
      %p108 = scmp.eq.s32.totalorder %s14, 0
      %p109 = por %p107, %p108
      %p110 = scmp.le.s32.totalorder 1, %s8
      %p111 = scmp.lt.s32.totalorder %s8, 5
      %p112 = pnand %p110, %p111
      %p113 = pneg %p112
      // Predicated region
      $region9: #{sk_attention_pallas.5} parent=5 // pred_check
        _
      $region10: #{sk_attention_pallas.5} parent=5 // pred_check_branch
        %115 = sbr.rel (%p112) target = $region12
      $region11: #{sk_attention_pallas.5} parent=5 // pred_region
        %s116 = ssub.s32 %s8, 1
      $region12: #{sk_attention_pallas.5} parent=5 // pred_fallthru
        _
      %p117 = scmp.lt.s32.totalorder %s8, 4
      // Predicated region
      $region13: #{sk_attention_pallas.5} parent=5 // pred_check
        %p118 = pneg %p117
      $region14: #{sk_attention_pallas.5} parent=5 // pred_check_branch
        %120 = sbr.rel (%p118) target = $region16
      $region15: #{sk_attention_pallas.5} parent=5 // pred_region
        // Predicated region
        $region17: #{sk_attention_pallas.5} parent=15 // pred_check
          %p121 = pneg %p42
        $region18: #{sk_attention_pallas.5} parent=15 // pred_check_branch
          %123 = sbr.rel (%p121) target = $region20
        $region19: #{sk_attention_pallas.5} parent=15 // pred_region
          %s124 = sand.u32 %s32, 1
          %s125 = sand.u32 %s32, 1
          %s126 = smul.addr %s125, 192
          %s127 = scalar_lea.vmem [#allocation2], %s126
          %s128 = smul.u32 16, %s16
          %s129 = smul.addr %s15, 32
          %s130 = sadd.s32 %s128, %s129
          %s131 = smul.addr %s130, 4
          %s132 = scalar_lea.vmem %s0, %s131
          // Predicated region
          $region21: #{sk_attention_pallas.5} parent=19 // pred_check
            _
          $region22: #{sk_attention_pallas.5} parent=19 // pred_check_branch
            %134 = sbr.rel (0) target = $region24
          $region23: #{sk_attention_pallas.5} parent=19 // pred_region
            // Predicated region
            $region25: #{sk_attention_pallas.5} parent=23 // pred_check
              _
            $region26: #{sk_attention_pallas.5} parent=23 // pred_check_branch
              %136 = sbr.rel target = $region28
            $region27: #{sk_attention_pallas.5} parent=23 // pred_region
              // Predicated region
              $region40: #{sk_attention_pallas.5} parent=27 // pred_check
                _
              $region41: #{sk_attention_pallas.5} parent=27 // pred_check_branch
                %246 = sbr.rel (0) target = $region43
              $region42: #{sk_attention_pallas.5} parent=27 // pred_region
                loop: start=0, step=1, limit=1
                $region44: #{sk_attention_pallas.5} parent=42 // loop_pre_header
                  _
                $region45: #{sk_attention_pallas.5} parent=42 // loop_header
                  %s248 = sphi 0, %s252
                  %p249 = scmp.ge.s32.totalorder %s248, 1
                  %s253 = sphi %s132, %s132
                  %s254 = sphi %s127, %s127
                $region46: #{sk_attention_pallas.5} parent=42 // loop_header_branch
                  %251 = sbr.rel (%p249) target = $region50
                $region47: #{sk_attention_pallas.5} parent=42 // loop_body
                  _
                $region48: #{sk_attention_pallas.5} parent=42 // loop_footer
                  %s252 = sadd.s32 1, %s248
                $region49: #{sk_attention_pallas.5} parent=42 // loop_footer_branch
                  %247 = sbr.rel target = $region45
                $region50: #{sk_attention_pallas.5} parent=42 // loop_exit
                  _
                %s256 = ssub.s32 16, 1
                loop: start=0, step=1, limit=1
                $region51: #{sk_attention_pallas.5} parent=42 // loop_pre_header
                  _
                $region52: #{sk_attention_pallas.5} parent=42 // loop_header
                  %s258 = sphi 0, %s262
                  %p259 = scmp.ge.s32.totalorder %s258, 1
                  %s263 = sphi %s132, %s132
                  %s264 = sphi %s127, %s127
                $region53: #{sk_attention_pallas.5} parent=42 // loop_header_branch
                  %261 = sbr.rel (%p259) target = $region57
                $region54: #{sk_attention_pallas.5} parent=42 // loop_body
                  %v265 = vld [vmem:[%s263] sm:%s256]
                  %266 = vst [vmem:[%s264] sm:%s256] %v265
                  %v267 = vld [vmem:[%s263 + $0x4] sm:%s256]
                  %268 = vst [vmem:[%s264 + $0x4] sm:%s256] %v267
                  %v269 = vld [vmem:[%s263 + $0x8] sm:%s256]
                  %270 = vst [vmem:[%s264 + $0x8] sm:%s256] %v269
                  %v271 = vld [vmem:[%s263 + $0xc] sm:%s256]
                  %272 = vst [vmem:[%s264 + $0xc] sm:%s256] %v271
                  %v273 = vld [vmem:[%s263 + $0x10] sm:%s256]
                  %274 = vst [vmem:[%s264 + $0x10] sm:%s256] %v273
                  %v275 = vld [vmem:[%s263 + $0x14] sm:%s256]
                  %276 = vst [vmem:[%s264 + $0x14] sm:%s256] %v275
                  %v277 = vld [vmem:[%s263 + $0x18] sm:%s256]
                  %278 = vst [vmem:[%s264 + $0x18] sm:%s256] %v277
                  %v279 = vld [vmem:[%s263 + $0x1c] sm:%s256]
                  %280 = vst [vmem:[%s264 + $0x1c] sm:%s256] %v279
                  %v281 = vld [vmem:[%s263 + $0x20] sm:%s256]
                  %282 = vst [vmem:[%s264 + $0x20] sm:%s256] %v281
                  %v283 = vld [vmem:[%s263 + $0x24] sm:%s256]
                  %284 = vst [vmem:[%s264 + $0x24] sm:%s256] %v283
                  %v285 = vld [vmem:[%s263 + $0x28] sm:%s256]
                  %286 = vst [vmem:[%s264 + $0x28] sm:%s256] %v285
                  %v287 = vld [vmem:[%s263 + $0x2c] sm:%s256]
                  %288 = vst [vmem:[%s264 + $0x2c] sm:%s256] %v287
                  %v289 = vld [vmem:[%s263 + $0x30] sm:%s256]
                  %290 = vst [vmem:[%s264 + $0x30] sm:%s256] %v289
                  %v291 = vld [vmem:[%s263 + $0x34] sm:%s256]
                  %292 = vst [vmem:[%s264 + $0x34] sm:%s256] %v291
                  %v293 = vld [vmem:[%s263 + $0x38] sm:%s256]
                  %294 = vst [vmem:[%s264 + $0x38] sm:%s256] %v293
                  %v295 = vld [vmem:[%s263 + $0x3c] sm:%s256]
                  %296 = vst [vmem:[%s264 + $0x3c] sm:%s256] %v295
                  %v297 = vld [vmem:[%s263 + $0x100] sm:%s256]
                  %298 = vst [vmem:[%s264 + $0x40] sm:%s256] %v297
                  %v299 = vld [vmem:[%s263 + $0x104] sm:%s256]
                  %300 = vst [vmem:[%s264 + $0x44] sm:%s256] %v299
                  %v301 = vld [vmem:[%s263 + $0x108] sm:%s256]
                  %302 = vst [vmem:[%s264 + $0x48] sm:%s256] %v301
                  %v303 = vld [vmem:[%s263 + $0x10c] sm:%s256]
                  %304 = vst [vmem:[%s264 + $0x4c] sm:%s256] %v303
                  %v305 = vld [vmem:[%s263 + $0x110] sm:%s256]
                  %306 = vst [vmem:[%s264 + $0x50] sm:%s256] %v305
                  %v307 = vld [vmem:[%s263 + $0x114] sm:%s256]
                  %308 = vst [vmem:[%s264 + $0x54] sm:%s256] %v307
                  %v309 = vld [vmem:[%s263 + $0x118] sm:%s256]
                  %310 = vst [vmem:[%s264 + $0x58] sm:%s256] %v309
                  %v311 = vld [vmem:[%s263 + $0x11c] sm:%s256]
                  %312 = vst [vmem:[%s264 + $0x5c] sm:%s256] %v311
                  %v313 = vld [vmem:[%s263 + $0x120] sm:%s256]
                  %314 = vst [vmem:[%s264 + $0x60] sm:%s256] %v313
                  %v315 = vld [vmem:[%s263 + $0x124] sm:%s256]
                  %316 = vst [vmem:[%s264 + $0x64] sm:%s256] %v315
                  %v317 = vld [vmem:[%s263 + $0x128] sm:%s256]
                  %318 = vst [vmem:[%s264 + $0x68] sm:%s256] %v317
                  %v319 = vld [vmem:[%s263 + $0x12c] sm:%s256]
                  %320 = vst [vmem:[%s264 + $0x6c] sm:%s256] %v319
                  %v321 = vld [vmem:[%s263 + $0x130] sm:%s256]
                  %322 = vst [vmem:[%s264 + $0x70] sm:%s256] %v321
                  %v323 = vld [vmem:[%s263 + $0x134] sm:%s256]
                  %324 = vst [vmem:[%s264 + $0x74] sm:%s256] %v323
                  %v325 = vld [vmem:[%s263 + $0x138] sm:%s256]
                  %326 = vst [vmem:[%s264 + $0x78] sm:%s256] %v325
                  %v327 = vld [vmem:[%s263 + $0x13c] sm:%s256]
                  %328 = vst [vmem:[%s264 + $0x7c] sm:%s256] %v327
                  %v329 = vld [vmem:[%s263 + $0x200] sm:%s256]
                  %330 = vst [vmem:[%s264 + $0x80] sm:%s256] %v329
                  %v331 = vld [vmem:[%s263 + $0x204] sm:%s256]
                  %332 = vst [vmem:[%s264 + $0x84] sm:%s256] %v331
                  %v333 = vld [vmem:[%s263 + $0x208] sm:%s256]
                  %334 = vst [vmem:[%s264 + $0x88] sm:%s256] %v333
                  %v335 = vld [vmem:[%s263 + $0x20c] sm:%s256]
                  %336 = vst [vmem:[%s264 + $0x8c] sm:%s256] %v335
                  %v337 = vld [vmem:[%s263 + $0x210] sm:%s256]
                  %338 = vst [vmem:[%s264 + $0x90] sm:%s256] %v337
                  %v339 = vld [vmem:[%s263 + $0x214] sm:%s256]
                  %340 = vst [vmem:[%s264 + $0x94] sm:%s256] %v339
                  %v341 = vld [vmem:[%s263 + $0x218] sm:%s256]
                  %342 = vst [vmem:[%s264 + $0x98] sm:%s256] %v341
                  %v343 = vld [vmem:[%s263 + $0x21c] sm:%s256]
                  %344 = vst [vmem:[%s264 + $0x9c] sm:%s256] %v343
                  %v345 = vld [vmem:[%s263 + $0x220] sm:%s256]
                  %346 = vst [vmem:[%s264 + $0xa0] sm:%s256] %v345
                  %v347 = vld [vmem:[%s263 + $0x224] sm:%s256]
                  %348 = vst [vmem:[%s264 + $0xa4] sm:%s256] %v347
                  %v349 = vld [vmem:[%s263 + $0x228] sm:%s256]
                  %350 = vst [vmem:[%s264 + $0xa8] sm:%s256] %v349
                  %v351 = vld [vmem:[%s263 + $0x22c] sm:%s256]
                  %352 = vst [vmem:[%s264 + $0xac] sm:%s256] %v351
                  %v353 = vld [vmem:[%s263 + $0x230] sm:%s256]
                  %354 = vst [vmem:[%s264 + $0xb0] sm:%s256] %v353
                  %v355 = vld [vmem:[%s263 + $0x234] sm:%s256]
                  %356 = vst [vmem:[%s264 + $0xb4] sm:%s256] %v355
                  %v357 = vld [vmem:[%s263 + $0x238] sm:%s256]
                  %358 = vst [vmem:[%s264 + $0xb8] sm:%s256] %v357
                  %v359 = vld [vmem:[%s263 + $0x23c] sm:%s256]
                  %360 = vst [vmem:[%s264 + $0xbc] sm:%s256] %v359
                $region55: #{sk_attention_pallas.5} parent=42 // loop_footer
                  %s262 = sadd.s32 1, %s258
                $region56: #{sk_attention_pallas.5} parent=42 // loop_footer_branch
                  %257 = sbr.rel target = $region52
                $region57: #{sk_attention_pallas.5} parent=42 // loop_exit
                  _
              $region43: #{sk_attention_pallas.5} parent=27 // pred_fallthru
                _
            $region28: #{sk_attention_pallas.5} parent=23 // pred_fallthru
              _
            // Predicated region
            $region29: #{sk_attention_pallas.5} parent=23 // pred_check
              _
            $region30: #{sk_attention_pallas.5} parent=23 // pred_check_branch
              %138 = sbr.rel (0) target = $region32
            $region31: #{sk_attention_pallas.5} parent=23 // pred_region
              %s140 = ssub.s32 16, 1
              loop: start=0, step=1, limit=1
              $region33: #{sk_attention_pallas.5} parent=31 // loop_pre_header
                _
              $region34: #{sk_attention_pallas.5} parent=31 // loop_header
                %s142 = sphi 0, %s146
                %p143 = scmp.ge.s32.totalorder %s142, 1
                %s147 = sphi %s132, %s132
                %s148 = sphi %s127, %s127
              $region35: #{sk_attention_pallas.5} parent=31 // loop_header_branch
                %145 = sbr.rel (%p143) target = $region39
              $region36: #{sk_attention_pallas.5} parent=31 // loop_body
                %v149 = vld [vmem:[%s147] sm:%s140]
                %150 = vst [vmem:[%s148] sm:%s140] %v149
                %v151 = vld [vmem:[%s147 + $0x4] sm:%s140]
                %152 = vst [vmem:[%s148 + $0x4] sm:%s140] %v151
                %v153 = vld [vmem:[%s147 + $0x8] sm:%s140]
                %154 = vst [vmem:[%s148 + $0x8] sm:%s140] %v153
                %v155 = vld [vmem:[%s147 + $0xc] sm:%s140]
                %156 = vst [vmem:[%s148 + $0xc] sm:%s140] %v155
                %v157 = vld [vmem:[%s147 + $0x10] sm:%s140]
                %158 = vst [vmem:[%s148 + $0x10] sm:%s140] %v157
                %v159 = vld [vmem:[%s147 + $0x14] sm:%s140]
                %160 = vst [vmem:[%s148 + $0x14] sm:%s140] %v159
                %v161 = vld [vmem:[%s147 + $0x18] sm:%s140]
                %162 = vst [vmem:[%s148 + $0x18] sm:%s140] %v161
                %v163 = vld [vmem:[%s147 + $0x1c] sm:%s140]
                %164 = vst [vmem:[%s148 + $0x1c] sm:%s140] %v163
                %v165 = vld [vmem:[%s147 + $0x20] sm:%s140]
                %166 = vst [vmem:[%s148 + $0x20] sm:%s140] %v165
                %v167 = vld [vmem:[%s147 + $0x24] sm:%s140]
                %168 = vst [vmem:[%s148 + $0x24] sm:%s140] %v167
                %v169 = vld [vmem:[%s147 + $0x28] sm:%s140]
                %170 = vst [vmem:[%s148 + $0x28] sm:%s140] %v169
                %v171 = vld [vmem:[%s147 + $0x2c] sm:%s140]
                %172 = vst [vmem:[%s148 + $0x2c] sm:%s140] %v171
                %v173 = vld [vmem:[%s147 + $0x30] sm:%s140]
                %174 = vst [vmem:[%s148 + $0x30] sm:%s140] %v173
                %v175 = vld [vmem:[%s147 + $0x34] sm:%s140]
                %176 = vst [vmem:[%s148 + $0x34] sm:%s140] %v175
                %v177 = vld [vmem:[%s147 + $0x38] sm:%s140]
                %178 = vst [vmem:[%s148 + $0x38] sm:%s140] %v177
                %v179 = vld [vmem:[%s147 + $0x3c] sm:%s140]
                %180 = vst [vmem:[%s148 + $0x3c] sm:%s140] %v179
                %v181 = vld [vmem:[%s147 + $0x100] sm:%s140]
                %182 = vst [vmem:[%s148 + $0x40] sm:%s140] %v181
                %v183 = vld [vmem:[%s147 + $0x104] sm:%s140]
                %184 = vst [vmem:[%s148 + $0x44] sm:%s140] %v183
                %v185 = vld [vmem:[%s147 + $0x108] sm:%s140]
                %186 = vst [vmem:[%s148 + $0x48] sm:%s140] %v185
                %v187 = vld [vmem:[%s147 + $0x10c] sm:%s140]
                %188 = vst [vmem:[%s148 + $0x4c] sm:%s140] %v187
                %v189 = vld [vmem:[%s147 + $0x110] sm:%s140]
                %190 = vst [vmem:[%s148 + $0x50] sm:%s140] %v189
                %v191 = vld [vmem:[%s147 + $0x114] sm:%s140]
                %192 = vst [vmem:[%s148 + $0x54] sm:%s140] %v191
                %v193 = vld [vmem:[%s147 + $0x118] sm:%s140]
                %194 = vst [vmem:[%s148 + $0x58] sm:%s140] %v193
                %v195 = vld [vmem:[%s147 + $0x11c] sm:%s140]
                %196 = vst [vmem:[%s148 + $0x5c] sm:%s140] %v195
                %v197 = vld [vmem:[%s147 + $0x120] sm:%s140]
                %198 = vst [vmem:[%s148 + $0x60] sm:%s140] %v197
                %v199 = vld [vmem:[%s147 + $0x124] sm:%s140]
                %200 = vst [vmem:[%s148 + $0x64] sm:%s140] %v199
                %v201 = vld [vmem:[%s147 + $0x128] sm:%s140]
                %202 = vst [vmem:[%s148 + $0x68] sm:%s140] %v201
                %v203 = vld [vmem:[%s147 + $0x12c] sm:%s140]
                %204 = vst [vmem:[%s148 + $0x6c] sm:%s140] %v203
                %v205 = vld [vmem:[%s147 + $0x130] sm:%s140]
                %206 = vst [vmem:[%s148 + $0x70] sm:%s140] %v205
                %v207 = vld [vmem:[%s147 + $0x134] sm:%s140]
                %208 = vst [vmem:[%s148 + $0x74] sm:%s140] %v207
                %v209 = vld [vmem:[%s147 + $0x138] sm:%s140]
                %210 = vst [vmem:[%s148 + $0x78] sm:%s140] %v209
                %v211 = vld [vmem:[%s147 + $0x13c] sm:%s140]
                %212 = vst [vmem:[%s148 + $0x7c] sm:%s140] %v211
                %v213 = vld [vmem:[%s147 + $0x200] sm:%s140]
                %214 = vst [vmem:[%s148 + $0x80] sm:%s140] %v213
                %v215 = vld [vmem:[%s147 + $0x204] sm:%s140]
                %216 = vst [vmem:[%s148 + $0x84] sm:%s140] %v215
                %v217 = vld [vmem:[%s147 + $0x208] sm:%s140]
                %218 = vst [vmem:[%s148 + $0x88] sm:%s140] %v217
                %v219 = vld [vmem:[%s147 + $0x20c] sm:%s140]
                %220 = vst [vmem:[%s148 + $0x8c] sm:%s140] %v219
                %v221 = vld [vmem:[%s147 + $0x210] sm:%s140]
                %222 = vst [vmem:[%s148 + $0x90] sm:%s140] %v221
                %v223 = vld [vmem:[%s147 + $0x214] sm:%s140]
                %224 = vst [vmem:[%s148 + $0x94] sm:%s140] %v223
                %v225 = vld [vmem:[%s147 + $0x218] sm:%s140]
                %226 = vst [vmem:[%s148 + $0x98] sm:%s140] %v225
                %v227 = vld [vmem:[%s147 + $0x21c] sm:%s140]
                %228 = vst [vmem:[%s148 + $0x9c] sm:%s140] %v227
                %v229 = vld [vmem:[%s147 + $0x220] sm:%s140]
                %230 = vst [vmem:[%s148 + $0xa0] sm:%s140] %v229
                %v231 = vld [vmem:[%s147 + $0x224] sm:%s140]
                %232 = vst [vmem:[%s148 + $0xa4] sm:%s140] %v231
                %v233 = vld [vmem:[%s147 + $0x228] sm:%s140]
                %234 = vst [vmem:[%s148 + $0xa8] sm:%s140] %v233
                %v235 = vld [vmem:[%s147 + $0x22c] sm:%s140]
                %236 = vst [vmem:[%s148 + $0xac] sm:%s140] %v235
                %v237 = vld [vmem:[%s147 + $0x230] sm:%s140]
                %238 = vst [vmem:[%s148 + $0xb0] sm:%s140] %v237
                %v239 = vld [vmem:[%s147 + $0x234] sm:%s140]
                %240 = vst [vmem:[%s148 + $0xb4] sm:%s140] %v239
                %v241 = vld [vmem:[%s147 + $0x238] sm:%s140]
                %242 = vst [vmem:[%s148 + $0xb8] sm:%s140] %v241
                %v243 = vld [vmem:[%s147 + $0x23c] sm:%s140]
                %244 = vst [vmem:[%s148 + $0xbc] sm:%s140] %v243
              $region37: #{sk_attention_pallas.5} parent=31 // loop_footer
                %s146 = sadd.s32 1, %s142
              $region38: #{sk_attention_pallas.5} parent=31 // loop_footer_branch
                %141 = sbr.rel target = $region34
              $region39: #{sk_attention_pallas.5} parent=31 // loop_exit
                _
            $region32: #{sk_attention_pallas.5} parent=23 // pred_fallthru
              _
          $region24: #{sk_attention_pallas.5} parent=19 // pred_fallthru
            _
          %361 = vnop
        $region20: #{sk_attention_pallas.5} parent=15 // pred_fallthru
          _
        // Predicated region
        $region58: #{sk_attention_pallas.5} parent=15 // pred_check
          %p362 = pneg %p68
        $region59: #{sk_attention_pallas.5} parent=15 // pred_check_branch
          %364 = sbr.rel (%p362) target = $region61
        $region60: #{sk_attention_pallas.5} parent=15 // pred_region
          %p365 = scmp.lt.s32.totalorder %s15, 1
          %s366 = scalar_select %p365, %s15, 1
          %s367 = smul.addr %s366, 4
          %s368 = scalar_lea.vmem %s1, %s367
        $region61: #{sk_attention_pallas.5} parent=15 // pred_fallthru
          _
      $region16: #{sk_attention_pallas.5} parent=5 // pred_fallthru
        _
      %p369 = scmp.le.s32.totalorder 1, %s8
      %p370 = scmp.lt.s32.totalorder %s8, 5
      %p371 = pnand %p369, %p370
      %p372 = pneg %p371
      // Predicated region
      $region62: #{sk_attention_pallas.5} parent=5 // pred_check
        _
      $region63: #{sk_attention_pallas.5} parent=5 // pred_check_branch
        %374 = sbr.rel (%p371) target = $region65
      $region64: #{sk_attention_pallas.5} parent=5 // pred_region
        %s375 = ssub.s32 %s8, 1
        %s376 = sand.u32 %s35, 1
        %s377 = sand.u32 %s35, 1
        %s378 = smul.addr %s377, 192
        %s379 = scalar_lea.vmem [#allocation2], %s378
        // Predicated region
        $region66: #{sk_attention_pallas.5} parent=64 // pred_check
          %p380 = pneg %p48
        $region67: #{sk_attention_pallas.5} parent=64 // pred_check_branch
          %382 = sbr.rel (%p380) target = $region69
        $region68: #{sk_attention_pallas.5} parent=64 // pred_region
          _
        $region69: #{sk_attention_pallas.5} parent=64 // pred_fallthru
          _
        %s383 = sand.u32 %s35, 1
        %s384 = sand.u32 %s35, 1
        %s385 = smul.addr %s384, 192
        %s386 = scalar_lea.vmem [#allocation2], %s385
        %p387 = pneg %p48
        %p388 = pneg %p45
        %p389 = scmp.lt.s32.totalorder %s17, 1
        %s390 = scalar_select %p389, %s17, 1
        %s391 = smul.addr %s390, 4
        %s392 = scalar_lea.vmem %s1, %s391
        %p393 = pneg %p74
        %p394 = pneg %p71
        %p395 = pneg %p102
        %p396 = pneg %p99
        %s397 = smul.u32 16, %s18
        %p398 = scmp.lt.s32.totalorder %s17, 1
        %s399 = scalar_select %p398, %s17, 1
        %p400 = scmp.lt.s32.totalorder %s397, 31
        %s401 = scalar_select %p400, %s397, 31
        %s402 = smul.addr %s399, 32
        %s403 = sadd.s32 %s401, %s402
        %s404 = smul.addr %s403, 8
        %s405 = scalar_lea.vmem %s2, %s404
        %s406 = smul.u32 16, %s18
        %p407 = scmp.lt.s32.totalorder %s17, 1
        %s408 = scalar_select %p407, %s17, 1
        %s409 = smul.addr %s408, 4
        %s410 = scalar_lea.vmem %s1, %s409
        %s411 = smul.u32 16, %s18
        %p412 = scmp.lt.s32.totalorder %s17, 1
        %s413 = scalar_select %p412, %s17, 1
        %p414 = scmp.lt.s32.totalorder %s411, 31
        %s415 = scalar_select %p414, %s411, 31
        %s416 = smul.addr %s413, 32
        %s417 = sadd.s32 %s415, %s416
        %s418 = smul.addr %s417, 8
        %s419 = scalar_lea.vmem %s2, %s418
        %s420 = smul.u32 16, %s18
        %v421 = vld [vmem:[%s410] sm:$0x7]
        %v422 = vld [vmem:[%s379] sm:$0xf]
        %v423 = vld [vmem:[%s379 + $0x4] sm:$0xf]
        %v424 = vld [vmem:[%s379 + $0x8] sm:$0xf]
        %v425 = vld [vmem:[%s379 + $0xc] sm:$0xf]
        %v426 = vld [vmem:[%s379 + $0x10] sm:$0xf]
        %v427 = vld [vmem:[%s379 + $0x14] sm:$0xf]
        %v428 = vld [vmem:[%s379 + $0x18] sm:$0xf]
        %v429 = vld [vmem:[%s379 + $0x1c] sm:$0xf]
        %v430 = vld [vmem:[%s379 + $0x20] sm:$0xf]
        %v431 = vld [vmem:[%s379 + $0x24] sm:$0xf]
        %v432 = vld [vmem:[%s379 + $0x28] sm:$0xf]
        %v433 = vld [vmem:[%s379 + $0x2c] sm:$0xf]
        %v434 = vld [vmem:[%s379 + $0x30] sm:$0xf]
        %v435 = vld [vmem:[%s379 + $0x34] sm:$0xf]
        %v436 = vld [vmem:[%s379 + $0x38] sm:$0xf]
        %v437 = vld [vmem:[%s379 + $0x3c] sm:$0xf]
        %v438 = vunpack.c.l.bf16 %v422
        %v439 = vunpack.c.l.bf16 %v423
        %v440 = vunpack.c.l.bf16 %v424
        %v441 = vunpack.c.l.bf16 %v425
        %v442 = vunpack.c.l.bf16 %v426
        %v443 = vunpack.c.l.bf16 %v427
        %v444 = vunpack.c.l.bf16 %v428
        %v445 = vunpack.c.l.bf16 %v429
        %v446 = vunpack.c.l.bf16 %v430
        %v447 = vunpack.c.l.bf16 %v431
        %v448 = vunpack.c.l.bf16 %v432
        %v449 = vunpack.c.l.bf16 %v433
        %v450 = vunpack.c.l.bf16 %v434
        %v451 = vunpack.c.l.bf16 %v435
        %v452 = vunpack.c.l.bf16 %v436
        %v453 = vunpack.c.l.bf16 %v437
        %v454 = vperm.slane %v421, 0
        %v455 = vmul.f32 %v438, %v454
        %v456 = vmul.f32 %v439, %v454
        %v457 = vmul.f32 %v440, %v454
        %v458 = vmul.f32 %v441, %v454
        %v459 = vmul.f32 %v442, %v454
        %v460 = vmul.f32 %v443, %v454
        %v461 = vmul.f32 %v444, %v454
        %v462 = vmul.f32 %v445, %v454
        %v463 = vmul.f32 %v446, %v454
        %v464 = vmul.f32 %v447, %v454
        %v465 = vmul.f32 %v448, %v454
        %v466 = vmul.f32 %v449, %v454
        %v467 = vmul.f32 %v450, %v454
        %v468 = vmul.f32 %v451, %v454
        %v469 = vmul.f32 %v452, %v454
        %v470 = vmul.f32 %v453, %v454
        %s471 = scalar_lea.vmem %s379, 64 [#allocation2]
        %v472 = vld [vmem:[%s471] sm:$0xf]
        %v473 = vld [vmem:[%s471 + $0x4] sm:$0xf]
        %v474 = vld [vmem:[%s471 + $0x8] sm:$0xf]
        %v475 = vld [vmem:[%s471 + $0xc] sm:$0xf]
        %v476 = vld [vmem:[%s471 + $0x10] sm:$0xf]
        %v477 = vld [vmem:[%s471 + $0x14] sm:$0xf]
        %v478 = vld [vmem:[%s471 + $0x18] sm:$0xf]
        %v479 = vld [vmem:[%s471 + $0x1c] sm:$0xf]
        %v480 = vld [vmem:[%s471 + $0x20] sm:$0xf]
        %v481 = vld [vmem:[%s471 + $0x24] sm:$0xf]
        %v482 = vld [vmem:[%s471 + $0x28] sm:$0xf]
        %v483 = vld [vmem:[%s471 + $0x2c] sm:$0xf]
        %v484 = vld [vmem:[%s471 + $0x30] sm:$0xf]
        %v485 = vld [vmem:[%s471 + $0x34] sm:$0xf]
        %v486 = vld [vmem:[%s471 + $0x38] sm:$0xf]
        %v487 = vld [vmem:[%s471 + $0x3c] sm:$0xf]
        %v488 = vunpack.c.l.bf16 %v472
        %v489 = vunpack.c.l.bf16 %v473
        %v490 = vunpack.c.l.bf16 %v474
        %v491 = vunpack.c.l.bf16 %v475
        %v492 = vunpack.c.l.bf16 %v476
        %v493 = vunpack.c.l.bf16 %v477
        %v494 = vunpack.c.l.bf16 %v478
        %v495 = vunpack.c.l.bf16 %v479
        %v496 = vunpack.c.l.bf16 %v480
        %v497 = vunpack.c.l.bf16 %v481
        %v498 = vunpack.c.l.bf16 %v482
        %v499 = vunpack.c.l.bf16 %v483
        %v500 = vunpack.c.l.bf16 %v484
        %v501 = vunpack.c.l.bf16 %v485
        %v502 = vunpack.c.l.bf16 %v486
        %v503 = vunpack.c.l.bf16 %v487
        %v504 = vperm.slane %v421, 1
        %v505 = vmul.f32 %v488, %v504
        %v506 = vmul.f32 %v489, %v504
        %v507 = vmul.f32 %v490, %v504
        %v508 = vmul.f32 %v491, %v504
        %v509 = vmul.f32 %v492, %v504
        %v510 = vmul.f32 %v493, %v504
        %v511 = vmul.f32 %v494, %v504
        %v512 = vmul.f32 %v495, %v504
        %v513 = vmul.f32 %v496, %v504
        %v514 = vmul.f32 %v497, %v504
        %v515 = vmul.f32 %v498, %v504
        %v516 = vmul.f32 %v499, %v504
        %v517 = vmul.f32 %v500, %v504
        %v518 = vmul.f32 %v501, %v504
        %v519 = vmul.f32 %v502, %v504
        %v520 = vmul.f32 %v503, %v504
        %v521 = vadd.f32 %v455, %v505
        %v522 = vadd.f32 %v456, %v506
        %v523 = vadd.f32 %v457, %v507
        %v524 = vadd.f32 %v458, %v508
        %v525 = vadd.f32 %v459, %v509
        %v526 = vadd.f32 %v460, %v510
        %v527 = vadd.f32 %v461, %v511
        %v528 = vadd.f32 %v462, %v512
        %v529 = vadd.f32 %v463, %v513
        %v530 = vadd.f32 %v464, %v514
        %v531 = vadd.f32 %v465, %v515
        %v532 = vadd.f32 %v466, %v516
        %v533 = vadd.f32 %v467, %v517
        %v534 = vadd.f32 %v468, %v518
        %v535 = vadd.f32 %v469, %v519
        %v536 = vadd.f32 %v470, %v520
        %s537 = scalar_lea.vmem %s379, 128 [#allocation2]
        %v538 = vld [vmem:[%s537] sm:$0xf]
        %v539 = vld [vmem:[%s537 + $0x4] sm:$0xf]
        %v540 = vld [vmem:[%s537 + $0x8] sm:$0xf]
        %v541 = vld [vmem:[%s537 + $0xc] sm:$0xf]
        %v542 = vld [vmem:[%s537 + $0x10] sm:$0xf]
        %v543 = vld [vmem:[%s537 + $0x14] sm:$0xf]
        %v544 = vld [vmem:[%s537 + $0x18] sm:$0xf]
        %v545 = vld [vmem:[%s537 + $0x1c] sm:$0xf]
        %v546 = vld [vmem:[%s537 + $0x20] sm:$0xf]
        %v547 = vld [vmem:[%s537 + $0x24] sm:$0xf]
        %v548 = vld [vmem:[%s537 + $0x28] sm:$0xf]
        %v549 = vld [vmem:[%s537 + $0x2c] sm:$0xf]
        %v550 = vld [vmem:[%s537 + $0x30] sm:$0xf]
        %v551 = vld [vmem:[%s537 + $0x34] sm:$0xf]
        %v552 = vld [vmem:[%s537 + $0x38] sm:$0xf]
        %v553 = vld [vmem:[%s537 + $0x3c] sm:$0xf]
        %v554 = vunpack.c.l.bf16 %v538
        %v555 = vunpack.c.l.bf16 %v539
        %v556 = vunpack.c.l.bf16 %v540
        %v557 = vunpack.c.l.bf16 %v541
        %v558 = vunpack.c.l.bf16 %v542
        %v559 = vunpack.c.l.bf16 %v543
        %v560 = vunpack.c.l.bf16 %v544
        %v561 = vunpack.c.l.bf16 %v545
        %v562 = vunpack.c.l.bf16 %v546
        %v563 = vunpack.c.l.bf16 %v547
        %v564 = vunpack.c.l.bf16 %v548
        %v565 = vunpack.c.l.bf16 %v549
        %v566 = vunpack.c.l.bf16 %v550
        %v567 = vunpack.c.l.bf16 %v551
        %v568 = vunpack.c.l.bf16 %v552
        %v569 = vunpack.c.l.bf16 %v553
        %v570 = vperm.slane %v421, 2
        %v571 = vmul.f32 %v554, %v570
        %v572 = vmul.f32 %v555, %v570
        %v573 = vmul.f32 %v556, %v570
        %v574 = vmul.f32 %v557, %v570
        %v575 = vmul.f32 %v558, %v570
        %v576 = vmul.f32 %v559, %v570
        %v577 = vmul.f32 %v560, %v570
        %v578 = vmul.f32 %v561, %v570
        %v579 = vmul.f32 %v562, %v570
        %v580 = vmul.f32 %v563, %v570
        %v581 = vmul.f32 %v564, %v570
        %v582 = vmul.f32 %v565, %v570
        %v583 = vmul.f32 %v566, %v570
        %v584 = vmul.f32 %v567, %v570
        %v585 = vmul.f32 %v568, %v570
        %v586 = vmul.f32 %v569, %v570
        %v587 = vadd.f32 %v521, %v571
        %v588 = vadd.f32 %v522, %v572
        %v589 = vadd.f32 %v523, %v573
        %v590 = vadd.f32 %v524, %v574
        %v591 = vadd.f32 %v525, %v575
        %v592 = vadd.f32 %v526, %v576
        %v593 = vadd.f32 %v527, %v577
        %v594 = vadd.f32 %v528, %v578
        %v595 = vadd.f32 %v529, %v579
        %v596 = vadd.f32 %v530, %v580
        %v597 = vadd.f32 %v531, %v581
        %v598 = vadd.f32 %v532, %v582
        %v599 = vadd.f32 %v533, %v583
        %v600 = vadd.f32 %v534, %v584
        %v601 = vadd.f32 %v535, %v585
        %v602 = vadd.f32 %v536, %v586
        %vm603 = vcmask 31744
        %604 = vst.msk [vmem:[%s419] sm:$0xff] %vm603, %v587
        %605 = vst.msk [vmem:[%s419 + $0x8] sm:$0xff] %vm603, %v588
        %606 = vst.msk [vmem:[%s419 + $0x10] sm:$0xff] %vm603, %v589
        %607 = vst.msk [vmem:[%s419 + $0x18] sm:$0xff] %vm603, %v590
        %608 = vst.msk [vmem:[%s419 + $0x20] sm:$0xff] %vm603, %v591
        %609 = vst.msk [vmem:[%s419 + $0x28] sm:$0xff] %vm603, %v592
        %610 = vst.msk [vmem:[%s419 + $0x30] sm:$0xff] %vm603, %v593
        %611 = vst.msk [vmem:[%s419 + $0x38] sm:$0xff] %vm603, %v594
        %612 = vst.msk [vmem:[%s419 + $0x40] sm:$0xff] %vm603, %v595
        %613 = vst.msk [vmem:[%s419 + $0x48] sm:$0xff] %vm603, %v596
        %614 = vst.msk [vmem:[%s419 + $0x50] sm:$0xff] %vm603, %v597
        %615 = vst.msk [vmem:[%s419 + $0x58] sm:$0xff] %vm603, %v598
        %616 = vst.msk [vmem:[%s419 + $0x60] sm:$0xff] %vm603, %v599
        %617 = vst.msk [vmem:[%s419 + $0x68] sm:$0xff] %vm603, %v600
        %618 = vst.msk [vmem:[%s419 + $0x70] sm:$0xff] %vm603, %v601
        %619 = vst.msk [vmem:[%s419 + $0x78] sm:$0xff] %vm603, %v602
        %s620 = smul.u32 16, %s18
        %p621 = scmp.lt.s32.totalorder %s17, 1
        %s622 = scalar_select %p621, %s17, 1
        %p623 = scmp.lt.s32.totalorder %s620, 31
        %s624 = scalar_select %p623, %s620, 31
        %s625 = smul.addr %s622, 32
        %s626 = sadd.s32 %s624, %s625
        %s627 = smul.addr %s626, 8
        %s628 = scalar_lea.vmem %s2, %s627
        // Predicated region
        $region70: #{sk_attention_pallas.5} parent=64 // pred_check
          %p629 = pneg %p99
        $region71: #{sk_attention_pallas.5} parent=64 // pred_check_branch
          %631 = sbr.rel (%p629) target = $region73
        $region72: #{sk_attention_pallas.5} parent=64 // pred_region
          %s632 = smul.u32 16, %s18
        $region73: #{sk_attention_pallas.5} parent=64 // pred_fallthru
          _
      $region65: #{sk_attention_pallas.5} parent=5 // pred_fallthru
        _
      %p633 = scmp.le.s32.totalorder 2, %s8
      // Predicated region
      $region74: #{sk_attention_pallas.5} parent=5 // pred_check
        %p634 = pneg %p633
      $region75: #{sk_attention_pallas.5} parent=5 // pred_check_branch
        %636 = sbr.rel (%p634) target = $region77
      $region76: #{sk_attention_pallas.5} parent=5 // pred_region
        %s637 = ssub.s32 %s8, 2
        // Predicated region
        $region78: #{sk_attention_pallas.5} parent=76 // pred_check
          %p638 = pneg %p105
        $region79: #{sk_attention_pallas.5} parent=76 // pred_check_branch
          %640 = sbr.rel (%p638) target = $region81
        $region80: #{sk_attention_pallas.5} parent=76 // pred_region
          %s641 = smul.u32 16, %s20
          %p642 = scmp.lt.s32.totalorder %s19, 1
          %s643 = scalar_select %p642, %s19, 1
          %p644 = scmp.lt.s32.totalorder %s641, 31
          %s645 = scalar_select %p644, %s641, 31
          %s646 = smul.addr %s643, 32
          %s647 = sadd.s32 %s645, %s646
          %s648 = smul.addr %s647, 8
          %s649 = scalar_lea.vmem %s2, %s648
        $region81: #{sk_attention_pallas.5} parent=76 // pred_fallthru
          _
      $region77: #{sk_attention_pallas.5} parent=5 // pred_fallthru
        _
    $region6: #{sk_attention_pallas.5} parent=1 // loop_footer
      %s12 = sadd.s32 1, %s8
    $region7: #{sk_attention_pallas.5} parent=1 // loop_footer_branch
      %7 = sbr.rel target = $region3
    $region8: #{sk_attention_pallas.5} parent=1 // loop_exit
      _

// kernel: sk_attention_pallas.3
$region0: #{sk_attention_pallas.3}
  #allocation0 [shape = 'u32[]', space=smem, size = 0x4, offset = 0x4, fixed_abs, tag = 'smem constant byte address 0x4 - core index']
  #allocation1 [shape = 'u32[72,128]{1,0:T(1,128)}', space=vmem, size = 0x9000, scoped, tag = 'internal scratch']
  %s0 = inlined_call_operand.vmem [shape: bf16[2,2,12,20,4], index: 0, kind: input, shape index: {}]
  %s1 = inlined_call_operand.vmem [shape: bf16[35,4,4], index: 1, kind: input, shape index: {}]
  %s2 = inlined_call_operand.vmem [shape: f32[3,4], index: 2, kind: input, shape index: {}]
  %s3 = inlined_call_operand.vmem [shape: bf16[3,2,256,4], index: 3, kind: output, shape index: {0}]
  %s4 = inlined_call_operand.vmem [shape: f32[2,1,4], index: 4, kind: output, shape index: {1}]
  %5 = xla_tuple %s3, %s4
  %s6 = sld [smem:[#allocation0]]
  $region94: #{sk_attention_pallas.3} parent=0
    _
  %s8 = ssub.s32 1, %s6
  %s9 = scalar_select 0, %s8, %s6
  $region1: #{sk_attention_pallas.3} parent=0
    #allocation2 [shape = 'u8[196608]{0}', space=vmem, size = 0x30000, scoped, tag = 'output window, operand 0']
    loop: start=0, step=1, limit=6
    $region2: #{sk_attention_pallas.3} parent=1 // loop_pre_header
      _
    $region3: #{sk_attention_pallas.3} parent=1 // loop_header
      %s11 = sphi 0, %s15
      %p12 = scmp.ge.s32.totalorder %s11, 6
      %s18 = sphi 0, %s30
      %s19 = sphi 0, %s26
      %s20 = sphi 0, %s18
      %s21 = sphi 0, %s19
      %s22 = sphi 0, %s20
      %s23 = sphi 0, %s21
      %s35 = sphi 0, %s37
      %s38 = sphi 0, %s35
      %s39 = sphi 0, %s38
      %s55 = sphi 0, %s39
      %s59 = sphi 0, %s59
      %s61 = sphi 0, %s59
      %s62 = sphi 0, %s61
      %s76 = sphi 0, %s62
      %s80 = sphi 0, %s80
      %s82 = sphi 0, %s80
      %s83 = sphi 0, %s82
      %s97 = sphi 0, %s83
      %s105 = sphi 0, %s107
      %s108 = sphi 0, %s105
      %s109 = sphi 0, %s108
      %s125 = sphi 0, %s109
      %s131 = sphi 0, %s133
      %s134 = sphi 0, %s131
      %s135 = sphi 0, %s134
      %s151 = sphi 0, %s135
    $region4: #{sk_attention_pallas.3} parent=1 // loop_header_branch
      %14 = sbr.rel (%p12) target = $region8
    $region5: #{sk_attention_pallas.3} parent=1 // loop_body
      %s16 = ssub.s32 %s11, 1
      %s17 = ssub.s32 %s11, 2
      %s24 = sadd.s32 1, %s19
      %p25 = scmp.ge.s32.totalorder %s24, 2
      %s26 = scalar_select %p25, 0, %s24
      %s27 = sadd.s32 1, %s18
      %s28 = scalar_select %p25, %s27, %s18
      %p29 = scmp.ge.s32.totalorder %s28, 2
      %s30 = scalar_select %p29, 0, %s28
      %s31 = ssub.s32 %s18, %s30
      %s32 = ssub.s32 %s19, %s26
      %s33 = sor.u32 %s31, %s32
      %p34 = scmp.eq.s32.totalorder %s33, 0
      %s36 = sadd.s32 %s35, 1
      %s37 = scalar_select %p34, %s35, %s36
      %p40 = pneg %p34
      %p41 = scmp.eq.s32.totalorder %s11, 3
      %p42 = por %p40, %p41
      %p43 = scmp.ne.s32.totalorder %s35, %s38
      %p44 = scmp.eq.s32.totalorder %s11, 0
      %p45 = por %p43, %p44
      %p46 = scmp.ne.s32.totalorder %s35, %s38
      %p47 = scmp.eq.s32.totalorder %s16, 3
      %p48 = por %p46, %p47
      %p49 = scmp.ne.s32.totalorder %s38, %s39
      %p50 = scmp.eq.s32.totalorder %s16, 0
      %p51 = por %p49, %p50
      %p52 = scmp.ne.s32.totalorder %s38, %s39
      %p53 = scmp.eq.s32.totalorder %s17, 3
      %p54 = por %p52, %p53
      %p56 = scmp.ne.s32.totalorder %s39, %s55
      %p57 = scmp.eq.s32.totalorder %s17, 0
      %p58 = por %p56, %p57
      %s60 = sadd.s32 %s59, 1
      %p63 = scmp.eq.s32.totalorder %s11, 3
      %p64 = scmp.ne.s32.totalorder %s59, %s61
      %p65 = scmp.eq.s32.totalorder %s11, 0
      %p66 = por %p64, %p65
      %p67 = scmp.ne.s32.totalorder %s59, %s61
      %p68 = scmp.eq.s32.totalorder %s16, 3
      %p69 = por %p67, %p68
      %p70 = scmp.ne.s32.totalorder %s61, %s62
      %p71 = scmp.eq.s32.totalorder %s16, 0
      %p72 = por %p70, %p71
      %p73 = scmp.ne.s32.totalorder %s61, %s62
      %p74 = scmp.eq.s32.totalorder %s17, 3
      %p75 = por %p73, %p74
      %p77 = scmp.ne.s32.totalorder %s62, %s76
      %p78 = scmp.eq.s32.totalorder %s17, 0
      %p79 = por %p77, %p78
      %s81 = sadd.s32 %s80, 1
      %p84 = scmp.eq.s32.totalorder %s11, 3
      %p85 = scmp.ne.s32.totalorder %s80, %s82
      %p86 = scmp.eq.s32.totalorder %s11, 0
      %p87 = por %p85, %p86
      %p88 = scmp.ne.s32.totalorder %s80, %s82
      %p89 = scmp.eq.s32.totalorder %s16, 3
      %p90 = por %p88, %p89
      %p91 = scmp.ne.s32.totalorder %s82, %s83
      %p92 = scmp.eq.s32.totalorder %s16, 0
      %p93 = por %p91, %p92
      %p94 = scmp.ne.s32.totalorder %s82, %s83
      %p95 = scmp.eq.s32.totalorder %s17, 3
      %p96 = por %p94, %p95
      %p98 = scmp.ne.s32.totalorder %s83, %s97
      %p99 = scmp.eq.s32.totalorder %s17, 0
      %p100 = por %p98, %p99
      %s101 = ssub.s32 %s18, %s30
      %s102 = ssub.s32 %s19, %s26
      %s103 = sor.u32 %s101, %s102
      %p104 = scmp.eq.s32.totalorder %s103, 0
      %s106 = sadd.s32 %s105, 1
      %s107 = scalar_select %p104, %s105, %s106
      %p110 = pneg %p104
      %p111 = scmp.eq.s32.totalorder %s11, 3
      %p112 = por %p110, %p111
      %p113 = scmp.ne.s32.totalorder %s105, %s108
      %p114 = scmp.eq.s32.totalorder %s11, 0
      %p115 = por %p113, %p114
      %p116 = scmp.ne.s32.totalorder %s105, %s108
      %p117 = scmp.eq.s32.totalorder %s16, 3
      %p118 = por %p116, %p117
      %p119 = scmp.ne.s32.totalorder %s108, %s109
      %p120 = scmp.eq.s32.totalorder %s16, 0
      %p121 = por %p119, %p120
      %p122 = scmp.ne.s32.totalorder %s108, %s109
      %p123 = scmp.eq.s32.totalorder %s17, 3
      %p124 = por %p122, %p123
      %p126 = scmp.ne.s32.totalorder %s109, %s125
      %p127 = scmp.eq.s32.totalorder %s17, 0
      %p128 = por %p126, %p127
      %s129 = ssub.s32 %s18, %s30
      %p130 = scmp.eq.s32.totalorder %s129, 0
      %s132 = sadd.s32 %s131, 1
      %s133 = scalar_select %p130, %s131, %s132
      %p136 = pneg %p130
      %p137 = scmp.eq.s32.totalorder %s11, 3
      %p138 = por %p136, %p137
      %p139 = scmp.ne.s32.totalorder %s131, %s134
      %p140 = scmp.eq.s32.totalorder %s11, 0
      %p141 = por %p139, %p140
      %p142 = scmp.ne.s32.totalorder %s131, %s134
      %p143 = scmp.eq.s32.totalorder %s16, 3
      %p144 = por %p142, %p143
      %p145 = scmp.ne.s32.totalorder %s134, %s135
      %p146 = scmp.eq.s32.totalorder %s16, 0
      %p147 = por %p145, %p146
      %p148 = scmp.ne.s32.totalorder %s134, %s135
      %p149 = scmp.eq.s32.totalorder %s17, 3
      %p150 = por %p148, %p149
      %p152 = scmp.ne.s32.totalorder %s135, %s151
      %p153 = scmp.eq.s32.totalorder %s17, 0
      %p154 = por %p152, %p153
      %p155 = scmp.le.s32.totalorder 1, %s11
      %p156 = scmp.lt.s32.totalorder %s11, 5
      %p157 = pnand %p155, %p156
      %p158 = pneg %p157
      // Predicated region
      $region9: #{sk_attention_pallas.3} parent=5 // pred_check
        _
      $region10: #{sk_attention_pallas.3} parent=5 // pred_check_branch
        %160 = sbr.rel (%p157) target = $region12
      $region11: #{sk_attention_pallas.3} parent=5 // pred_region
        %s161 = ssub.s32 %s11, 1
        // Predicated region
        $region13: #{sk_attention_pallas.3} parent=11 // pred_check
          %p162 = pneg %p72
        $region14: #{sk_attention_pallas.3} parent=11 // pred_check_branch
          %164 = sbr.rel (%p162) target = $region16
        $region15: #{sk_attention_pallas.3} parent=11 // pred_region
          _
        $region16: #{sk_attention_pallas.3} parent=11 // pred_fallthru
          _
        // Predicated region
        $region17: #{sk_attention_pallas.3} parent=11 // pred_check
          %p165 = pneg %p93
        $region18: #{sk_attention_pallas.3} parent=11 // pred_check_branch
          %167 = sbr.rel (%p165) target = $region20
        $region19: #{sk_attention_pallas.3} parent=11 // pred_region
          _
        $region20: #{sk_attention_pallas.3} parent=11 // pred_fallthru
          _
      $region12: #{sk_attention_pallas.3} parent=5 // pred_fallthru
        _
      %p168 = scmp.lt.s32.totalorder %s11, 4
      // Predicated region
      $region21: #{sk_attention_pallas.3} parent=5 // pred_check
        %p169 = pneg %p168
      $region22: #{sk_attention_pallas.3} parent=5 // pred_check_branch
        %171 = sbr.rel (%p169) target = $region24
      $region23: #{sk_attention_pallas.3} parent=5 // pred_region
        // Predicated region
        $region25: #{sk_attention_pallas.3} parent=23 // pred_check
          %p172 = pneg %p45
        $region26: #{sk_attention_pallas.3} parent=23 // pred_check_branch
          %174 = sbr.rel (%p172) target = $region28
        $region27: #{sk_attention_pallas.3} parent=23 // pred_region
          %p175 = scmp.lt.s32.totalorder %s18, 1
          %s176 = scalar_select %p175, %s18, 1
          %p177 = scmp.lt.s32.totalorder %s19, 1
          %s178 = scalar_select %p177, %s19, 1
          %s179 = smul.addr %s178, 36
          %s180 = smul.addr %s176, 72
          %s181 = sadd.s32 %s179, %s180
          %s182 = smul.addr %s181, 4
          %s183 = scalar_lea.vmem %s0, %s182
        $region28: #{sk_attention_pallas.3} parent=23 // pred_fallthru
          _
      $region24: #{sk_attention_pallas.3} parent=5 // pred_fallthru
        _
      %p184 = scmp.le.s32.totalorder 1, %s11
      %p185 = scmp.lt.s32.totalorder %s11, 5
      %p186 = pnand %p184, %p185
      %p187 = pneg %p186
      // Predicated region
      $region29: #{sk_attention_pallas.3} parent=5 // pred_check
        _
      $region30: #{sk_attention_pallas.3} parent=5 // pred_check_branch
        %189 = sbr.rel (%p186) target = $region32
      $region31: #{sk_attention_pallas.3} parent=5 // pred_region
        %s190 = ssub.s32 %s11, 1
        %p191 = scmp.lt.s32.totalorder %s20, 1
        %s192 = scalar_select %p191, %s20, 1
        %p193 = scmp.lt.s32.totalorder %s21, 1
        %s194 = scalar_select %p193, %s21, 1
        %s195 = smul.addr %s194, 36
        %s196 = smul.addr %s192, 72
        %s197 = sadd.s32 %s195, %s196
        %s198 = smul.addr %s197, 4
        %s199 = scalar_lea.vmem %s0, %s198
        %p200 = pneg %p51
        %p201 = pneg %p48
        %p202 = pneg %p72
        %p203 = pneg %p69
        %p204 = pneg %p93
        %p205 = pneg %p90
        %p206 = pneg %p121
        %p207 = pneg %p118
        %s208 = sand.u32 %s108, 1
        %s209 = sand.u32 %s108, 1
        %s210 = smul.addr %s209, 192
        %s211 = scalar_lea.vmem [#allocation2], %s210
        %p212 = pneg %p147
        %p213 = pneg %p144
        %p214 = scmp.lt.s32.totalorder %s20, 1
        %s215 = scalar_select %p214, %s20, 1
        %s216 = scalar_lea.vmem %s4, %s215
        %p217 = scmp.lt.s32.totalorder %s20, 1
        %s218 = scalar_select %p217, %s20, 1
        %p219 = scmp.lt.s32.totalorder %s21, 1
        %s220 = scalar_select %p219, %s21, 1
        %s221 = smul.addr %s220, 36
        %s222 = smul.addr %s218, 72
        %s223 = sadd.s32 %s221, %s222
        %s224 = smul.addr %s223, 4
        %s225 = scalar_lea.vmem %s0, %s224
        %s226 = smul.u32 16, %s21
        %p227 = scmp.lt.s32.totalorder %s20, 1
        %s228 = scalar_select %p227, %s20, 1
        %s229 = scalar_lea.vmem %s4, %s228
        %p231 = scmp.eq.s32.totalorder %s21, 0
        // Predicated region
        $region33: #{sk_attention_pallas.3} parent=31 // pred_check
          %p232 = pneg %p231
        $region34: #{sk_attention_pallas.3} parent=31 // pred_check_branch
          %234 = sbr.rel (%p232) target = $region36
        $region35: #{sk_attention_pallas.3} parent=31 // pred_region
          %vm235 = vcmask 24576
          %236 = vst.msk [vmem:[%s229] sm:$0x1] %vm235, 0.0
        $region36: #{sk_attention_pallas.3} parent=31 // pred_fallthru
          _
        %v237 = vld [vmem:[%s225] sm:$0xf]
        %v238 = vld [vmem:[%s225 + $0x4] sm:$0xf]
        %v239 = vld [vmem:[%s225 + $0x8] sm:$0x3]
        %v240 = vld [vmem:[%s225 + $0xc] sm:$0xf]
        %v241 = vld [vmem:[%s225 + $0x10] sm:$0xf]
        %v242 = vld [vmem:[%s225 + $0x14] sm:$0x3]
        %v243 = vld [vmem:[%s225 + $0x18] sm:$0xf]
        %v244 = vld [vmem:[%s225 + $0x1c] sm:$0xf]
        %v245 = vld [vmem:[%s225 + $0x20] sm:$0x3]
        %v246 = vld [vmem:[%s225 + $0x24] sm:$0xf]
        %v247 = vld [vmem:[%s225 + $0x28] sm:$0xf]
        %v248 = vld [vmem:[%s225 + $0x2c] sm:$0x3]
        %v249 = vld [vmem:[%s225 + $0x30] sm:$0xf]
        %v250 = vld [vmem:[%s225 + $0x34] sm:$0xf]
        %v251 = vld [vmem:[%s225 + $0x38] sm:$0x3]
        %v252 = vld [vmem:[%s225 + $0x3c] sm:$0xf]
        %v253 = vld [vmem:[%s225 + $0x40] sm:$0xf]
        %v254 = vld [vmem:[%s225 + $0x44] sm:$0x3]
        %v255 = vld [vmem:[%s225 + $0x48] sm:$0xf]
        %v256 = vld [vmem:[%s225 + $0x4c] sm:$0xf]
        %v257 = vld [vmem:[%s225 + $0x50] sm:$0x3]
        %v258 = vld [vmem:[%s225 + $0x54] sm:$0xf]
        %v259 = vld [vmem:[%s225 + $0x58] sm:$0xf]
        %v260 = vld [vmem:[%s225 + $0x5c] sm:$0x3]
        %v261 = vld [vmem:[%s225 + $0x60] sm:$0xf]
        %v262 = vld [vmem:[%s225 + $0x64] sm:$0xf]
        %v263 = vld [vmem:[%s225 + $0x68] sm:$0x3]
        %v264 = vld [vmem:[%s225 + $0x6c] sm:$0xf]
        %v265 = vld [vmem:[%s225 + $0x70] sm:$0xf]
        %v266 = vld [vmem:[%s225 + $0x74] sm:$0x3]
        %v267 = vld [vmem:[%s225 + $0x78] sm:$0xf]
        %v268 = vld [vmem:[%s225 + $0x7c] sm:$0xf]
        %v269 = vld [vmem:[%s225 + $0x80] sm:$0x3]
        %v270 = vld [vmem:[%s225 + $0x84] sm:$0xf]
        %v271 = vld [vmem:[%s225 + $0x88] sm:$0xf]
        %v272 = vld [vmem:[%s225 + $0x8c] sm:$0x3]
        %v273 = vunpack.c.l.bf16 %v237
        %v274 = vunpack.c.l.bf16 %v238
        %v275 = vunpack.c.l.bf16 %v239
        %v276 = vunpack.c.l.bf16 %v240
        %v277 = vunpack.c.l.bf16 %v241
        %v278 = vunpack.c.l.bf16 %v242
        %v279 = vunpack.c.l.bf16 %v243
        %v280 = vunpack.c.l.bf16 %v244
        %v281 = vunpack.c.l.bf16 %v245
        %v282 = vunpack.c.l.bf16 %v246
        %v283 = vunpack.c.l.bf16 %v247
        %v284 = vunpack.c.l.bf16 %v248
        %v285 = vunpack.c.l.bf16 %v249
        %v286 = vunpack.c.l.bf16 %v250
        %v287 = vunpack.c.l.bf16 %v251
        %v288 = vunpack.c.l.bf16 %v252
        %v289 = vunpack.c.l.bf16 %v253
        %v290 = vunpack.c.l.bf16 %v254
        %v291 = vunpack.c.l.bf16 %v255
        %v292 = vunpack.c.l.bf16 %v256
        %v293 = vunpack.c.l.bf16 %v257
        %v294 = vunpack.c.l.bf16 %v258
        %v295 = vunpack.c.l.bf16 %v259
        %v296 = vunpack.c.l.bf16 %v260
        %v297 = vunpack.c.l.bf16 %v261
        %v298 = vunpack.c.l.bf16 %v262
        %v299 = vunpack.c.l.bf16 %v263
        %v300 = vunpack.c.l.bf16 %v264
        %v301 = vunpack.c.l.bf16 %v265
        %v302 = vunpack.c.l.bf16 %v266
        %v303 = vunpack.c.l.bf16 %v267
        %v304 = vunpack.c.l.bf16 %v268
        %v305 = vunpack.c.l.bf16 %v269
        %v306 = vunpack.c.l.bf16 %v270
        %v307 = vunpack.c.l.bf16 %v271
        %v308 = vunpack.c.l.bf16 %v272
        %v309 = vld [vmem:[%s2] sm:$0x7]
        %vm334 = vcmask 1045504
        %v335 = vrot.slane %v279, 2
        %v336 = vrot.slane %v280, 2
        %v337 = vsel %vm334, %v335, %v336
        %v338 = vrot.slane %v281, 2
        %v339 = vsel %vm334, %v336, %v338
        %v340 = vrot.slane %v282, 2
        %v341 = vrot.slane %v283, 2
        %v342 = vsel %vm334, %v340, %v341
        %v343 = vrot.slane %v284, 2
        %v344 = vsel %vm334, %v341, %v343
        %v345 = vrot.slane %v285, 2
        %v346 = vrot.slane %v286, 2
        %v347 = vsel %vm334, %v345, %v346
        %v348 = vrot.slane %v287, 2
        %v349 = vsel %vm334, %v346, %v348
        %v350 = vrot.slane %v288, 2
        %v351 = vrot.slane %v289, 2
        %v352 = vsel %vm334, %v350, %v351
        %v353 = vrot.slane %v290, 2
        %v354 = vsel %vm334, %v351, %v353
        %v355 = vrot.slane %v291, 2
        %v356 = vrot.slane %v292, 2
        %v357 = vsel %vm334, %v355, %v356
        %v358 = vrot.slane %v293, 2
        %v359 = vsel %vm334, %v356, %v358
        %v360 = vrot.slane %v294, 2
        %v361 = vrot.slane %v295, 2
        %v362 = vsel %vm334, %v360, %v361
        %v363 = vrot.slane %v296, 2
        %v364 = vsel %vm334, %v361, %v363
        %v365 = vrot.slane %v297, 2
        %v366 = vrot.slane %v298, 2
        %v367 = vsel %vm334, %v365, %v366
        %v368 = vrot.slane %v299, 2
        %v369 = vsel %vm334, %v366, %v368
        %v370 = vrot.slane %v300, 2
        %v371 = vrot.slane %v301, 2
        %v372 = vsel %vm334, %v370, %v371
        %v373 = vrot.slane %v302, 2
        %v374 = vsel %vm334, %v371, %v373
        %v391 = vpack.c.bf16 %v339, %v337
        %v392 = vpack.c.bf16 %v344, %v342
        %v393 = vpack.c.bf16 %v349, %v347
        %v394 = vpack.c.bf16 %v354, %v352
        %v395 = vpack.c.bf16 %v359, %v357
        %v396 = vpack.c.bf16 %v364, %v362
        %v397 = vpack.c.bf16 %v369, %v367
        %v398 = vpack.c.bf16 %v374, %v372
        %v399 = vld [vmem:[%s1] sm:$0x3]
        %v400 = vperm.slane %v309, 0
        %vm401 = vcmask 31744
        %v403 = vsel %vm401, %v391, 0
        %v406 = vsel %vm401, %v392, 0
        %v409 = vsel %vm401, %v393, 0
        %v412 = vsel %vm401, %v394, 0
        %v415 = vsel %vm401, %v395, 0
        %v418 = vsel %vm401, %v396, 0
        %v421 = vsel %vm401, %v397, 0
        %v424 = vsel %vm401, %v398, 0
        %vm426 = vcmask 1041408
        %v428 = vsel %vm426, %v399, 0
        %430 = vmatpush.bf16.msra.mxu0 0
        %431 = vmatpush.bf16.msra.mxu0 0
        %432 = vmatpush.bf16.msra.mxu0 0
        %433 = vmatpush.bf16.msra.mxu0 0
        %434 = vmatpush.bf16.msra.mxu0 0
        %435 = vmatpush.bf16.msra.mxu0 0
        %436 = vmatpush.bf16.msra.mxu0 0
        %437 = vmatpush.bf16.msra.mxu0 %v428
        %438 = vmatmul.bf16.gmra.mxu0 %v403
        %v439 = vpop.f32.mrf.mxu0
        %v440 = vadd.f32 %v400, %v439
        %v441 = vpop.f32.mrf.mxu0
        %v442 = vadd.f32 %v400, %v441
        %443 = vmatmul.bf16.gmra.mxu0 %v406
        %v444 = vpop.f32.mrf.mxu0
        %v445 = vadd.f32 %v400, %v444
        %v446 = vpop.f32.mrf.mxu0
        %v447 = vadd.f32 %v400, %v446
        %448 = vmatmul.bf16.gmra.mxu0 %v409
        %v449 = vpop.f32.mrf.mxu0
        %v450 = vadd.f32 %v400, %v449
        %v451 = vpop.f32.mrf.mxu0
        %v452 = vadd.f32 %v400, %v451
        %453 = vmatmul.bf16.gmra.mxu0 %v412
        %v454 = vpop.f32.mrf.mxu0
        %v455 = vadd.f32 %v400, %v454
        %v456 = vpop.f32.mrf.mxu0
        %v457 = vadd.f32 %v400, %v456
        %458 = vmatmul.bf16.gmra.mxu0 %v415
        %v459 = vpop.f32.mrf.mxu0
        %v460 = vadd.f32 %v400, %v459
        %v461 = vpop.f32.mrf.mxu0
        %v462 = vadd.f32 %v400, %v461
        %463 = vmatmul.bf16.gmra.mxu0 %v418
        %v464 = vpop.f32.mrf.mxu0
        %v465 = vadd.f32 %v400, %v464
        %v466 = vpop.f32.mrf.mxu0
        %v467 = vadd.f32 %v400, %v466
        %468 = vmatmul.bf16.gmra.mxu0 %v421
        %v469 = vpop.f32.mrf.mxu0
        %v470 = vadd.f32 %v400, %v469
        %v471 = vpop.f32.mrf.mxu0
        %v472 = vadd.f32 %v400, %v471
        %473 = vmatmul.bf16.gmra.mxu0 %v424
        %v474 = vpop.f32.mrf.mxu0
        %v475 = vadd.f32 %v400, %v474
        %v476 = vpop.f32.mrf.mxu0
        %v477 = vadd.f32 %v400, %v476
        %478 = vdwg.mxu0
        %v479 = vmax.f32 %v440, 0.0
        %v480 = vmax.f32 %v442, 0.0
        %v481 = vmax.f32 %v445, 0.0
        %v482 = vmax.f32 %v447, 0.0
        %v483 = vmax.f32 %v450, 0.0
        %v484 = vmax.f32 %v452, 0.0
        %v485 = vmax.f32 %v455, 0.0
        %v486 = vmax.f32 %v457, 0.0
        %v487 = vmax.f32 %v460, 0.0
        %v488 = vmax.f32 %v462, 0.0
        %v489 = vmax.f32 %v465, 0.0
        %v490 = vmax.f32 %v467, 0.0
        %v491 = vmax.f32 %v470, 0.0
        %v492 = vmax.f32 %v472, 0.0
        %v493 = vmax.f32 %v475, 0.0
        %v494 = vmax.f32 %v477, 0.0
        %v495 = vpack.c.bf16 %v479, %v479
        %v496 = vpack.c.bf16 %v480, %v480
        %v497 = vpack.c.bf16 %v481, %v481
        %v498 = vpack.c.bf16 %v482, %v482
        %v499 = vpack.c.bf16 %v483, %v483
        %v500 = vpack.c.bf16 %v484, %v484
        %v501 = vpack.c.bf16 %v485, %v485
        %v502 = vpack.c.bf16 %v486, %v486
        %v503 = vpack.c.bf16 %v487, %v487
        %v504 = vpack.c.bf16 %v488, %v488
        %v505 = vpack.c.bf16 %v489, %v489
        %v506 = vpack.c.bf16 %v490, %v490
        %v507 = vpack.c.bf16 %v491, %v491
        %v508 = vpack.c.bf16 %v492, %v492
        %v509 = vpack.c.bf16 %v493, %v493
        %v510 = vpack.c.bf16 %v494, %v494
        %vm511 = vcmask 27648
        %512 = vst.msk [vmem:[%s211] sm:$0xf] %vm511, %v495
        %513 = vst.msk [vmem:[%s211 + $0x4] sm:$0xf] %vm511, %v496
        %514 = vst.msk [vmem:[%s211 + $0x8] sm:$0xf] %vm511, %v497
        %515 = vst.msk [vmem:[%s211 + $0xc] sm:$0xf] %vm511, %v498
        %516 = vst.msk [vmem:[%s211 + $0x10] sm:$0xf] %vm511, %v499
        %517 = vst.msk [vmem:[%s211 + $0x14] sm:$0xf] %vm511, %v500
        %518 = vst.msk [vmem:[%s211 + $0x18] sm:$0xf] %vm511, %v501
        %519 = vst.msk [vmem:[%s211 + $0x1c] sm:$0xf] %vm511, %v502
        %520 = vst.msk [vmem:[%s211 + $0x20] sm:$0xf] %vm511, %v503
        %521 = vst.msk [vmem:[%s211 + $0x24] sm:$0xf] %vm511, %v504
        %522 = vst.msk [vmem:[%s211 + $0x28] sm:$0xf] %vm511, %v505
        %523 = vst.msk [vmem:[%s211 + $0x2c] sm:$0xf] %vm511, %v506
        %524 = vst.msk [vmem:[%s211 + $0x30] sm:$0xf] %vm511, %v507
        %525 = vst.msk [vmem:[%s211 + $0x34] sm:$0xf] %vm511, %v508
        %526 = vst.msk [vmem:[%s211 + $0x38] sm:$0xf] %vm511, %v509
        %527 = vst.msk [vmem:[%s211 + $0x3c] sm:$0xf] %vm511, %v510
        %v528 = vsel %vm401, %v479, 0.0
        %v529 = vsel %vm401, %v480, 0.0
        %v530 = vadd.f32 %v528, %v529
        %v531 = vsel %vm401, %v481, 0.0
        %v532 = vadd.f32 %v530, %v531
        %v533 = vsel %vm401, %v482, 0.0
        %v534 = vadd.f32 %v532, %v533
        %v535 = vsel %vm401, %v483, 0.0
        %v536 = vadd.f32 %v534, %v535
        %v537 = vsel %vm401, %v484, 0.0
        %v538 = vadd.f32 %v536, %v537
        %v539 = vsel %vm401, %v485, 0.0
        %v540 = vadd.f32 %v538, %v539
        %v541 = vsel %vm401, %v486, 0.0
        %v542 = vadd.f32 %v540, %v541
        %v543 = vsel %vm401, %v487, 0.0
        %v544 = vadd.f32 %v542, %v543
        %v545 = vsel %vm401, %v488, 0.0
        %v546 = vadd.f32 %v544, %v545
        %v547 = vsel %vm401, %v489, 0.0
        %v548 = vadd.f32 %v546, %v547
        %v549 = vsel %vm401, %v490, 0.0
        %v550 = vadd.f32 %v548, %v549
        %v551 = vsel %vm401, %v491, 0.0
        %v552 = vadd.f32 %v550, %v551
        %v553 = vsel %vm401, %v492, 0.0
        %v554 = vadd.f32 %v552, %v553
        %v555 = vsel %vm401, %v493, 0.0
        %v556 = vadd.f32 %v554, %v555
        %v557 = vsel %vm401, %v494, 0.0
        %v558 = vadd.f32 %v556, %v557
        %v559 = vrot.slane %v558, 4
        %v560 = vadd.f32 %v558, %v559
        %v561 = vrot.slane %v560, 2
        %v562 = vadd.f32 %v560, %v561
        %v563 = vrot.slane %v562, 1
        %v564 = vadd.f32 %v562, %v563
        %v565 = vadd.f32 %v564, 0.0
        %vm569 = vcmask 1046528
        %v570 = vrot.slane %v276, 1
        %v571 = vrot.slane %v277, 1
        %v572 = vsel %vm569, %v570, %v571
        %v573 = vrot.slane %v278, 1
        %v574 = vsel %vm569, %v571, %v573
        %v575 = vrot.slane %v279, 1
        %v576 = vrot.slane %v280, 1
        %v577 = vsel %vm569, %v575, %v576
        %v578 = vrot.slane %v281, 1
        %v579 = vsel %vm569, %v576, %v578
        %v580 = vrot.slane %v282, 1
        %v581 = vrot.slane %v283, 1
        %v582 = vsel %vm569, %v580, %v581
        %v583 = vrot.slane %v284, 1
        %v584 = vsel %vm569, %v581, %v583
        %v585 = vrot.slane %v285, 1
        %v586 = vrot.slane %v286, 1
        %v587 = vsel %vm569, %v585, %v586
        %v588 = vrot.slane %v287, 1
        %v589 = vsel %vm569, %v586, %v588
        %v590 = vrot.slane %v288, 1
        %v591 = vrot.slane %v289, 1
        %v592 = vsel %vm569, %v590, %v591
        %v593 = vrot.slane %v290, 1
        %v594 = vsel %vm569, %v591, %v593
        %v595 = vrot.slane %v291, 1
        %v596 = vrot.slane %v292, 1
        %v597 = vsel %vm569, %v595, %v596
        %v598 = vrot.slane %v293, 1
        %v599 = vsel %vm569, %v596, %v598
        %v600 = vrot.slane %v294, 1
        %v601 = vrot.slane %v295, 1
        %v602 = vsel %vm569, %v600, %v601
        %v603 = vrot.slane %v296, 1
        %v604 = vsel %vm569, %v601, %v603
        %v605 = vrot.slane %v297, 1
        %v606 = vrot.slane %v298, 1
        %v607 = vsel %vm569, %v605, %v606
        %v608 = vrot.slane %v299, 1
        %v609 = vsel %vm569, %v606, %v608
        %v626 = vpack.c.bf16 %v574, %v572
        %v627 = vpack.c.bf16 %v579, %v577
        %v628 = vpack.c.bf16 %v584, %v582
        %v629 = vpack.c.bf16 %v589, %v587
        %v630 = vpack.c.bf16 %v594, %v592
        %v631 = vpack.c.bf16 %v599, %v597
        %v632 = vpack.c.bf16 %v604, %v602
        %v633 = vpack.c.bf16 %v609, %v607
        %s634 = scalar_lea.vmem %s1, 2
        %v635 = vld [vmem:[%s634] sm:$0x3]
        %v636 = vrot.slane %v276, 2
        %v637 = vrot.slane %v277, 2
        %v638 = vsel %vm334, %v636, %v637
        %v639 = vrot.slane %v278, 2
        %v640 = vsel %vm334, %v637, %v639
        %v643 = vpack.c.bf16 %v640, %v638
        %s644 = scalar_lea.vmem %s1, 4
        %v645 = vld [vmem:[%s644] sm:$0x3]
        %v647 = vsel %vm401, %v643, 0
        %v650 = vsel %vm426, %v645, 0
        %652 = vmatpush.bf16.msra.mxu0 0
        %653 = vmatpush.bf16.msra.mxu0 0
        %654 = vmatpush.bf16.msra.mxu0 0
        %655 = vmatpush.bf16.msra.mxu0 0
        %656 = vmatpush.bf16.msra.mxu0 0
        %657 = vmatpush.bf16.msra.mxu0 0
        %658 = vmatpush.bf16.msra.mxu0 0
        %659 = vmatpush.bf16.msra.mxu0 %v650
        %660 = vmatmul.bf16.gmra.mxu0 %v647
        %v661 = vpop.f32.mrf.mxu0
        %v662 = vadd.f32 0.0, %v661
        %v663 = vpop.f32.mrf.mxu0
        %v664 = vadd.f32 0.0, %v663
        %665 = vmatmul.bf16.gmra.mxu0 %v403
        %v666 = vpop.f32.mrf.mxu0
        %v667 = vadd.f32 0.0, %v666
        %v668 = vpop.f32.mrf.mxu0
        %v669 = vadd.f32 0.0, %v668
        %670 = vmatmul.bf16.gmra.mxu0 %v406
        %v671 = vpop.f32.mrf.mxu0
        %v672 = vadd.f32 0.0, %v671
        %v673 = vpop.f32.mrf.mxu0
        %v674 = vadd.f32 0.0, %v673
        %675 = vmatmul.bf16.gmra.mxu0 %v409
        %v676 = vpop.f32.mrf.mxu0
        %v677 = vadd.f32 0.0, %v676
        %v678 = vpop.f32.mrf.mxu0
        %v679 = vadd.f32 0.0, %v678
        %680 = vmatmul.bf16.gmra.mxu0 %v412
        %v681 = vpop.f32.mrf.mxu0
        %v682 = vadd.f32 0.0, %v681
        %v683 = vpop.f32.mrf.mxu0
        %v684 = vadd.f32 0.0, %v683
        %685 = vmatmul.bf16.gmra.mxu0 %v415
        %v686 = vpop.f32.mrf.mxu0
        %v687 = vadd.f32 0.0, %v686
        %v688 = vpop.f32.mrf.mxu0
        %v689 = vadd.f32 0.0, %v688
        %690 = vmatmul.bf16.gmra.mxu0 %v418
        %v691 = vpop.f32.mrf.mxu0
        %v692 = vadd.f32 0.0, %v691
        %v693 = vpop.f32.mrf.mxu0
        %v694 = vadd.f32 0.0, %v693
        %695 = vmatmul.bf16.gmra.mxu0 %v421
        %v696 = vpop.f32.mrf.mxu0
        %v697 = vadd.f32 0.0, %v696
        %v698 = vpop.f32.mrf.mxu0
        %v699 = vadd.f32 0.0, %v698
        %700 = vdwg.mxu0
        %v702 = vsel %vm401, %v626, 0
        %v705 = vsel %vm401, %v627, 0
        %v708 = vsel %vm401, %v628, 0
        %v711 = vsel %vm401, %v629, 0
        %v714 = vsel %vm401, %v630, 0
        %v717 = vsel %vm401, %v631, 0
        %v720 = vsel %vm401, %v632, 0
        %v723 = vsel %vm401, %v633, 0
        %v726 = vsel %vm426, %v635, 0
        %728 = vmatpush.bf16.msra.mxu0 0
        %729 = vmatpush.bf16.msra.mxu0 0
        %730 = vmatpush.bf16.msra.mxu0 0
        %731 = vmatpush.bf16.msra.mxu0 0
        %732 = vmatpush.bf16.msra.mxu0 0
        %733 = vmatpush.bf16.msra.mxu0 0
        %734 = vmatpush.bf16.msra.mxu0 0
        %735 = vmatpush.bf16.msra.mxu0 %v726
        %736 = vmatmul.bf16.gmra.mxu0 %v702
        %v737 = vpop.f32.mrf.mxu0
        %v738 = vadd.f32 %v662, %v737
        %v739 = vpop.f32.mrf.mxu0
        %v740 = vadd.f32 %v664, %v739
        %741 = vmatmul.bf16.gmra.mxu0 %v705
        %v742 = vpop.f32.mrf.mxu0
        %v743 = vadd.f32 %v667, %v742
        %v744 = vpop.f32.mrf.mxu0
        %v745 = vadd.f32 %v669, %v744
        %746 = vmatmul.bf16.gmra.mxu0 %v708
        %v747 = vpop.f32.mrf.mxu0
        %v748 = vadd.f32 %v672, %v747
        %v749 = vpop.f32.mrf.mxu0
        %v750 = vadd.f32 %v674, %v749
        %751 = vmatmul.bf16.gmra.mxu0 %v711
        %v752 = vpop.f32.mrf.mxu0
        %v753 = vadd.f32 %v677, %v752
        %v754 = vpop.f32.mrf.mxu0
        %v755 = vadd.f32 %v679, %v754
        %756 = vmatmul.bf16.gmra.mxu0 %v714
        %v757 = vpop.f32.mrf.mxu0
        %v758 = vadd.f32 %v682, %v757
        %v759 = vpop.f32.mrf.mxu0
        %v760 = vadd.f32 %v684, %v759
        %761 = vmatmul.bf16.gmra.mxu0 %v717
        %v762 = vpop.f32.mrf.mxu0
        %v763 = vadd.f32 %v687, %v762
        %v764 = vpop.f32.mrf.mxu0
        %v765 = vadd.f32 %v689, %v764
        %766 = vmatmul.bf16.gmra.mxu0 %v720
        %v767 = vpop.f32.mrf.mxu0
        %v768 = vadd.f32 %v692, %v767
        %v769 = vpop.f32.mrf.mxu0
        %v770 = vadd.f32 %v694, %v769
        %771 = vmatmul.bf16.gmra.mxu0 %v723
        %v772 = vpop.f32.mrf.mxu0
        %v773 = vadd.f32 %v697, %v772
        %v774 = vpop.f32.mrf.mxu0
        %v775 = vadd.f32 %v699, %v774
        %776 = vdwg.mxu0
        %vm777 = vcmask 1044480
        %v778 = vrot.slane %v276, 3
        %v779 = vrot.slane %v277, 3
        %v780 = vsel %vm777, %v778, %v779
        %v781 = vrot.slane %v278, 3
        %v782 = vsel %vm777, %v779, %v781
        %v783 = vrot.slane %v279, 3
        %v784 = vrot.slane %v280, 3
        %v785 = vsel %vm777, %v783, %v784
        %v786 = vrot.slane %v281, 3
        %v787 = vsel %vm777, %v784, %v786
        %v788 = vrot.slane %v282, 3
        %v789 = vrot.slane %v283, 3
        %v790 = vsel %vm777, %v788, %v789
        %v791 = vrot.slane %v284, 3
        %v792 = vsel %vm777, %v789, %v791
        %v793 = vrot.slane %v285, 3
        %v794 = vrot.slane %v286, 3
        %v795 = vsel %vm777, %v793, %v794
        %v796 = vrot.slane %v287, 3
        %v797 = vsel %vm777, %v794, %v796
        %v798 = vrot.slane %v288, 3
        %v799 = vrot.slane %v289, 3
        %v800 = vsel %vm777, %v798, %v799
        %v801 = vrot.slane %v290, 3
        %v802 = vsel %vm777, %v799, %v801
        %v803 = vrot.slane %v291, 3
        %v804 = vrot.slane %v292, 3
        %v805 = vsel %vm777, %v803, %v804
        %v806 = vrot.slane %v293, 3
        %v807 = vsel %vm777, %v804, %v806
        %v808 = vrot.slane %v294, 3
        %v809 = vrot.slane %v295, 3
        %v810 = vsel %vm777, %v808, %v809
        %v811 = vrot.slane %v296, 3
        %v812 = vsel %vm777, %v809, %v811
        %v813 = vrot.slane %v297, 3
        %v814 = vrot.slane %v298, 3
        %v815 = vsel %vm777, %v813, %v814
        %v816 = vrot.slane %v299, 3
        %v817 = vsel %vm777, %v814, %v816
        %v834 = vpack.c.bf16 %v782, %v780
        %v835 = vpack.c.bf16 %v787, %v785
        %v836 = vpack.c.bf16 %v792, %v790
        %v837 = vpack.c.bf16 %v797, %v795
        %v838 = vpack.c.bf16 %v802, %v800
        %v839 = vpack.c.bf16 %v807, %v805
        %v840 = vpack.c.bf16 %v812, %v810
        %v841 = vpack.c.bf16 %v817, %v815
        %s842 = scalar_lea.vmem %s1, 6
        %v843 = vld [vmem:[%s842] sm:$0x3]
        %v845 = vsel %vm401, %v834, 0
        %v848 = vsel %vm401, %v835, 0
        %v851 = vsel %vm401, %v836, 0
        %v854 = vsel %vm401, %v837, 0
        %v857 = vsel %vm401, %v838, 0
        %v860 = vsel %vm401, %v839, 0
        %v863 = vsel %vm401, %v840, 0
        %v866 = vsel %vm401, %v841, 0
        %v869 = vsel %vm426, %v843, 0
        %871 = vmatpush.bf16.msra.mxu0 0
        %872 = vmatpush.bf16.msra.mxu0 0
        %873 = vmatpush.bf16.msra.mxu0 0
        %874 = vmatpush.bf16.msra.mxu0 0
        %875 = vmatpush.bf16.msra.mxu0 0
        %876 = vmatpush.bf16.msra.mxu0 0
        %877 = vmatpush.bf16.msra.mxu0 0
        %878 = vmatpush.bf16.msra.mxu0 %v869
        %879 = vmatmul.bf16.gmra.mxu0 %v845
        %v880 = vpop.f32.mrf.mxu0
        %v881 = vadd.f32 0.0, %v880
        %v882 = vpop.f32.mrf.mxu0
        %v883 = vadd.f32 0.0, %v882
        %884 = vmatmul.bf16.gmra.mxu0 %v848
        %v885 = vpop.f32.mrf.mxu0
        %v886 = vadd.f32 0.0, %v885
        %v887 = vpop.f32.mrf.mxu0
        %v888 = vadd.f32 0.0, %v887
        %889 = vmatmul.bf16.gmra.mxu0 %v851
        %v890 = vpop.f32.mrf.mxu0
        %v891 = vadd.f32 0.0, %v890
        %v892 = vpop.f32.mrf.mxu0
        %v893 = vadd.f32 0.0, %v892
        %894 = vmatmul.bf16.gmra.mxu0 %v854
        %v895 = vpop.f32.mrf.mxu0
        %v896 = vadd.f32 0.0, %v895
        %v897 = vpop.f32.mrf.mxu0
        %v898 = vadd.f32 0.0, %v897
        %899 = vmatmul.bf16.gmra.mxu0 %v857
        %v900 = vpop.f32.mrf.mxu0
        %v901 = vadd.f32 0.0, %v900
        %v902 = vpop.f32.mrf.mxu0
        %v903 = vadd.f32 0.0, %v902
        %904 = vmatmul.bf16.gmra.mxu0 %v860
        %v905 = vpop.f32.mrf.mxu0
        %v906 = vadd.f32 0.0, %v905
        %v907 = vpop.f32.mrf.mxu0
        %v908 = vadd.f32 0.0, %v907
        %909 = vmatmul.bf16.gmra.mxu0 %v863
        %v910 = vpop.f32.mrf.mxu0
        %v911 = vadd.f32 0.0, %v910
        %v912 = vpop.f32.mrf.mxu0
        %v913 = vadd.f32 0.0, %v912
        %914 = vmatmul.bf16.gmra.mxu0 %v866
        %v915 = vpop.f32.mrf.mxu0
        %v916 = vadd.f32 0.0, %v915
        %v917 = vpop.f32.mrf.mxu0
        %v918 = vadd.f32 0.0, %v917
        %919 = vdwg.mxu0
        %v920 = vadd.f32 %v738, %v881
        %v921 = vadd.f32 %v740, %v883
        %v922 = vadd.f32 %v743, %v886
        %v923 = vadd.f32 %v745, %v888
        %v924 = vadd.f32 %v748, %v891
        %v925 = vadd.f32 %v750, %v893
        %v926 = vadd.f32 %v753, %v896
        %v927 = vadd.f32 %v755, %v898
        %v928 = vadd.f32 %v758, %v901
        %v929 = vadd.f32 %v760, %v903
        %v930 = vadd.f32 %v763, %v906
        %v931 = vadd.f32 %v765, %v908
        %v932 = vadd.f32 %v768, %v911
        %v933 = vadd.f32 %v770, %v913
        %v934 = vadd.f32 %v773, %v916
        %v935 = vadd.f32 %v775, %v918
        %v936 = vrot.slane %v300, 1
        %v937 = vrot.slane %v301, 1
        %v938 = vsel %vm569, %v936, %v937
        %v939 = vrot.slane %v302, 1
        %v940 = vsel %vm569, %v937, %v939
        %v943 = vpack.c.bf16 %v940, %v938
        %s944 = scalar_lea.vmem %s1, 8
        %v945 = vld [vmem:[%s944] sm:$0x3]
        %v947 = vsel %vm401, %v943, 0
        %v950 = vsel %vm426, %v945, 0
        %952 = vmatpush.bf16.msra.mxu0 0
        %953 = vmatpush.bf16.msra.mxu0 0
        %954 = vmatpush.bf16.msra.mxu0 0
        %955 = vmatpush.bf16.msra.mxu0 0
        %956 = vmatpush.bf16.msra.mxu0 0
        %957 = vmatpush.bf16.msra.mxu0 0
        %958 = vmatpush.bf16.msra.mxu0 0
        %959 = vmatpush.bf16.msra.mxu0 %v950
        %960 = vmatmul.bf16.gmra.mxu0 %v705
        %v961 = vpop.f32.mrf.mxu0
        %v962 = vadd.f32 0.0, %v961
        %v963 = vpop.f32.mrf.mxu0
        %v964 = vadd.f32 0.0, %v963
        %965 = vmatmul.bf16.gmra.mxu0 %v708
        %v966 = vpop.f32.mrf.mxu0
        %v967 = vadd.f32 0.0, %v966
        %v968 = vpop.f32.mrf.mxu0
        %v969 = vadd.f32 0.0, %v968
        %970 = vmatmul.bf16.gmra.mxu0 %v711
        %v971 = vpop.f32.mrf.mxu0
        %v972 = vadd.f32 0.0, %v971
        %v973 = vpop.f32.mrf.mxu0
        %v974 = vadd.f32 0.0, %v973
        %975 = vmatmul.bf16.gmra.mxu0 %v714
        %v976 = vpop.f32.mrf.mxu0
        %v977 = vadd.f32 0.0, %v976
        %v978 = vpop.f32.mrf.mxu0
        %v979 = vadd.f32 0.0, %v978
        %980 = vmatmul.bf16.gmra.mxu0 %v717
        %v981 = vpop.f32.mrf.mxu0
        %v982 = vadd.f32 0.0, %v981
        %v983 = vpop.f32.mrf.mxu0
        %v984 = vadd.f32 0.0, %v983
        %985 = vmatmul.bf16.gmra.mxu0 %v720
        %v986 = vpop.f32.mrf.mxu0
        %v987 = vadd.f32 0.0, %v986
        %v988 = vpop.f32.mrf.mxu0
        %v989 = vadd.f32 0.0, %v988
        %990 = vmatmul.bf16.gmra.mxu0 %v723
        %v991 = vpop.f32.mrf.mxu0
        %v992 = vadd.f32 0.0, %v991
        %v993 = vpop.f32.mrf.mxu0
        %v994 = vadd.f32 0.0, %v993
        %995 = vmatmul.bf16.gmra.mxu0 %v947
        %v996 = vpop.f32.mrf.mxu0
        %v997 = vadd.f32 0.0, %v996
        %v998 = vpop.f32.mrf.mxu0
        %v999 = vadd.f32 0.0, %v998
        %1000 = vdwg.mxu0
        %v1001 = vadd.f32 %v920, %v962
        %v1002 = vadd.f32 %v921, %v964
        %v1003 = vadd.f32 %v922, %v967
        %v1004 = vadd.f32 %v923, %v969
        %v1005 = vadd.f32 %v924, %v972
        %v1006 = vadd.f32 %v925, %v974
        %v1007 = vadd.f32 %v926, %v977
        %v1008 = vadd.f32 %v927, %v979
        %v1009 = vadd.f32 %v928, %v982
        %v1010 = vadd.f32 %v929, %v984
        %v1011 = vadd.f32 %v930, %v987
        %v1012 = vadd.f32 %v931, %v989
        %v1013 = vadd.f32 %v932, %v992
        %v1014 = vadd.f32 %v933, %v994
        %v1015 = vadd.f32 %v934, %v997
        %v1016 = vadd.f32 %v935, %v999
        %s1017 = scalar_lea.vmem %s1, 10
        %v1018 = vld [vmem:[%s1017] sm:$0x3]
        %v1020 = vsel %vm426, %v1018, 0
        %1022 = vmatpush.bf16.msra.mxu0 0
        %1023 = vmatpush.bf16.msra.mxu0 0
        %1024 = vmatpush.bf16.msra.mxu0 0
        %1025 = vmatpush.bf16.msra.mxu0 0
        %1026 = vmatpush.bf16.msra.mxu0 0
        %1027 = vmatpush.bf16.msra.mxu0 0
        %1028 = vmatpush.bf16.msra.mxu0 0
        %1029 = vmatpush.bf16.msra.mxu0 %v1020
        %1030 = vmatmul.bf16.gmra.mxu0 %v403
        %v1031 = vpop.f32.mrf.mxu0
        %v1032 = vadd.f32 0.0, %v1031
        %v1033 = vpop.f32.mrf.mxu0
        %v1034 = vadd.f32 0.0, %v1033
        %1035 = vmatmul.bf16.gmra.mxu0 %v406
        %v1036 = vpop.f32.mrf.mxu0
        %v1037 = vadd.f32 0.0, %v1036
        %v1038 = vpop.f32.mrf.mxu0
        %v1039 = vadd.f32 0.0, %v1038
        %1040 = vmatmul.bf16.gmra.mxu0 %v409
        %v1041 = vpop.f32.mrf.mxu0
        %v1042 = vadd.f32 0.0, %v1041
        %v1043 = vpop.f32.mrf.mxu0
        %v1044 = vadd.f32 0.0, %v1043
        %1045 = vmatmul.bf16.gmra.mxu0 %v412
        %v1046 = vpop.f32.mrf.mxu0
        %v1047 = vadd.f32 0.0, %v1046
        %v1048 = vpop.f32.mrf.mxu0
        %v1049 = vadd.f32 0.0, %v1048
        %1050 = vmatmul.bf16.gmra.mxu0 %v415
        %v1051 = vpop.f32.mrf.mxu0
        %v1052 = vadd.f32 0.0, %v1051
        %v1053 = vpop.f32.mrf.mxu0
        %v1054 = vadd.f32 0.0, %v1053
        %1055 = vmatmul.bf16.gmra.mxu0 %v418
        %v1056 = vpop.f32.mrf.mxu0
        %v1057 = vadd.f32 0.0, %v1056
        %v1058 = vpop.f32.mrf.mxu0
        %v1059 = vadd.f32 0.0, %v1058
        %1060 = vmatmul.bf16.gmra.mxu0 %v421
        %v1061 = vpop.f32.mrf.mxu0
        %v1062 = vadd.f32 0.0, %v1061
        %v1063 = vpop.f32.mrf.mxu0
        %v1064 = vadd.f32 0.0, %v1063
        %1065 = vmatmul.bf16.gmra.mxu0 %v424
        %v1066 = vpop.f32.mrf.mxu0
        %v1067 = vadd.f32 0.0, %v1066
        %v1068 = vpop.f32.mrf.mxu0
        %v1069 = vadd.f32 0.0, %v1068
        %1070 = vdwg.mxu0
        %v1071 = vadd.f32 %v1001, %v1032
        %v1072 = vadd.f32 %v1002, %v1034
        %v1073 = vadd.f32 %v1003, %v1037
        %v1074 = vadd.f32 %v1004, %v1039
        %v1075 = vadd.f32 %v1005, %v1042
        %v1076 = vadd.f32 %v1006, %v1044
        %v1077 = vadd.f32 %v1007, %v1047
        %v1078 = vadd.f32 %v1008, %v1049
        %v1079 = vadd.f32 %v1009, %v1052
        %v1080 = vadd.f32 %v1010, %v1054
        %v1081 = vadd.f32 %v1011, %v1057
        %v1082 = vadd.f32 %v1012, %v1059
        %v1083 = vadd.f32 %v1013, %v1062
        %v1084 = vadd.f32 %v1014, %v1064
        %v1085 = vadd.f32 %v1015, %v1067
        %v1086 = vadd.f32 %v1016, %v1069
        %v1087 = vrot.slane %v300, 3
        %v1088 = vrot.slane %v301, 3
        %v1089 = vsel %vm777, %v1087, %v1088
        %v1090 = vrot.slane %v302, 3
        %v1091 = vsel %vm777, %v1088, %v1090
        %v1094 = vpack.c.bf16 %v1091, %v1089
        %s1095 = scalar_lea.vmem %s1, 12
        %v1096 = vld [vmem:[%s1095] sm:$0x3]
        %v1098 = vsel %vm401, %v1094, 0
        %v1101 = vsel %vm426, %v1096, 0
        %1103 = vmatpush.bf16.msra.mxu0 0
        %1104 = vmatpush.bf16.msra.mxu0 0
        %1105 = vmatpush.bf16.msra.mxu0 0
        %1106 = vmatpush.bf16.msra.mxu0 0
        %1107 = vmatpush.bf16.msra.mxu0 0
        %1108 = vmatpush.bf16.msra.mxu0 0
        %1109 = vmatpush.bf16.msra.mxu0 0
        %1110 = vmatpush.bf16.msra.mxu0 %v1101
        %1111 = vmatmul.bf16.gmra.mxu0 %v848
        %v1112 = vpop.f32.mrf.mxu0
        %v1113 = vadd.f32 0.0, %v1112
        %v1114 = vpop.f32.mrf.mxu0
        %v1115 = vadd.f32 0.0, %v1114
        %1116 = vmatmul.bf16.gmra.mxu0 %v851
        %v1117 = vpop.f32.mrf.mxu0
        %v1118 = vadd.f32 0.0, %v1117
        %v1119 = vpop.f32.mrf.mxu0
        %v1120 = vadd.f32 0.0, %v1119
        %1121 = vmatmul.bf16.gmra.mxu0 %v854
        %v1122 = vpop.f32.mrf.mxu0
        %v1123 = vadd.f32 0.0, %v1122
        %v1124 = vpop.f32.mrf.mxu0
        %v1125 = vadd.f32 0.0, %v1124
        %1126 = vmatmul.bf16.gmra.mxu0 %v857
        %v1127 = vpop.f32.mrf.mxu0
        %v1128 = vadd.f32 0.0, %v1127
        %v1129 = vpop.f32.mrf.mxu0
        %v1130 = vadd.f32 0.0, %v1129
        %1131 = vmatmul.bf16.gmra.mxu0 %v860
        %v1132 = vpop.f32.mrf.mxu0
        %v1133 = vadd.f32 0.0, %v1132
        %v1134 = vpop.f32.mrf.mxu0
        %v1135 = vadd.f32 0.0, %v1134
        %1136 = vmatmul.bf16.gmra.mxu0 %v863
        %v1137 = vpop.f32.mrf.mxu0
        %v1138 = vadd.f32 0.0, %v1137
        %v1139 = vpop.f32.mrf.mxu0
        %v1140 = vadd.f32 0.0, %v1139
        %1141 = vmatmul.bf16.gmra.mxu0 %v866
        %v1142 = vpop.f32.mrf.mxu0
        %v1143 = vadd.f32 0.0, %v1142
        %v1144 = vpop.f32.mrf.mxu0
        %v1145 = vadd.f32 0.0, %v1144
        %1146 = vmatmul.bf16.gmra.mxu0 %v1098
        %v1147 = vpop.f32.mrf.mxu0
        %v1148 = vadd.f32 0.0, %v1147
        %v1149 = vpop.f32.mrf.mxu0
        %v1150 = vadd.f32 0.0, %v1149
        %1151 = vdwg.mxu0
        %v1152 = vadd.f32 %v1071, %v1113
        %v1153 = vadd.f32 %v1072, %v1115
        %v1154 = vadd.f32 %v1073, %v1118
        %v1155 = vadd.f32 %v1074, %v1120
        %v1156 = vadd.f32 %v1075, %v1123
        %v1157 = vadd.f32 %v1076, %v1125
        %v1158 = vadd.f32 %v1077, %v1128
        %v1159 = vadd.f32 %v1078, %v1130
        %v1160 = vadd.f32 %v1079, %v1133
        %v1161 = vadd.f32 %v1080, %v1135
        %v1162 = vadd.f32 %v1081, %v1138
        %v1163 = vadd.f32 %v1082, %v1140
        %v1164 = vadd.f32 %v1083, %v1143
        %v1165 = vadd.f32 %v1084, %v1145
        %v1166 = vadd.f32 %v1085, %v1148
        %v1167 = vadd.f32 %v1086, %v1150
        %v1171 = vrot.slane %v303, 1
        %v1172 = vrot.slane %v304, 1
        %v1173 = vsel %vm569, %v1171, %v1172
        %v1174 = vrot.slane %v305, 1
        %v1175 = vsel %vm569, %v1172, %v1174
        %v1178 = vpack.c.bf16 %v1175, %v1173
        %s1179 = scalar_lea.vmem %s1, 14
        %v1180 = vld [vmem:[%s1179] sm:$0x3]
        %v1182 = vsel %vm401, %v1178, 0
        %v1185 = vsel %vm426, %v1180, 0
        %1187 = vmatpush.bf16.msra.mxu0 0
        %1188 = vmatpush.bf16.msra.mxu0 0
        %1189 = vmatpush.bf16.msra.mxu0 0
        %1190 = vmatpush.bf16.msra.mxu0 0
        %1191 = vmatpush.bf16.msra.mxu0 0
        %1192 = vmatpush.bf16.msra.mxu0 0
        %1193 = vmatpush.bf16.msra.mxu0 0
        %1194 = vmatpush.bf16.msra.mxu0 %v1185
        %1195 = vmatmul.bf16.gmra.mxu0 %v708
        %v1196 = vpop.f32.mrf.mxu0
        %v1197 = vadd.f32 0.0, %v1196
        %v1198 = vpop.f32.mrf.mxu0
        %v1199 = vadd.f32 0.0, %v1198
        %1200 = vmatmul.bf16.gmra.mxu0 %v711
        %v1201 = vpop.f32.mrf.mxu0
        %v1202 = vadd.f32 0.0, %v1201
        %v1203 = vpop.f32.mrf.mxu0
        %v1204 = vadd.f32 0.0, %v1203
        %1205 = vmatmul.bf16.gmra.mxu0 %v714
        %v1206 = vpop.f32.mrf.mxu0
        %v1207 = vadd.f32 0.0, %v1206
        %v1208 = vpop.f32.mrf.mxu0
        %v1209 = vadd.f32 0.0, %v1208
        %1210 = vmatmul.bf16.gmra.mxu0 %v717
        %v1211 = vpop.f32.mrf.mxu0
        %v1212 = vadd.f32 0.0, %v1211
        %v1213 = vpop.f32.mrf.mxu0
        %v1214 = vadd.f32 0.0, %v1213
        %1215 = vmatmul.bf16.gmra.mxu0 %v720
        %v1216 = vpop.f32.mrf.mxu0
        %v1217 = vadd.f32 0.0, %v1216
        %v1218 = vpop.f32.mrf.mxu0
        %v1219 = vadd.f32 0.0, %v1218
        %1220 = vmatmul.bf16.gmra.mxu0 %v723
        %v1221 = vpop.f32.mrf.mxu0
        %v1222 = vadd.f32 0.0, %v1221
        %v1223 = vpop.f32.mrf.mxu0
        %v1224 = vadd.f32 0.0, %v1223
        %1225 = vmatmul.bf16.gmra.mxu0 %v947
        %v1226 = vpop.f32.mrf.mxu0
        %v1227 = vadd.f32 0.0, %v1226
        %v1228 = vpop.f32.mrf.mxu0
        %v1229 = vadd.f32 0.0, %v1228
        %1230 = vmatmul.bf16.gmra.mxu0 %v1182
        %v1231 = vpop.f32.mrf.mxu0
        %v1232 = vadd.f32 0.0, %v1231
        %v1233 = vpop.f32.mrf.mxu0
        %v1234 = vadd.f32 0.0, %v1233
        %1235 = vdwg.mxu0
        %v1236 = vadd.f32 %v1152, %v1197
        %v1237 = vadd.f32 %v1153, %v1199
        %v1238 = vadd.f32 %v1154, %v1202
        %v1239 = vadd.f32 %v1155, %v1204
        %v1240 = vadd.f32 %v1156, %v1207
        %v1241 = vadd.f32 %v1157, %v1209
        %v1242 = vadd.f32 %v1158, %v1212
        %v1243 = vadd.f32 %v1159, %v1214
        %v1244 = vadd.f32 %v1160, %v1217
        %v1245 = vadd.f32 %v1161, %v1219
        %v1246 = vadd.f32 %v1162, %v1222
        %v1247 = vadd.f32 %v1163, %v1224
        %v1248 = vadd.f32 %v1164, %v1227
        %v1249 = vadd.f32 %v1165, %v1229
        %v1250 = vadd.f32 %v1166, %v1232
        %v1251 = vadd.f32 %v1167, %v1234
        %v1252 = vrot.slane %v303, 2
        %v1253 = vrot.slane %v304, 2
        %v1254 = vsel %vm334, %v1252, %v1253
        %v1255 = vrot.slane %v305, 2
        %v1256 = vsel %vm334, %v1253, %v1255
        %v1259 = vpack.c.bf16 %v1256, %v1254
        %s1260 = scalar_lea.vmem %s1, 16
        %v1261 = vld [vmem:[%s1260] sm:$0x3]
        %v1263 = vsel %vm401, %v1259, 0
        %v1266 = vsel %vm426, %v1261, 0
        %1268 = vmatpush.bf16.msra.mxu0 0
        %1269 = vmatpush.bf16.msra.mxu0 0
        %1270 = vmatpush.bf16.msra.mxu0 0
        %1271 = vmatpush.bf16.msra.mxu0 0
        %1272 = vmatpush.bf16.msra.mxu0 0
        %1273 = vmatpush.bf16.msra.mxu0 0
        %1274 = vmatpush.bf16.msra.mxu0 0
        %1275 = vmatpush.bf16.msra.mxu0 %v1266
        %1276 = vmatmul.bf16.gmra.mxu0 %v406
        %v1277 = vpop.f32.mrf.mxu0
        %v1278 = vadd.f32 0.0, %v1277
        %v1279 = vpop.f32.mrf.mxu0
        %v1280 = vadd.f32 0.0, %v1279
        %1281 = vmatmul.bf16.gmra.mxu0 %v409
        %v1282 = vpop.f32.mrf.mxu0
        %v1283 = vadd.f32 0.0, %v1282
        %v1284 = vpop.f32.mrf.mxu0
        %v1285 = vadd.f32 0.0, %v1284
        %1286 = vmatmul.bf16.gmra.mxu0 %v412
        %v1287 = vpop.f32.mrf.mxu0
        %v1288 = vadd.f32 0.0, %v1287
        %v1289 = vpop.f32.mrf.mxu0
        %v1290 = vadd.f32 0.0, %v1289
        %1291 = vmatmul.bf16.gmra.mxu0 %v415
        %v1292 = vpop.f32.mrf.mxu0
        %v1293 = vadd.f32 0.0, %v1292
        %v1294 = vpop.f32.mrf.mxu0
        %v1295 = vadd.f32 0.0, %v1294
        %1296 = vmatmul.bf16.gmra.mxu0 %v418
        %v1297 = vpop.f32.mrf.mxu0
        %v1298 = vadd.f32 0.0, %v1297
        %v1299 = vpop.f32.mrf.mxu0
        %v1300 = vadd.f32 0.0, %v1299
        %1301 = vmatmul.bf16.gmra.mxu0 %v421
        %v1302 = vpop.f32.mrf.mxu0
        %v1303 = vadd.f32 0.0, %v1302
        %v1304 = vpop.f32.mrf.mxu0
        %v1305 = vadd.f32 0.0, %v1304
        %1306 = vmatmul.bf16.gmra.mxu0 %v424
        %v1307 = vpop.f32.mrf.mxu0
        %v1308 = vadd.f32 0.0, %v1307
        %v1309 = vpop.f32.mrf.mxu0
        %v1310 = vadd.f32 0.0, %v1309
        %1311 = vmatmul.bf16.gmra.mxu0 %v1263
        %v1312 = vpop.f32.mrf.mxu0
        %v1313 = vadd.f32 0.0, %v1312
        %v1314 = vpop.f32.mrf.mxu0
        %v1315 = vadd.f32 0.0, %v1314
        %1316 = vdwg.mxu0
        %v1317 = vadd.f32 %v1236, %v1278
        %v1318 = vadd.f32 %v1237, %v1280
        %v1319 = vadd.f32 %v1238, %v1283
        %v1320 = vadd.f32 %v1239, %v1285
        %v1321 = vadd.f32 %v1240, %v1288
        %v1322 = vadd.f32 %v1241, %v1290
        %v1323 = vadd.f32 %v1242, %v1293
        %v1324 = vadd.f32 %v1243, %v1295
        %v1325 = vadd.f32 %v1244, %v1298
        %v1326 = vadd.f32 %v1245, %v1300
        %v1327 = vadd.f32 %v1246, %v1303
        %v1328 = vadd.f32 %v1247, %v1305
        %v1329 = vadd.f32 %v1248, %v1308
        %v1330 = vadd.f32 %v1249, %v1310
        %v1331 = vadd.f32 %v1250, %v1313
        %v1332 = vadd.f32 %v1251, %v1315
        %v1333 = vrot.slane %v303, 3
        %v1334 = vrot.slane %v304, 3
        %v1335 = vsel %vm777, %v1333, %v1334
        %v1336 = vrot.slane %v305, 3
        %v1337 = vsel %vm777, %v1334, %v1336
        %v1340 = vpack.c.bf16 %v1337, %v1335
        %s1341 = scalar_lea.vmem %s1, 18
        %v1342 = vld [vmem:[%s1341] sm:$0x3]
        %v1344 = vsel %vm401, %v1340, 0
        %v1347 = vsel %vm426, %v1342, 0
        %1349 = vmatpush.bf16.msra.mxu0 0
        %1350 = vmatpush.bf16.msra.mxu0 0
        %1351 = vmatpush.bf16.msra.mxu0 0
        %1352 = vmatpush.bf16.msra.mxu0 0
        %1353 = vmatpush.bf16.msra.mxu0 0
        %1354 = vmatpush.bf16.msra.mxu0 0
        %1355 = vmatpush.bf16.msra.mxu0 0
        %1356 = vmatpush.bf16.msra.mxu0 %v1347
        %1357 = vmatmul.bf16.gmra.mxu0 %v851
        %v1358 = vpop.f32.mrf.mxu0
        %v1359 = vadd.f32 0.0, %v1358
        %v1360 = vpop.f32.mrf.mxu0
        %v1361 = vadd.f32 0.0, %v1360
        %1362 = vmatmul.bf16.gmra.mxu0 %v854
        %v1363 = vpop.f32.mrf.mxu0
        %v1364 = vadd.f32 0.0, %v1363
        %v1365 = vpop.f32.mrf.mxu0
        %v1366 = vadd.f32 0.0, %v1365
        %1367 = vmatmul.bf16.gmra.mxu0 %v857
        %v1368 = vpop.f32.mrf.mxu0
        %v1369 = vadd.f32 0.0, %v1368
        %v1370 = vpop.f32.mrf.mxu0
        %v1371 = vadd.f32 0.0, %v1370
        %1372 = vmatmul.bf16.gmra.mxu0 %v860
        %v1373 = vpop.f32.mrf.mxu0
        %v1374 = vadd.f32 0.0, %v1373
        %v1375 = vpop.f32.mrf.mxu0
        %v1376 = vadd.f32 0.0, %v1375
        %1377 = vmatmul.bf16.gmra.mxu0 %v863
        %v1378 = vpop.f32.mrf.mxu0
        %v1379 = vadd.f32 0.0, %v1378
        %v1380 = vpop.f32.mrf.mxu0
        %v1381 = vadd.f32 0.0, %v1380
        %1382 = vmatmul.bf16.gmra.mxu0 %v866
        %v1383 = vpop.f32.mrf.mxu0
        %v1384 = vadd.f32 0.0, %v1383
        %v1385 = vpop.f32.mrf.mxu0
        %v1386 = vadd.f32 0.0, %v1385
        %1387 = vmatmul.bf16.gmra.mxu0 %v1098
        %v1388 = vpop.f32.mrf.mxu0
        %v1389 = vadd.f32 0.0, %v1388
        %v1390 = vpop.f32.mrf.mxu0
        %v1391 = vadd.f32 0.0, %v1390
        %1392 = vmatmul.bf16.gmra.mxu0 %v1344
        %v1393 = vpop.f32.mrf.mxu0
        %v1394 = vadd.f32 0.0, %v1393
        %v1395 = vpop.f32.mrf.mxu0
        %v1396 = vadd.f32 0.0, %v1395
        %1397 = vdwg.mxu0
        %v1398 = vadd.f32 %v1317, %v1359
        %v1399 = vadd.f32 %v1318, %v1361
        %v1400 = vadd.f32 %v1319, %v1364
        %v1401 = vadd.f32 %v1320, %v1366
        %v1402 = vadd.f32 %v1321, %v1369
        %v1403 = vadd.f32 %v1322, %v1371
        %v1404 = vadd.f32 %v1323, %v1374
        %v1405 = vadd.f32 %v1324, %v1376
        %v1406 = vadd.f32 %v1325, %v1379
        %v1407 = vadd.f32 %v1326, %v1381
        %v1408 = vadd.f32 %v1327, %v1384
        %v1409 = vadd.f32 %v1328, %v1386
        %v1410 = vadd.f32 %v1329, %v1389
        %v1411 = vadd.f32 %v1330, %v1391
        %v1412 = vadd.f32 %v1331, %v1394
        %v1413 = vadd.f32 %v1332, %v1396
        %v1414 = vperm.slane %v309, 1
        %v1415 = vadd.f32 %v1398, %v1414
        %v1416 = vadd.f32 %v1399, %v1414
        %v1417 = vadd.f32 %v1400, %v1414
        %v1418 = vadd.f32 %v1401, %v1414
        %v1419 = vadd.f32 %v1402, %v1414
        %v1420 = vadd.f32 %v1403, %v1414
        %v1421 = vadd.f32 %v1404, %v1414
        %v1422 = vadd.f32 %v1405, %v1414
        %v1423 = vadd.f32 %v1406, %v1414
        %v1424 = vadd.f32 %v1407, %v1414
        %v1425 = vadd.f32 %v1408, %v1414
        %v1426 = vadd.f32 %v1409, %v1414
        %v1427 = vadd.f32 %v1410, %v1414
        %v1428 = vadd.f32 %v1411, %v1414
        %v1429 = vadd.f32 %v1412, %v1414
        %v1430 = vadd.f32 %v1413, %v1414
        %v1431 = vmax.f32 %v1415, 0.0
        %v1432 = vmax.f32 %v1416, 0.0
        %v1433 = vmax.f32 %v1417, 0.0
        %v1434 = vmax.f32 %v1418, 0.0
        %v1435 = vmax.f32 %v1419, 0.0
        %v1436 = vmax.f32 %v1420, 0.0
        %v1437 = vmax.f32 %v1421, 0.0
        %v1438 = vmax.f32 %v1422, 0.0
        %v1439 = vmax.f32 %v1423, 0.0
        %v1440 = vmax.f32 %v1424, 0.0
        %v1441 = vmax.f32 %v1425, 0.0
        %v1442 = vmax.f32 %v1426, 0.0
        %v1443 = vmax.f32 %v1427, 0.0
        %v1444 = vmax.f32 %v1428, 0.0
        %v1445 = vmax.f32 %v1429, 0.0
        %v1446 = vmax.f32 %v1430, 0.0
        %v1447 = vpack.c.bf16 %v1431, %v1431
        %v1448 = vpack.c.bf16 %v1432, %v1432
        %v1449 = vpack.c.bf16 %v1433, %v1433
        %v1450 = vpack.c.bf16 %v1434, %v1434
        %v1451 = vpack.c.bf16 %v1435, %v1435
        %v1452 = vpack.c.bf16 %v1436, %v1436
        %v1453 = vpack.c.bf16 %v1437, %v1437
        %v1454 = vpack.c.bf16 %v1438, %v1438
        %v1455 = vpack.c.bf16 %v1439, %v1439
        %v1456 = vpack.c.bf16 %v1440, %v1440
        %v1457 = vpack.c.bf16 %v1441, %v1441
        %v1458 = vpack.c.bf16 %v1442, %v1442
        %v1459 = vpack.c.bf16 %v1443, %v1443
        %v1460 = vpack.c.bf16 %v1444, %v1444
        %v1461 = vpack.c.bf16 %v1445, %v1445
        %v1462 = vpack.c.bf16 %v1446, %v1446
        %s1463 = scalar_lea.vmem %s211, 64 [#allocation2]
        %1464 = vst.msk [vmem:[%s1463] sm:$0xf] %vm511, %v1447
        %1465 = vst.msk [vmem:[%s1463 + $0x4] sm:$0xf] %vm511, %v1448
        %1466 = vst.msk [vmem:[%s1463 + $0x8] sm:$0xf] %vm511, %v1449
        %1467 = vst.msk [vmem:[%s1463 + $0xc] sm:$0xf] %vm511, %v1450
        %1468 = vst.msk [vmem:[%s1463 + $0x10] sm:$0xf] %vm511, %v1451
        %1469 = vst.msk [vmem:[%s1463 + $0x14] sm:$0xf] %vm511, %v1452
        %1470 = vst.msk [vmem:[%s1463 + $0x18] sm:$0xf] %vm511, %v1453
        %1471 = vst.msk [vmem:[%s1463 + $0x1c] sm:$0xf] %vm511, %v1454
        %1472 = vst.msk [vmem:[%s1463 + $0x20] sm:$0xf] %vm511, %v1455
        %1473 = vst.msk [vmem:[%s1463 + $0x24] sm:$0xf] %vm511, %v1456
        %1474 = vst.msk [vmem:[%s1463 + $0x28] sm:$0xf] %vm511, %v1457
        %1475 = vst.msk [vmem:[%s1463 + $0x2c] sm:$0xf] %vm511, %v1458
        %1476 = vst.msk [vmem:[%s1463 + $0x30] sm:$0xf] %vm511, %v1459
        %1477 = vst.msk [vmem:[%s1463 + $0x34] sm:$0xf] %vm511, %v1460
        %1478 = vst.msk [vmem:[%s1463 + $0x38] sm:$0xf] %vm511, %v1461
        %1479 = vst.msk [vmem:[%s1463 + $0x3c] sm:$0xf] %vm511, %v1462
        %v1480 = vsel %vm401, %v1431, 0.0
        %v1481 = vsel %vm401, %v1432, 0.0
        %v1482 = vadd.f32 %v1480, %v1481
        %v1483 = vsel %vm401, %v1433, 0.0
        %v1484 = vadd.f32 %v1482, %v1483
        %v1485 = vsel %vm401, %v1434, 0.0
        %v1486 = vadd.f32 %v1484, %v1485
        %v1487 = vsel %vm401, %v1435, 0.0
        %v1488 = vadd.f32 %v1486, %v1487
        %v1489 = vsel %vm401, %v1436, 0.0
        %v1490 = vadd.f32 %v1488, %v1489
        %v1491 = vsel %vm401, %v1437, 0.0
        %v1492 = vadd.f32 %v1490, %v1491
        %v1493 = vsel %vm401, %v1438, 0.0
        %v1494 = vadd.f32 %v1492, %v1493
        %v1495 = vsel %vm401, %v1439, 0.0
        %v1496 = vadd.f32 %v1494, %v1495
        %v1497 = vsel %vm401, %v1440, 0.0
        %v1498 = vadd.f32 %v1496, %v1497
        %v1499 = vsel %vm401, %v1441, 0.0
        %v1500 = vadd.f32 %v1498, %v1499
        %v1501 = vsel %vm401, %v1442, 0.0
        %v1502 = vadd.f32 %v1500, %v1501
        %v1503 = vsel %vm401, %v1443, 0.0
        %v1504 = vadd.f32 %v1502, %v1503
        %v1505 = vsel %vm401, %v1444, 0.0
        %v1506 = vadd.f32 %v1504, %v1505
        %v1507 = vsel %vm401, %v1445, 0.0
        %v1508 = vadd.f32 %v1506, %v1507
        %v1509 = vsel %vm401, %v1446, 0.0
        %v1510 = vadd.f32 %v1508, %v1509
        %v1511 = vrot.slane %v1510, 4
        %v1512 = vadd.f32 %v1510, %v1511
        %v1513 = vrot.slane %v1512, 2
        %v1514 = vadd.f32 %v1512, %v1513
        %v1515 = vrot.slane %v1514, 1
        %v1516 = vadd.f32 %v1514, %v1515
        %v1517 = vadd.f32 %v565, %v1516
        %v1518 = vpack.c.bf16 %v274, %v273
        %v1519 = vpack.c.bf16 %v277, %v276
        %v1520 = vpack.c.bf16 %v280, %v279
        %v1521 = vpack.c.bf16 %v283, %v282
        %v1522 = vpack.c.bf16 %v286, %v285
        %v1523 = vpack.c.bf16 %v289, %v288
        %v1524 = vpack.c.bf16 %v292, %v291
        %v1525 = vpack.c.bf16 %v295, %v294
        %s1526 = scalar_lea.vmem %s1, 20
        %v1527 = vld [vmem:[%s1526] sm:$0x3]
        %v1531 = vrot.slane %v273, 1
        %v1532 = vrot.slane %v274, 1
        %v1533 = vsel %vm569, %v1531, %v1532
        %v1534 = vrot.slane %v275, 1
        %v1535 = vsel %vm569, %v1532, %v1534
        %v1538 = vpack.c.bf16 %v1535, %v1533
        %s1539 = scalar_lea.vmem %s1, 22
        %v1540 = vld [vmem:[%s1539] sm:$0x3]
        %v1542 = vsel %vm401, %v1538, 0
        %v1545 = vsel %vm426, %v1540, 0
        %1547 = vmatpush.bf16.msra.mxu0 0
        %1548 = vmatpush.bf16.msra.mxu0 0
        %1549 = vmatpush.bf16.msra.mxu0 0
        %1550 = vmatpush.bf16.msra.mxu0 0
        %1551 = vmatpush.bf16.msra.mxu0 0
        %1552 = vmatpush.bf16.msra.mxu0 0
        %1553 = vmatpush.bf16.msra.mxu0 0
        %1554 = vmatpush.bf16.msra.mxu0 %v1545
        %1555 = vmatmul.bf16.gmra.mxu0 %v1542
        %v1556 = vpop.f32.mrf.mxu0
        %v1557 = vadd.f32 0.0, %v1556
        %v1558 = vpop.f32.mrf.mxu0
        %v1559 = vadd.f32 0.0, %v1558
        %1560 = vmatmul.bf16.gmra.mxu0 %v702
        %v1561 = vpop.f32.mrf.mxu0
        %v1562 = vadd.f32 0.0, %v1561
        %v1563 = vpop.f32.mrf.mxu0
        %v1564 = vadd.f32 0.0, %v1563
        %1565 = vmatmul.bf16.gmra.mxu0 %v705
        %v1566 = vpop.f32.mrf.mxu0
        %v1567 = vadd.f32 0.0, %v1566
        %v1568 = vpop.f32.mrf.mxu0
        %v1569 = vadd.f32 0.0, %v1568
        %1570 = vmatmul.bf16.gmra.mxu0 %v708
        %v1571 = vpop.f32.mrf.mxu0
        %v1572 = vadd.f32 0.0, %v1571
        %v1573 = vpop.f32.mrf.mxu0
        %v1574 = vadd.f32 0.0, %v1573
        %1575 = vmatmul.bf16.gmra.mxu0 %v711
        %v1576 = vpop.f32.mrf.mxu0
        %v1577 = vadd.f32 0.0, %v1576
        %v1578 = vpop.f32.mrf.mxu0
        %v1579 = vadd.f32 0.0, %v1578
        %1580 = vmatmul.bf16.gmra.mxu0 %v714
        %v1581 = vpop.f32.mrf.mxu0
        %v1582 = vadd.f32 0.0, %v1581
        %v1583 = vpop.f32.mrf.mxu0
        %v1584 = vadd.f32 0.0, %v1583
        %1585 = vmatmul.bf16.gmra.mxu0 %v717
        %v1586 = vpop.f32.mrf.mxu0
        %v1587 = vadd.f32 0.0, %v1586
        %v1588 = vpop.f32.mrf.mxu0
        %v1589 = vadd.f32 0.0, %v1588
        %1590 = vmatmul.bf16.gmra.mxu0 %v720
        %v1591 = vpop.f32.mrf.mxu0
        %v1592 = vadd.f32 0.0, %v1591
        %v1593 = vpop.f32.mrf.mxu0
        %v1594 = vadd.f32 0.0, %v1593
        %1595 = vdwg.mxu0
        %v1597 = vsel %vm401, %v1518, 0
        %v1600 = vsel %vm401, %v1519, 0
        %v1603 = vsel %vm401, %v1520, 0
        %v1606 = vsel %vm401, %v1521, 0
        %v1609 = vsel %vm401, %v1522, 0
        %v1612 = vsel %vm401, %v1523, 0
        %v1615 = vsel %vm401, %v1524, 0
        %v1618 = vsel %vm401, %v1525, 0
        %v1621 = vsel %vm426, %v1527, 0
        %1623 = vmatpush.bf16.msra.mxu0 0
        %1624 = vmatpush.bf16.msra.mxu0 0
        %1625 = vmatpush.bf16.msra.mxu0 0
        %1626 = vmatpush.bf16.msra.mxu0 0
        %1627 = vmatpush.bf16.msra.mxu0 0
        %1628 = vmatpush.bf16.msra.mxu0 0
        %1629 = vmatpush.bf16.msra.mxu0 0
        %1630 = vmatpush.bf16.msra.mxu0 %v1621
        %1631 = vmatmul.bf16.gmra.mxu0 %v1597
        %v1632 = vpop.f32.mrf.mxu0
        %v1633 = vadd.f32 %v1557, %v1632
        %v1634 = vpop.f32.mrf.mxu0
        %v1635 = vadd.f32 %v1559, %v1634
        %1636 = vmatmul.bf16.gmra.mxu0 %v1600
        %v1637 = vpop.f32.mrf.mxu0
        %v1638 = vadd.f32 %v1562, %v1637
        %v1639 = vpop.f32.mrf.mxu0
        %v1640 = vadd.f32 %v1564, %v1639
        %1641 = vmatmul.bf16.gmra.mxu0 %v1603
        %v1642 = vpop.f32.mrf.mxu0
        %v1643 = vadd.f32 %v1567, %v1642
        %v1644 = vpop.f32.mrf.mxu0
        %v1645 = vadd.f32 %v1569, %v1644
        %1646 = vmatmul.bf16.gmra.mxu0 %v1606
        %v1647 = vpop.f32.mrf.mxu0
        %v1648 = vadd.f32 %v1572, %v1647
        %v1649 = vpop.f32.mrf.mxu0
        %v1650 = vadd.f32 %v1574, %v1649
        %1651 = vmatmul.bf16.gmra.mxu0 %v1609
        %v1652 = vpop.f32.mrf.mxu0
        %v1653 = vadd.f32 %v1577, %v1652
        %v1654 = vpop.f32.mrf.mxu0
        %v1655 = vadd.f32 %v1579, %v1654
        %1656 = vmatmul.bf16.gmra.mxu0 %v1612
        %v1657 = vpop.f32.mrf.mxu0
        %v1658 = vadd.f32 %v1582, %v1657
        %v1659 = vpop.f32.mrf.mxu0
        %v1660 = vadd.f32 %v1584, %v1659
        %1661 = vmatmul.bf16.gmra.mxu0 %v1615
        %v1662 = vpop.f32.mrf.mxu0
        %v1663 = vadd.f32 %v1587, %v1662
        %v1664 = vpop.f32.mrf.mxu0
        %v1665 = vadd.f32 %v1589, %v1664
        %1666 = vmatmul.bf16.gmra.mxu0 %v1618
        %v1667 = vpop.f32.mrf.mxu0
        %v1668 = vadd.f32 %v1592, %v1667
        %v1669 = vpop.f32.mrf.mxu0
        %v1670 = vadd.f32 %v1594, %v1669
        %1671 = vdwg.mxu0
        %v1672 = vrot.slane %v273, 2
        %v1673 = vrot.slane %v274, 2
        %v1674 = vsel %vm334, %v1672, %v1673
        %v1675 = vrot.slane %v275, 2
        %v1676 = vsel %vm334, %v1673, %v1675
        %v1679 = vpack.c.bf16 %v1676, %v1674
        %s1680 = scalar_lea.vmem %s1, 24
        %v1681 = vld [vmem:[%s1680] sm:$0x3]
        %v1683 = vsel %vm401, %v1679, 0
        %v1686 = vsel %vm426, %v1681, 0
        %1688 = vmatpush.bf16.msra.mxu0 0
        %1689 = vmatpush.bf16.msra.mxu0 0
        %1690 = vmatpush.bf16.msra.mxu0 0
        %1691 = vmatpush.bf16.msra.mxu0 0
        %1692 = vmatpush.bf16.msra.mxu0 0
        %1693 = vmatpush.bf16.msra.mxu0 0
        %1694 = vmatpush.bf16.msra.mxu0 0
        %1695 = vmatpush.bf16.msra.mxu0 %v1686
        %1696 = vmatmul.bf16.gmra.mxu0 %v1683
        %v1697 = vpop.f32.mrf.mxu0
        %v1698 = vadd.f32 0.0, %v1697
        %v1699 = vpop.f32.mrf.mxu0
        %v1700 = vadd.f32 0.0, %v1699
        %1701 = vmatmul.bf16.gmra.mxu0 %v647
        %v1702 = vpop.f32.mrf.mxu0
        %v1703 = vadd.f32 0.0, %v1702
        %v1704 = vpop.f32.mrf.mxu0
        %v1705 = vadd.f32 0.0, %v1704
        %1706 = vmatmul.bf16.gmra.mxu0 %v403
        %v1707 = vpop.f32.mrf.mxu0
        %v1708 = vadd.f32 0.0, %v1707
        %v1709 = vpop.f32.mrf.mxu0
        %v1710 = vadd.f32 0.0, %v1709
        %1711 = vmatmul.bf16.gmra.mxu0 %v406
        %v1712 = vpop.f32.mrf.mxu0
        %v1713 = vadd.f32 0.0, %v1712
        %v1714 = vpop.f32.mrf.mxu0
        %v1715 = vadd.f32 0.0, %v1714
        %1716 = vmatmul.bf16.gmra.mxu0 %v409
        %v1717 = vpop.f32.mrf.mxu0
        %v1718 = vadd.f32 0.0, %v1717
        %v1719 = vpop.f32.mrf.mxu0
        %v1720 = vadd.f32 0.0, %v1719
        %1721 = vmatmul.bf16.gmra.mxu0 %v412
        %v1722 = vpop.f32.mrf.mxu0
        %v1723 = vadd.f32 0.0, %v1722
        %v1724 = vpop.f32.mrf.mxu0
        %v1725 = vadd.f32 0.0, %v1724
        %1726 = vmatmul.bf16.gmra.mxu0 %v415
        %v1727 = vpop.f32.mrf.mxu0
        %v1728 = vadd.f32 0.0, %v1727
        %v1729 = vpop.f32.mrf.mxu0
        %v1730 = vadd.f32 0.0, %v1729
        %1731 = vmatmul.bf16.gmra.mxu0 %v418
        %v1732 = vpop.f32.mrf.mxu0
        %v1733 = vadd.f32 0.0, %v1732
        %v1734 = vpop.f32.mrf.mxu0
        %v1735 = vadd.f32 0.0, %v1734
        %1736 = vdwg.mxu0
        %v1737 = vadd.f32 %v1633, %v1698
        %v1738 = vadd.f32 %v1635, %v1700
        %v1739 = vadd.f32 %v1638, %v1703
        %v1740 = vadd.f32 %v1640, %v1705
        %v1741 = vadd.f32 %v1643, %v1708
        %v1742 = vadd.f32 %v1645, %v1710
        %v1743 = vadd.f32 %v1648, %v1713
        %v1744 = vadd.f32 %v1650, %v1715
        %v1745 = vadd.f32 %v1653, %v1718
        %v1746 = vadd.f32 %v1655, %v1720
        %v1747 = vadd.f32 %v1658, %v1723
        %v1748 = vadd.f32 %v1660, %v1725
        %v1749 = vadd.f32 %v1663, %v1728
        %v1750 = vadd.f32 %v1665, %v1730
        %v1751 = vadd.f32 %v1668, %v1733
        %v1752 = vadd.f32 %v1670, %v1735
        %v1753 = vrot.slane %v273, 3
        %v1754 = vrot.slane %v274, 3
        %v1755 = vsel %vm777, %v1753, %v1754
        %v1756 = vrot.slane %v275, 3
        %v1757 = vsel %vm777, %v1754, %v1756
        %v1760 = vpack.c.bf16 %v1757, %v1755
        %s1761 = scalar_lea.vmem %s1, 26
        %v1762 = vld [vmem:[%s1761] sm:$0x3]
        %v1764 = vsel %vm401, %v1760, 0
        %v1767 = vsel %vm426, %v1762, 0
        %1769 = vmatpush.bf16.msra.mxu0 0
        %1770 = vmatpush.bf16.msra.mxu0 0
        %1771 = vmatpush.bf16.msra.mxu0 0
        %1772 = vmatpush.bf16.msra.mxu0 0
        %1773 = vmatpush.bf16.msra.mxu0 0
        %1774 = vmatpush.bf16.msra.mxu0 0
        %1775 = vmatpush.bf16.msra.mxu0 0
        %1776 = vmatpush.bf16.msra.mxu0 %v1767
        %1777 = vmatmul.bf16.gmra.mxu0 %v1764
        %v1778 = vpop.f32.mrf.mxu0
        %v1779 = vadd.f32 0.0, %v1778
        %v1780 = vpop.f32.mrf.mxu0
        %v1781 = vadd.f32 0.0, %v1780
        %1782 = vmatmul.bf16.gmra.mxu0 %v845
        %v1783 = vpop.f32.mrf.mxu0
        %v1784 = vadd.f32 0.0, %v1783
        %v1785 = vpop.f32.mrf.mxu0
        %v1786 = vadd.f32 0.0, %v1785
        %1787 = vmatmul.bf16.gmra.mxu0 %v848
        %v1788 = vpop.f32.mrf.mxu0
        %v1789 = vadd.f32 0.0, %v1788
        %v1790 = vpop.f32.mrf.mxu0
        %v1791 = vadd.f32 0.0, %v1790
        %1792 = vmatmul.bf16.gmra.mxu0 %v851
        %v1793 = vpop.f32.mrf.mxu0
        %v1794 = vadd.f32 0.0, %v1793
        %v1795 = vpop.f32.mrf.mxu0
        %v1796 = vadd.f32 0.0, %v1795
        %1797 = vmatmul.bf16.gmra.mxu0 %v854
        %v1798 = vpop.f32.mrf.mxu0
        %v1799 = vadd.f32 0.0, %v1798
        %v1800 = vpop.f32.mrf.mxu0
        %v1801 = vadd.f32 0.0, %v1800
        %1802 = vmatmul.bf16.gmra.mxu0 %v857
        %v1803 = vpop.f32.mrf.mxu0
        %v1804 = vadd.f32 0.0, %v1803
        %v1805 = vpop.f32.mrf.mxu0
        %v1806 = vadd.f32 0.0, %v1805
        %1807 = vmatmul.bf16.gmra.mxu0 %v860
        %v1808 = vpop.f32.mrf.mxu0
        %v1809 = vadd.f32 0.0, %v1808
        %v1810 = vpop.f32.mrf.mxu0
        %v1811 = vadd.f32 0.0, %v1810
        %1812 = vmatmul.bf16.gmra.mxu0 %v863
        %v1813 = vpop.f32.mrf.mxu0
        %v1814 = vadd.f32 0.0, %v1813
        %v1815 = vpop.f32.mrf.mxu0
        %v1816 = vadd.f32 0.0, %v1815
        %1817 = vdwg.mxu0
        %v1818 = vadd.f32 %v1737, %v1779
        %v1819 = vadd.f32 %v1738, %v1781
        %v1820 = vadd.f32 %v1739, %v1784
        %v1821 = vadd.f32 %v1740, %v1786
        %v1822 = vadd.f32 %v1741, %v1789
        %v1823 = vadd.f32 %v1742, %v1791
        %v1824 = vadd.f32 %v1743, %v1794
        %v1825 = vadd.f32 %v1744, %v1796
        %v1826 = vadd.f32 %v1745, %v1799
        %v1827 = vadd.f32 %v1746, %v1801
        %v1828 = vadd.f32 %v1747, %v1804
        %v1829 = vadd.f32 %v1748, %v1806
        %v1830 = vadd.f32 %v1749, %v1809
        %v1831 = vadd.f32 %v1750, %v1811
        %v1832 = vadd.f32 %v1751, %v1814
        %v1833 = vadd.f32 %v1752, %v1816
        %vm1834 = vcmask 1043456
        %v1835 = vrot.slane %v273, 4
        %v1836 = vrot.slane %v274, 4
        %v1837 = vsel %vm1834, %v1835, %v1836
        %v1838 = vrot.slane %v275, 4
        %v1839 = vsel %vm1834, %v1836, %v1838
        %v1840 = vrot.slane %v276, 4
        %v1841 = vrot.slane %v277, 4
        %v1842 = vsel %vm1834, %v1840, %v1841
        %v1843 = vrot.slane %v278, 4
        %v1844 = vsel %vm1834, %v1841, %v1843
        %v1845 = vrot.slane %v279, 4
        %v1846 = vrot.slane %v280, 4
        %v1847 = vsel %vm1834, %v1845, %v1846
        %v1848 = vrot.slane %v281, 4
        %v1849 = vsel %vm1834, %v1846, %v1848
        %v1850 = vrot.slane %v282, 4
        %v1851 = vrot.slane %v283, 4
        %v1852 = vsel %vm1834, %v1850, %v1851
        %v1853 = vrot.slane %v284, 4
        %v1854 = vsel %vm1834, %v1851, %v1853
        %v1855 = vrot.slane %v285, 4
        %v1856 = vrot.slane %v286, 4
        %v1857 = vsel %vm1834, %v1855, %v1856
        %v1858 = vrot.slane %v287, 4
        %v1859 = vsel %vm1834, %v1856, %v1858
        %v1860 = vrot.slane %v288, 4
        %v1861 = vrot.slane %v289, 4
        %v1862 = vsel %vm1834, %v1860, %v1861
        %v1863 = vrot.slane %v290, 4
        %v1864 = vsel %vm1834, %v1861, %v1863
        %v1865 = vrot.slane %v291, 4
        %v1866 = vrot.slane %v292, 4
        %v1867 = vsel %vm1834, %v1865, %v1866
        %v1868 = vrot.slane %v293, 4
        %v1869 = vsel %vm1834, %v1866, %v1868
        %v1870 = vrot.slane %v294, 4
        %v1871 = vrot.slane %v295, 4
        %v1872 = vsel %vm1834, %v1870, %v1871
        %v1873 = vrot.slane %v296, 4
        %v1874 = vsel %vm1834, %v1871, %v1873
        %v1891 = vpack.c.bf16 %v1839, %v1837
        %v1892 = vpack.c.bf16 %v1844, %v1842
        %v1893 = vpack.c.bf16 %v1849, %v1847
        %v1894 = vpack.c.bf16 %v1854, %v1852
        %v1895 = vpack.c.bf16 %v1859, %v1857
        %v1896 = vpack.c.bf16 %v1864, %v1862
        %v1897 = vpack.c.bf16 %v1869, %v1867
        %v1898 = vpack.c.bf16 %v1874, %v1872
        %s1899 = scalar_lea.vmem %s1, 28
        %v1900 = vld [vmem:[%s1899] sm:$0x3]
        %v1902 = vsel %vm401, %v1891, 0
        %v1905 = vsel %vm401, %v1892, 0
        %v1908 = vsel %vm401, %v1893, 0
        %v1911 = vsel %vm401, %v1894, 0
        %v1914 = vsel %vm401, %v1895, 0
        %v1917 = vsel %vm401, %v1896, 0
        %v1920 = vsel %vm401, %v1897, 0
        %v1923 = vsel %vm401, %v1898, 0
        %v1926 = vsel %vm426, %v1900, 0
        %1928 = vmatpush.bf16.msra.mxu0 0
        %1929 = vmatpush.bf16.msra.mxu0 0
        %1930 = vmatpush.bf16.msra.mxu0 0
        %1931 = vmatpush.bf16.msra.mxu0 0
        %1932 = vmatpush.bf16.msra.mxu0 0
        %1933 = vmatpush.bf16.msra.mxu0 0
        %1934 = vmatpush.bf16.msra.mxu0 0
        %1935 = vmatpush.bf16.msra.mxu0 %v1926
        %1936 = vmatmul.bf16.gmra.mxu0 %v1902
        %v1937 = vpop.f32.mrf.mxu0
        %v1938 = vadd.f32 0.0, %v1937
        %v1939 = vpop.f32.mrf.mxu0
        %v1940 = vadd.f32 0.0, %v1939
        %1941 = vmatmul.bf16.gmra.mxu0 %v1905
        %v1942 = vpop.f32.mrf.mxu0
        %v1943 = vadd.f32 0.0, %v1942
        %v1944 = vpop.f32.mrf.mxu0
        %v1945 = vadd.f32 0.0, %v1944
        %1946 = vmatmul.bf16.gmra.mxu0 %v1908
        %v1947 = vpop.f32.mrf.mxu0
        %v1948 = vadd.f32 0.0, %v1947
        %v1949 = vpop.f32.mrf.mxu0
        %v1950 = vadd.f32 0.0, %v1949
        %1951 = vmatmul.bf16.gmra.mxu0 %v1911
        %v1952 = vpop.f32.mrf.mxu0
        %v1953 = vadd.f32 0.0, %v1952
        %v1954 = vpop.f32.mrf.mxu0
        %v1955 = vadd.f32 0.0, %v1954
        %1956 = vmatmul.bf16.gmra.mxu0 %v1914
        %v1957 = vpop.f32.mrf.mxu0
        %v1958 = vadd.f32 0.0, %v1957
        %v1959 = vpop.f32.mrf.mxu0
        %v1960 = vadd.f32 0.0, %v1959
        %1961 = vmatmul.bf16.gmra.mxu0 %v1917
        %v1962 = vpop.f32.mrf.mxu0
        %v1963 = vadd.f32 0.0, %v1962
        %v1964 = vpop.f32.mrf.mxu0
        %v1965 = vadd.f32 0.0, %v1964
        %1966 = vmatmul.bf16.gmra.mxu0 %v1920
        %v1967 = vpop.f32.mrf.mxu0
        %v1968 = vadd.f32 0.0, %v1967
        %v1969 = vpop.f32.mrf.mxu0
        %v1970 = vadd.f32 0.0, %v1969
        %1971 = vmatmul.bf16.gmra.mxu0 %v1923
        %v1972 = vpop.f32.mrf.mxu0
        %v1973 = vadd.f32 0.0, %v1972
        %v1974 = vpop.f32.mrf.mxu0
        %v1975 = vadd.f32 0.0, %v1974
        %1976 = vdwg.mxu0
        %v1977 = vadd.f32 %v1818, %v1938
        %v1978 = vadd.f32 %v1819, %v1940
        %v1979 = vadd.f32 %v1820, %v1943
        %v1980 = vadd.f32 %v1821, %v1945
        %v1981 = vadd.f32 %v1822, %v1948
        %v1982 = vadd.f32 %v1823, %v1950
        %v1983 = vadd.f32 %v1824, %v1953
        %v1984 = vadd.f32 %v1825, %v1955
        %v1985 = vadd.f32 %v1826, %v1958
        %v1986 = vadd.f32 %v1827, %v1960
        %v1987 = vadd.f32 %v1828, %v1963
        %v1988 = vadd.f32 %v1829, %v1965
        %v1989 = vadd.f32 %v1830, %v1968
        %v1990 = vadd.f32 %v1831, %v1970
        %v1991 = vadd.f32 %v1832, %v1973
        %v1992 = vadd.f32 %v1833, %v1975
        %v1993 = vpack.c.bf16 %v298, %v297
        %s1994 = scalar_lea.vmem %s1, 30
        %v1995 = vld [vmem:[%s1994] sm:$0x3]
        %v1997 = vsel %vm401, %v1993, 0
        %v2000 = vsel %vm426, %v1995, 0
        %2002 = vmatpush.bf16.msra.mxu0 0
        %2003 = vmatpush.bf16.msra.mxu0 0
        %2004 = vmatpush.bf16.msra.mxu0 0
        %2005 = vmatpush.bf16.msra.mxu0 0
        %2006 = vmatpush.bf16.msra.mxu0 0
        %2007 = vmatpush.bf16.msra.mxu0 0
        %2008 = vmatpush.bf16.msra.mxu0 0
        %2009 = vmatpush.bf16.msra.mxu0 %v2000
        %2010 = vmatmul.bf16.gmra.mxu0 %v1600
        %v2011 = vpop.f32.mrf.mxu0
        %v2012 = vadd.f32 0.0, %v2011
        %v2013 = vpop.f32.mrf.mxu0
        %v2014 = vadd.f32 0.0, %v2013
        %2015 = vmatmul.bf16.gmra.mxu0 %v1603
        %v2016 = vpop.f32.mrf.mxu0
        %v2017 = vadd.f32 0.0, %v2016
        %v2018 = vpop.f32.mrf.mxu0
        %v2019 = vadd.f32 0.0, %v2018
        %2020 = vmatmul.bf16.gmra.mxu0 %v1606
        %v2021 = vpop.f32.mrf.mxu0
        %v2022 = vadd.f32 0.0, %v2021
        %v2023 = vpop.f32.mrf.mxu0
        %v2024 = vadd.f32 0.0, %v2023
        %2025 = vmatmul.bf16.gmra.mxu0 %v1609
        %v2026 = vpop.f32.mrf.mxu0
        %v2027 = vadd.f32 0.0, %v2026
        %v2028 = vpop.f32.mrf.mxu0
        %v2029 = vadd.f32 0.0, %v2028
        %2030 = vmatmul.bf16.gmra.mxu0 %v1612
        %v2031 = vpop.f32.mrf.mxu0
        %v2032 = vadd.f32 0.0, %v2031
        %v2033 = vpop.f32.mrf.mxu0
        %v2034 = vadd.f32 0.0, %v2033
        %2035 = vmatmul.bf16.gmra.mxu0 %v1615
        %v2036 = vpop.f32.mrf.mxu0
        %v2037 = vadd.f32 0.0, %v2036
        %v2038 = vpop.f32.mrf.mxu0
        %v2039 = vadd.f32 0.0, %v2038
        %2040 = vmatmul.bf16.gmra.mxu0 %v1618
        %v2041 = vpop.f32.mrf.mxu0
        %v2042 = vadd.f32 0.0, %v2041
        %v2043 = vpop.f32.mrf.mxu0
        %v2044 = vadd.f32 0.0, %v2043
        %2045 = vmatmul.bf16.gmra.mxu0 %v1997
        %v2046 = vpop.f32.mrf.mxu0
        %v2047 = vadd.f32 0.0, %v2046
        %v2048 = vpop.f32.mrf.mxu0
        %v2049 = vadd.f32 0.0, %v2048
        %2050 = vdwg.mxu0
        %v2051 = vadd.f32 %v1977, %v2012
        %v2052 = vadd.f32 %v1978, %v2014
        %v2053 = vadd.f32 %v1979, %v2017
        %v2054 = vadd.f32 %v1980, %v2019
        %v2055 = vadd.f32 %v1981, %v2022
        %v2056 = vadd.f32 %v1982, %v2024
        %v2057 = vadd.f32 %v1983, %v2027
        %v2058 = vadd.f32 %v1984, %v2029
        %v2059 = vadd.f32 %v1985, %v2032
        %v2060 = vadd.f32 %v1986, %v2034
        %v2061 = vadd.f32 %v1987, %v2037
        %v2062 = vadd.f32 %v1988, %v2039
        %v2063 = vadd.f32 %v1989, %v2042
        %v2064 = vadd.f32 %v1990, %v2044
        %v2065 = vadd.f32 %v1991, %v2047
        %v2066 = vadd.f32 %v1992, %v2049
        %s2067 = scalar_lea.vmem %s1, 32
        %v2068 = vld [vmem:[%s2067] sm:$0x3]
        %v2070 = vsel %vm426, %v2068, 0
        %2072 = vmatpush.bf16.msra.mxu0 0
        %2073 = vmatpush.bf16.msra.mxu0 0
        %2074 = vmatpush.bf16.msra.mxu0 0
        %2075 = vmatpush.bf16.msra.mxu0 0
        %2076 = vmatpush.bf16.msra.mxu0 0
        %2077 = vmatpush.bf16.msra.mxu0 0
        %2078 = vmatpush.bf16.msra.mxu0 0
        %2079 = vmatpush.bf16.msra.mxu0 %v2070
        %2080 = vmatmul.bf16.gmra.mxu0 %v702
        %v2081 = vpop.f32.mrf.mxu0
        %v2082 = vadd.f32 0.0, %v2081
        %v2083 = vpop.f32.mrf.mxu0
        %v2084 = vadd.f32 0.0, %v2083
        %2085 = vmatmul.bf16.gmra.mxu0 %v705
        %v2086 = vpop.f32.mrf.mxu0
        %v2087 = vadd.f32 0.0, %v2086
        %v2088 = vpop.f32.mrf.mxu0
        %v2089 = vadd.f32 0.0, %v2088
        %2090 = vmatmul.bf16.gmra.mxu0 %v708
        %v2091 = vpop.f32.mrf.mxu0
        %v2092 = vadd.f32 0.0, %v2091
        %v2093 = vpop.f32.mrf.mxu0
        %v2094 = vadd.f32 0.0, %v2093
        %2095 = vmatmul.bf16.gmra.mxu0 %v711
        %v2096 = vpop.f32.mrf.mxu0
        %v2097 = vadd.f32 0.0, %v2096
        %v2098 = vpop.f32.mrf.mxu0
        %v2099 = vadd.f32 0.0, %v2098
        %2100 = vmatmul.bf16.gmra.mxu0 %v714
        %v2101 = vpop.f32.mrf.mxu0
        %v2102 = vadd.f32 0.0, %v2101
        %v2103 = vpop.f32.mrf.mxu0
        %v2104 = vadd.f32 0.0, %v2103
        %2105 = vmatmul.bf16.gmra.mxu0 %v717
        %v2106 = vpop.f32.mrf.mxu0
        %v2107 = vadd.f32 0.0, %v2106
        %v2108 = vpop.f32.mrf.mxu0
        %v2109 = vadd.f32 0.0, %v2108
        %2110 = vmatmul.bf16.gmra.mxu0 %v720
        %v2111 = vpop.f32.mrf.mxu0
        %v2112 = vadd.f32 0.0, %v2111
        %v2113 = vpop.f32.mrf.mxu0
        %v2114 = vadd.f32 0.0, %v2113
        %2115 = vmatmul.bf16.gmra.mxu0 %v723
        %v2116 = vpop.f32.mrf.mxu0
        %v2117 = vadd.f32 0.0, %v2116
        %v2118 = vpop.f32.mrf.mxu0
        %v2119 = vadd.f32 0.0, %v2118
        %2120 = vdwg.mxu0
        %v2121 = vadd.f32 %v2051, %v2082
        %v2122 = vadd.f32 %v2052, %v2084
        %v2123 = vadd.f32 %v2053, %v2087
        %v2124 = vadd.f32 %v2054, %v2089
        %v2125 = vadd.f32 %v2055, %v2092
        %v2126 = vadd.f32 %v2056, %v2094
        %v2127 = vadd.f32 %v2057, %v2097
        %v2128 = vadd.f32 %v2058, %v2099
        %v2129 = vadd.f32 %v2059, %v2102
        %v2130 = vadd.f32 %v2060, %v2104
        %v2131 = vadd.f32 %v2061, %v2107
        %v2132 = vadd.f32 %v2062, %v2109
        %v2133 = vadd.f32 %v2063, %v2112
        %v2134 = vadd.f32 %v2064, %v2114
        %v2135 = vadd.f32 %v2065, %v2117
        %v2136 = vadd.f32 %v2066, %v2119
        %s2137 = scalar_lea.vmem %s1, 34
        %v2138 = vld [vmem:[%s2137] sm:$0x3]
        %v2140 = vsel %vm426, %v2138, 0
        %2142 = vmatpush.bf16.msra.mxu0 0
        %2143 = vmatpush.bf16.msra.mxu0 0
        %2144 = vmatpush.bf16.msra.mxu0 0
        %2145 = vmatpush.bf16.msra.mxu0 0
        %2146 = vmatpush.bf16.msra.mxu0 0
        %2147 = vmatpush.bf16.msra.mxu0 0
        %2148 = vmatpush.bf16.msra.mxu0 0
        %2149 = vmatpush.bf16.msra.mxu0 %v2140
        %2150 = vmatmul.bf16.gmra.mxu0 %v647
        %v2151 = vpop.f32.mrf.mxu0
        %v2152 = vadd.f32 0.0, %v2151
        %v2153 = vpop.f32.mrf.mxu0
        %v2154 = vadd.f32 0.0, %v2153
        %2155 = vmatmul.bf16.gmra.mxu0 %v403
        %v2156 = vpop.f32.mrf.mxu0
        %v2157 = vadd.f32 0.0, %v2156
        %v2158 = vpop.f32.mrf.mxu0
        %v2159 = vadd.f32 0.0, %v2158
        %2160 = vmatmul.bf16.gmra.mxu0 %v406
        %v2161 = vpop.f32.mrf.mxu0
        %v2162 = vadd.f32 0.0, %v2161
        %v2163 = vpop.f32.mrf.mxu0
        %v2164 = vadd.f32 0.0, %v2163
        %2165 = vmatmul.bf16.gmra.mxu0 %v409
        %v2166 = vpop.f32.mrf.mxu0
        %v2167 = vadd.f32 0.0, %v2166
        %v2168 = vpop.f32.mrf.mxu0
        %v2169 = vadd.f32 0.0, %v2168
        %2170 = vmatmul.bf16.gmra.mxu0 %v412
        %v2171 = vpop.f32.mrf.mxu0
        %v2172 = vadd.f32 0.0, %v2171
        %v2173 = vpop.f32.mrf.mxu0
        %v2174 = vadd.f32 0.0, %v2173
        %2175 = vmatmul.bf16.gmra.mxu0 %v415
        %v2176 = vpop.f32.mrf.mxu0
        %v2177 = vadd.f32 0.0, %v2176
        %v2178 = vpop.f32.mrf.mxu0
        %v2179 = vadd.f32 0.0, %v2178
        %2180 = vmatmul.bf16.gmra.mxu0 %v418
        %v2181 = vpop.f32.mrf.mxu0
        %v2182 = vadd.f32 0.0, %v2181
        %v2183 = vpop.f32.mrf.mxu0
        %v2184 = vadd.f32 0.0, %v2183
        %2185 = vmatmul.bf16.gmra.mxu0 %v421
        %v2186 = vpop.f32.mrf.mxu0
        %v2187 = vadd.f32 0.0, %v2186
        %v2188 = vpop.f32.mrf.mxu0
        %v2189 = vadd.f32 0.0, %v2188
        %2190 = vdwg.mxu0
        %v2191 = vadd.f32 %v2121, %v2152
        %v2192 = vadd.f32 %v2122, %v2154
        %v2193 = vadd.f32 %v2123, %v2157
        %v2194 = vadd.f32 %v2124, %v2159
        %v2195 = vadd.f32 %v2125, %v2162
        %v2196 = vadd.f32 %v2126, %v2164
        %v2197 = vadd.f32 %v2127, %v2167
        %v2198 = vadd.f32 %v2128, %v2169
        %v2199 = vadd.f32 %v2129, %v2172
        %v2200 = vadd.f32 %v2130, %v2174
        %v2201 = vadd.f32 %v2131, %v2177
        %v2202 = vadd.f32 %v2132, %v2179
        %v2203 = vadd.f32 %v2133, %v2182
        %v2204 = vadd.f32 %v2134, %v2184
        %v2205 = vadd.f32 %v2135, %v2187
        %v2206 = vadd.f32 %v2136, %v2189
        %s2207 = scalar_lea.vmem %s1, 36
        %v2208 = vld [vmem:[%s2207] sm:$0x3]
        %v2210 = vsel %vm426, %v2208, 0
        %2212 = vmatpush.bf16.msra.mxu0 0
        %2213 = vmatpush.bf16.msra.mxu0 0
        %2214 = vmatpush.bf16.msra.mxu0 0
        %2215 = vmatpush.bf16.msra.mxu0 0
        %2216 = vmatpush.bf16.msra.mxu0 0
        %2217 = vmatpush.bf16.msra.mxu0 0
        %2218 = vmatpush.bf16.msra.mxu0 0
        %2219 = vmatpush.bf16.msra.mxu0 %v2210
        %2220 = vmatmul.bf16.gmra.mxu0 %v845
        %v2221 = vpop.f32.mrf.mxu0
        %v2222 = vadd.f32 0.0, %v2221
        %v2223 = vpop.f32.mrf.mxu0
        %v2224 = vadd.f32 0.0, %v2223
        %2225 = vmatmul.bf16.gmra.mxu0 %v848
        %v2226 = vpop.f32.mrf.mxu0
        %v2227 = vadd.f32 0.0, %v2226
        %v2228 = vpop.f32.mrf.mxu0
        %v2229 = vadd.f32 0.0, %v2228
        %2230 = vmatmul.bf16.gmra.mxu0 %v851
        %v2231 = vpop.f32.mrf.mxu0
        %v2232 = vadd.f32 0.0, %v2231
        %v2233 = vpop.f32.mrf.mxu0
        %v2234 = vadd.f32 0.0, %v2233
        %2235 = vmatmul.bf16.gmra.mxu0 %v854
        %v2236 = vpop.f32.mrf.mxu0
        %v2237 = vadd.f32 0.0, %v2236
        %v2238 = vpop.f32.mrf.mxu0
        %v2239 = vadd.f32 0.0, %v2238
        %2240 = vmatmul.bf16.gmra.mxu0 %v857
        %v2241 = vpop.f32.mrf.mxu0
        %v2242 = vadd.f32 0.0, %v2241
        %v2243 = vpop.f32.mrf.mxu0
        %v2244 = vadd.f32 0.0, %v2243
        %2245 = vmatmul.bf16.gmra.mxu0 %v860
        %v2246 = vpop.f32.mrf.mxu0
        %v2247 = vadd.f32 0.0, %v2246
        %v2248 = vpop.f32.mrf.mxu0
        %v2249 = vadd.f32 0.0, %v2248
        %2250 = vmatmul.bf16.gmra.mxu0 %v863
        %v2251 = vpop.f32.mrf.mxu0
        %v2252 = vadd.f32 0.0, %v2251
        %v2253 = vpop.f32.mrf.mxu0
        %v2254 = vadd.f32 0.0, %v2253
        %2255 = vmatmul.bf16.gmra.mxu0 %v866
        %v2256 = vpop.f32.mrf.mxu0
        %v2257 = vadd.f32 0.0, %v2256
        %v2258 = vpop.f32.mrf.mxu0
        %v2259 = vadd.f32 0.0, %v2258
        %2260 = vdwg.mxu0
        %v2261 = vadd.f32 %v2191, %v2222
        %v2262 = vadd.f32 %v2192, %v2224
        %v2263 = vadd.f32 %v2193, %v2227
        %v2264 = vadd.f32 %v2194, %v2229
        %v2265 = vadd.f32 %v2195, %v2232
        %v2266 = vadd.f32 %v2196, %v2234
        %v2267 = vadd.f32 %v2197, %v2237
        %v2268 = vadd.f32 %v2198, %v2239
        %v2269 = vadd.f32 %v2199, %v2242
        %v2270 = vadd.f32 %v2200, %v2244
        %v2271 = vadd.f32 %v2201, %v2247
        %v2272 = vadd.f32 %v2202, %v2249
        %v2273 = vadd.f32 %v2203, %v2252
        %v2274 = vadd.f32 %v2204, %v2254
        %v2275 = vadd.f32 %v2205, %v2257
        %v2276 = vadd.f32 %v2206, %v2259
        %v2277 = vrot.slane %v297, 4
        %v2278 = vrot.slane %v298, 4
        %v2279 = vsel %vm1834, %v2277, %v2278
        %v2280 = vrot.slane %v299, 4
        %v2281 = vsel %vm1834, %v2278, %v2280
        %v2284 = vpack.c.bf16 %v2281, %v2279
        %s2285 = scalar_lea.vmem %s1, 38
        %v2286 = vld [vmem:[%s2285] sm:$0x3]
        %v2288 = vsel %vm401, %v2284, 0
        %v2291 = vsel %vm426, %v2286, 0
        %2293 = vmatpush.bf16.msra.mxu0 0
        %2294 = vmatpush.bf16.msra.mxu0 0
        %2295 = vmatpush.bf16.msra.mxu0 0
        %2296 = vmatpush.bf16.msra.mxu0 0
        %2297 = vmatpush.bf16.msra.mxu0 0
        %2298 = vmatpush.bf16.msra.mxu0 0
        %2299 = vmatpush.bf16.msra.mxu0 0
        %2300 = vmatpush.bf16.msra.mxu0 %v2291
        %2301 = vmatmul.bf16.gmra.mxu0 %v1905
        %v2302 = vpop.f32.mrf.mxu0
        %v2303 = vadd.f32 0.0, %v2302
        %v2304 = vpop.f32.mrf.mxu0
        %v2305 = vadd.f32 0.0, %v2304
        %2306 = vmatmul.bf16.gmra.mxu0 %v1908
        %v2307 = vpop.f32.mrf.mxu0
        %v2308 = vadd.f32 0.0, %v2307
        %v2309 = vpop.f32.mrf.mxu0
        %v2310 = vadd.f32 0.0, %v2309
        %2311 = vmatmul.bf16.gmra.mxu0 %v1911
        %v2312 = vpop.f32.mrf.mxu0
        %v2313 = vadd.f32 0.0, %v2312
        %v2314 = vpop.f32.mrf.mxu0
        %v2315 = vadd.f32 0.0, %v2314
        %2316 = vmatmul.bf16.gmra.mxu0 %v1914
        %v2317 = vpop.f32.mrf.mxu0
        %v2318 = vadd.f32 0.0, %v2317
        %v2319 = vpop.f32.mrf.mxu0
        %v2320 = vadd.f32 0.0, %v2319
        %2321 = vmatmul.bf16.gmra.mxu0 %v1917
        %v2322 = vpop.f32.mrf.mxu0
        %v2323 = vadd.f32 0.0, %v2322
        %v2324 = vpop.f32.mrf.mxu0
        %v2325 = vadd.f32 0.0, %v2324
        %2326 = vmatmul.bf16.gmra.mxu0 %v1920
        %v2327 = vpop.f32.mrf.mxu0
        %v2328 = vadd.f32 0.0, %v2327
        %v2329 = vpop.f32.mrf.mxu0
        %v2330 = vadd.f32 0.0, %v2329
        %2331 = vmatmul.bf16.gmra.mxu0 %v1923
        %v2332 = vpop.f32.mrf.mxu0
        %v2333 = vadd.f32 0.0, %v2332
        %v2334 = vpop.f32.mrf.mxu0
        %v2335 = vadd.f32 0.0, %v2334
        %2336 = vmatmul.bf16.gmra.mxu0 %v2288
        %v2337 = vpop.f32.mrf.mxu0
        %v2338 = vadd.f32 0.0, %v2337
        %v2339 = vpop.f32.mrf.mxu0
        %v2340 = vadd.f32 0.0, %v2339
        %2341 = vdwg.mxu0
        %v2342 = vadd.f32 %v2261, %v2303
        %v2343 = vadd.f32 %v2262, %v2305
        %v2344 = vadd.f32 %v2263, %v2308
        %v2345 = vadd.f32 %v2264, %v2310
        %v2346 = vadd.f32 %v2265, %v2313
        %v2347 = vadd.f32 %v2266, %v2315
        %v2348 = vadd.f32 %v2267, %v2318
        %v2349 = vadd.f32 %v2268, %v2320
        %v2350 = vadd.f32 %v2269, %v2323
        %v2351 = vadd.f32 %v2270, %v2325
        %v2352 = vadd.f32 %v2271, %v2328
        %v2353 = vadd.f32 %v2272, %v2330
        %v2354 = vadd.f32 %v2273, %v2333
        %v2355 = vadd.f32 %v2274, %v2335
        %v2356 = vadd.f32 %v2275, %v2338
        %v2357 = vadd.f32 %v2276, %v2340
        %v2358 = vpack.c.bf16 %v301, %v300
        %s2359 = scalar_lea.vmem %s1, 40
        %v2360 = vld [vmem:[%s2359] sm:$0x3]
        %v2362 = vsel %vm401, %v2358, 0
        %v2365 = vsel %vm426, %v2360, 0
        %2367 = vmatpush.bf16.msra.mxu0 0
        %2368 = vmatpush.bf16.msra.mxu0 0
        %2369 = vmatpush.bf16.msra.mxu0 0
        %2370 = vmatpush.bf16.msra.mxu0 0
        %2371 = vmatpush.bf16.msra.mxu0 0
        %2372 = vmatpush.bf16.msra.mxu0 0
        %2373 = vmatpush.bf16.msra.mxu0 0
        %2374 = vmatpush.bf16.msra.mxu0 %v2365
        %2375 = vmatmul.bf16.gmra.mxu0 %v1603
        %v2376 = vpop.f32.mrf.mxu0
        %v2377 = vadd.f32 0.0, %v2376
        %v2378 = vpop.f32.mrf.mxu0
        %v2379 = vadd.f32 0.0, %v2378
        %2380 = vmatmul.bf16.gmra.mxu0 %v1606
        %v2381 = vpop.f32.mrf.mxu0
        %v2382 = vadd.f32 0.0, %v2381
        %v2383 = vpop.f32.mrf.mxu0
        %v2384 = vadd.f32 0.0, %v2383
        %2385 = vmatmul.bf16.gmra.mxu0 %v1609
        %v2386 = vpop.f32.mrf.mxu0
        %v2387 = vadd.f32 0.0, %v2386
        %v2388 = vpop.f32.mrf.mxu0
        %v2389 = vadd.f32 0.0, %v2388
        %2390 = vmatmul.bf16.gmra.mxu0 %v1612
        %v2391 = vpop.f32.mrf.mxu0
        %v2392 = vadd.f32 0.0, %v2391
        %v2393 = vpop.f32.mrf.mxu0
        %v2394 = vadd.f32 0.0, %v2393
        %2395 = vmatmul.bf16.gmra.mxu0 %v1615
        %v2396 = vpop.f32.mrf.mxu0
        %v2397 = vadd.f32 0.0, %v2396
        %v2398 = vpop.f32.mrf.mxu0
        %v2399 = vadd.f32 0.0, %v2398
        %2400 = vmatmul.bf16.gmra.mxu0 %v1618
        %v2401 = vpop.f32.mrf.mxu0
        %v2402 = vadd.f32 0.0, %v2401
        %v2403 = vpop.f32.mrf.mxu0
        %v2404 = vadd.f32 0.0, %v2403
        %2405 = vmatmul.bf16.gmra.mxu0 %v1997
        %v2406 = vpop.f32.mrf.mxu0
        %v2407 = vadd.f32 0.0, %v2406
        %v2408 = vpop.f32.mrf.mxu0
        %v2409 = vadd.f32 0.0, %v2408
        %2410 = vmatmul.bf16.gmra.mxu0 %v2362
        %v2411 = vpop.f32.mrf.mxu0
        %v2412 = vadd.f32 0.0, %v2411
        %v2413 = vpop.f32.mrf.mxu0
        %v2414 = vadd.f32 0.0, %v2413
        %2415 = vdwg.mxu0
        %v2416 = vadd.f32 %v2342, %v2377
        %v2417 = vadd.f32 %v2343, %v2379
        %v2418 = vadd.f32 %v2344, %v2382
        %v2419 = vadd.f32 %v2345, %v2384
        %v2420 = vadd.f32 %v2346, %v2387
        %v2421 = vadd.f32 %v2347, %v2389
        %v2422 = vadd.f32 %v2348, %v2392
        %v2423 = vadd.f32 %v2349, %v2394
        %v2424 = vadd.f32 %v2350, %v2397
        %v2425 = vadd.f32 %v2351, %v2399
        %v2426 = vadd.f32 %v2352, %v2402
        %v2427 = vadd.f32 %v2353, %v2404
        %v2428 = vadd.f32 %v2354, %v2407
        %v2429 = vadd.f32 %v2355, %v2409
        %v2430 = vadd.f32 %v2356, %v2412
        %v2431 = vadd.f32 %v2357, %v2414
        %s2432 = scalar_lea.vmem %s1, 42
        %v2433 = vld [vmem:[%s2432] sm:$0x3]
        %v2435 = vsel %vm426, %v2433, 0
        %2437 = vmatpush.bf16.msra.mxu0 0
        %2438 = vmatpush.bf16.msra.mxu0 0
        %2439 = vmatpush.bf16.msra.mxu0 0
        %2440 = vmatpush.bf16.msra.mxu0 0
        %2441 = vmatpush.bf16.msra.mxu0 0
        %2442 = vmatpush.bf16.msra.mxu0 0
        %2443 = vmatpush.bf16.msra.mxu0 0
        %2444 = vmatpush.bf16.msra.mxu0 %v2435
        %2445 = vmatmul.bf16.gmra.mxu0 %v705
        %v2446 = vpop.f32.mrf.mxu0
        %v2447 = vadd.f32 0.0, %v2446
        %v2448 = vpop.f32.mrf.mxu0
        %v2449 = vadd.f32 0.0, %v2448
        %2450 = vmatmul.bf16.gmra.mxu0 %v708
        %v2451 = vpop.f32.mrf.mxu0
        %v2452 = vadd.f32 0.0, %v2451
        %v2453 = vpop.f32.mrf.mxu0
        %v2454 = vadd.f32 0.0, %v2453
        %2455 = vmatmul.bf16.gmra.mxu0 %v711
        %v2456 = vpop.f32.mrf.mxu0
        %v2457 = vadd.f32 0.0, %v2456
        %v2458 = vpop.f32.mrf.mxu0
        %v2459 = vadd.f32 0.0, %v2458
        %2460 = vmatmul.bf16.gmra.mxu0 %v714
        %v2461 = vpop.f32.mrf.mxu0
        %v2462 = vadd.f32 0.0, %v2461
        %v2463 = vpop.f32.mrf.mxu0
        %v2464 = vadd.f32 0.0, %v2463
        %2465 = vmatmul.bf16.gmra.mxu0 %v717
        %v2466 = vpop.f32.mrf.mxu0
        %v2467 = vadd.f32 0.0, %v2466
        %v2468 = vpop.f32.mrf.mxu0
        %v2469 = vadd.f32 0.0, %v2468
        %2470 = vmatmul.bf16.gmra.mxu0 %v720
        %v2471 = vpop.f32.mrf.mxu0
        %v2472 = vadd.f32 0.0, %v2471
        %v2473 = vpop.f32.mrf.mxu0
        %v2474 = vadd.f32 0.0, %v2473
        %2475 = vmatmul.bf16.gmra.mxu0 %v723
        %v2476 = vpop.f32.mrf.mxu0
        %v2477 = vadd.f32 0.0, %v2476
        %v2478 = vpop.f32.mrf.mxu0
        %v2479 = vadd.f32 0.0, %v2478
        %2480 = vmatmul.bf16.gmra.mxu0 %v947
        %v2481 = vpop.f32.mrf.mxu0
        %v2482 = vadd.f32 0.0, %v2481
        %v2483 = vpop.f32.mrf.mxu0
        %v2484 = vadd.f32 0.0, %v2483
        %2485 = vdwg.mxu0
        %v2486 = vadd.f32 %v2416, %v2447
        %v2487 = vadd.f32 %v2417, %v2449
        %v2488 = vadd.f32 %v2418, %v2452
        %v2489 = vadd.f32 %v2419, %v2454
        %v2490 = vadd.f32 %v2420, %v2457
        %v2491 = vadd.f32 %v2421, %v2459
        %v2492 = vadd.f32 %v2422, %v2462
        %v2493 = vadd.f32 %v2423, %v2464
        %v2494 = vadd.f32 %v2424, %v2467
        %v2495 = vadd.f32 %v2425, %v2469
        %v2496 = vadd.f32 %v2426, %v2472
        %v2497 = vadd.f32 %v2427, %v2474
        %v2498 = vadd.f32 %v2428, %v2477
        %v2499 = vadd.f32 %v2429, %v2479
        %v2500 = vadd.f32 %v2430, %v2482
        %v2501 = vadd.f32 %v2431, %v2484
        %s2502 = scalar_lea.vmem %s1, 44
        %v2503 = vld [vmem:[%s2502] sm:$0x3]
        %v2505 = vsel %vm426, %v2503, 0
        %2507 = vmatpush.bf16.msra.mxu0 0
        %2508 = vmatpush.bf16.msra.mxu0 0
        %2509 = vmatpush.bf16.msra.mxu0 0
        %2510 = vmatpush.bf16.msra.mxu0 0
        %2511 = vmatpush.bf16.msra.mxu0 0
        %2512 = vmatpush.bf16.msra.mxu0 0
        %2513 = vmatpush.bf16.msra.mxu0 0
        %2514 = vmatpush.bf16.msra.mxu0 %v2505
        %2515 = vmatmul.bf16.gmra.mxu0 %v403
        %v2516 = vpop.f32.mrf.mxu0
        %v2517 = vadd.f32 0.0, %v2516
        %v2518 = vpop.f32.mrf.mxu0
        %v2519 = vadd.f32 0.0, %v2518
        %2520 = vmatmul.bf16.gmra.mxu0 %v406
        %v2521 = vpop.f32.mrf.mxu0
        %v2522 = vadd.f32 0.0, %v2521
        %v2523 = vpop.f32.mrf.mxu0
        %v2524 = vadd.f32 0.0, %v2523
        %2525 = vmatmul.bf16.gmra.mxu0 %v409
        %v2526 = vpop.f32.mrf.mxu0
        %v2527 = vadd.f32 0.0, %v2526
        %v2528 = vpop.f32.mrf.mxu0
        %v2529 = vadd.f32 0.0, %v2528
        %2530 = vmatmul.bf16.gmra.mxu0 %v412
        %v2531 = vpop.f32.mrf.mxu0
        %v2532 = vadd.f32 0.0, %v2531
        %v2533 = vpop.f32.mrf.mxu0
        %v2534 = vadd.f32 0.0, %v2533
        %2535 = vmatmul.bf16.gmra.mxu0 %v415
        %v2536 = vpop.f32.mrf.mxu0
        %v2537 = vadd.f32 0.0, %v2536
        %v2538 = vpop.f32.mrf.mxu0
        %v2539 = vadd.f32 0.0, %v2538
        %2540 = vmatmul.bf16.gmra.mxu0 %v418
        %v2541 = vpop.f32.mrf.mxu0
        %v2542 = vadd.f32 0.0, %v2541
        %v2543 = vpop.f32.mrf.mxu0
        %v2544 = vadd.f32 0.0, %v2543
        %2545 = vmatmul.bf16.gmra.mxu0 %v421
        %v2546 = vpop.f32.mrf.mxu0
        %v2547 = vadd.f32 0.0, %v2546
        %v2548 = vpop.f32.mrf.mxu0
        %v2549 = vadd.f32 0.0, %v2548
        %2550 = vmatmul.bf16.gmra.mxu0 %v424
        %v2551 = vpop.f32.mrf.mxu0
        %v2552 = vadd.f32 0.0, %v2551
        %v2553 = vpop.f32.mrf.mxu0
        %v2554 = vadd.f32 0.0, %v2553
        %2555 = vdwg.mxu0
        %v2556 = vadd.f32 %v2486, %v2517
        %v2557 = vadd.f32 %v2487, %v2519
        %v2558 = vadd.f32 %v2488, %v2522
        %v2559 = vadd.f32 %v2489, %v2524
        %v2560 = vadd.f32 %v2490, %v2527
        %v2561 = vadd.f32 %v2491, %v2529
        %v2562 = vadd.f32 %v2492, %v2532
        %v2563 = vadd.f32 %v2493, %v2534
        %v2564 = vadd.f32 %v2494, %v2537
        %v2565 = vadd.f32 %v2495, %v2539
        %v2566 = vadd.f32 %v2496, %v2542
        %v2567 = vadd.f32 %v2497, %v2544
        %v2568 = vadd.f32 %v2498, %v2547
        %v2569 = vadd.f32 %v2499, %v2549
        %v2570 = vadd.f32 %v2500, %v2552
        %v2571 = vadd.f32 %v2501, %v2554
        %s2572 = scalar_lea.vmem %s1, 46
        %v2573 = vld [vmem:[%s2572] sm:$0x3]
        %v2575 = vsel %vm426, %v2573, 0
        %2577 = vmatpush.bf16.msra.mxu0 0
        %2578 = vmatpush.bf16.msra.mxu0 0
        %2579 = vmatpush.bf16.msra.mxu0 0
        %2580 = vmatpush.bf16.msra.mxu0 0
        %2581 = vmatpush.bf16.msra.mxu0 0
        %2582 = vmatpush.bf16.msra.mxu0 0
        %2583 = vmatpush.bf16.msra.mxu0 0
        %2584 = vmatpush.bf16.msra.mxu0 %v2575
        %2585 = vmatmul.bf16.gmra.mxu0 %v848
        %v2586 = vpop.f32.mrf.mxu0
        %v2587 = vadd.f32 0.0, %v2586
        %v2588 = vpop.f32.mrf.mxu0
        %v2589 = vadd.f32 0.0, %v2588
        %2590 = vmatmul.bf16.gmra.mxu0 %v851
        %v2591 = vpop.f32.mrf.mxu0
        %v2592 = vadd.f32 0.0, %v2591
        %v2593 = vpop.f32.mrf.mxu0
        %v2594 = vadd.f32 0.0, %v2593
        %2595 = vmatmul.bf16.gmra.mxu0 %v854
        %v2596 = vpop.f32.mrf.mxu0
        %v2597 = vadd.f32 0.0, %v2596
        %v2598 = vpop.f32.mrf.mxu0
        %v2599 = vadd.f32 0.0, %v2598
        %2600 = vmatmul.bf16.gmra.mxu0 %v857
        %v2601 = vpop.f32.mrf.mxu0
        %v2602 = vadd.f32 0.0, %v2601
        %v2603 = vpop.f32.mrf.mxu0
        %v2604 = vadd.f32 0.0, %v2603
        %2605 = vmatmul.bf16.gmra.mxu0 %v860
        %v2606 = vpop.f32.mrf.mxu0
        %v2607 = vadd.f32 0.0, %v2606
        %v2608 = vpop.f32.mrf.mxu0
        %v2609 = vadd.f32 0.0, %v2608
        %2610 = vmatmul.bf16.gmra.mxu0 %v863
        %v2611 = vpop.f32.mrf.mxu0
        %v2612 = vadd.f32 0.0, %v2611
        %v2613 = vpop.f32.mrf.mxu0
        %v2614 = vadd.f32 0.0, %v2613
        %2615 = vmatmul.bf16.gmra.mxu0 %v866
        %v2616 = vpop.f32.mrf.mxu0
        %v2617 = vadd.f32 0.0, %v2616
        %v2618 = vpop.f32.mrf.mxu0
        %v2619 = vadd.f32 0.0, %v2618
        %2620 = vmatmul.bf16.gmra.mxu0 %v1098
        %v2621 = vpop.f32.mrf.mxu0
        %v2622 = vadd.f32 0.0, %v2621
        %v2623 = vpop.f32.mrf.mxu0
        %v2624 = vadd.f32 0.0, %v2623
        %2625 = vdwg.mxu0
        %v2626 = vadd.f32 %v2556, %v2587
        %v2627 = vadd.f32 %v2557, %v2589
        %v2628 = vadd.f32 %v2558, %v2592
        %v2629 = vadd.f32 %v2559, %v2594
        %v2630 = vadd.f32 %v2560, %v2597
        %v2631 = vadd.f32 %v2561, %v2599
        %v2632 = vadd.f32 %v2562, %v2602
        %v2633 = vadd.f32 %v2563, %v2604
        %v2634 = vadd.f32 %v2564, %v2607
        %v2635 = vadd.f32 %v2565, %v2609
        %v2636 = vadd.f32 %v2566, %v2612
        %v2637 = vadd.f32 %v2567, %v2614
        %v2638 = vadd.f32 %v2568, %v2617
        %v2639 = vadd.f32 %v2569, %v2619
        %v2640 = vadd.f32 %v2570, %v2622
        %v2641 = vadd.f32 %v2571, %v2624
        %v2642 = vrot.slane %v300, 4
        %v2643 = vrot.slane %v301, 4
        %v2644 = vsel %vm1834, %v2642, %v2643
        %v2645 = vrot.slane %v302, 4
        %v2646 = vsel %vm1834, %v2643, %v2645
        %v2649 = vpack.c.bf16 %v2646, %v2644
        %s2650 = scalar_lea.vmem %s1, 48
        %v2651 = vld [vmem:[%s2650] sm:$0x3]
        %v2653 = vsel %vm401, %v2649, 0
        %v2656 = vsel %vm426, %v2651, 0
        %2658 = vmatpush.bf16.msra.mxu0 0
        %2659 = vmatpush.bf16.msra.mxu0 0
        %2660 = vmatpush.bf16.msra.mxu0 0
        %2661 = vmatpush.bf16.msra.mxu0 0
        %2662 = vmatpush.bf16.msra.mxu0 0
        %2663 = vmatpush.bf16.msra.mxu0 0
        %2664 = vmatpush.bf16.msra.mxu0 0
        %2665 = vmatpush.bf16.msra.mxu0 %v2656
        %2666 = vmatmul.bf16.gmra.mxu0 %v1908
        %v2667 = vpop.f32.mrf.mxu0
        %v2668 = vadd.f32 0.0, %v2667
        %v2669 = vpop.f32.mrf.mxu0
        %v2670 = vadd.f32 0.0, %v2669
        %2671 = vmatmul.bf16.gmra.mxu0 %v1911
        %v2672 = vpop.f32.mrf.mxu0
        %v2673 = vadd.f32 0.0, %v2672
        %v2674 = vpop.f32.mrf.mxu0
        %v2675 = vadd.f32 0.0, %v2674
        %2676 = vmatmul.bf16.gmra.mxu0 %v1914
        %v2677 = vpop.f32.mrf.mxu0
        %v2678 = vadd.f32 0.0, %v2677
        %v2679 = vpop.f32.mrf.mxu0
        %v2680 = vadd.f32 0.0, %v2679
        %2681 = vmatmul.bf16.gmra.mxu0 %v1917
        %v2682 = vpop.f32.mrf.mxu0
        %v2683 = vadd.f32 0.0, %v2682
        %v2684 = vpop.f32.mrf.mxu0
        %v2685 = vadd.f32 0.0, %v2684
        %2686 = vmatmul.bf16.gmra.mxu0 %v1920
        %v2687 = vpop.f32.mrf.mxu0
        %v2688 = vadd.f32 0.0, %v2687
        %v2689 = vpop.f32.mrf.mxu0
        %v2690 = vadd.f32 0.0, %v2689
        %2691 = vmatmul.bf16.gmra.mxu0 %v1923
        %v2692 = vpop.f32.mrf.mxu0
        %v2693 = vadd.f32 0.0, %v2692
        %v2694 = vpop.f32.mrf.mxu0
        %v2695 = vadd.f32 0.0, %v2694
        %2696 = vmatmul.bf16.gmra.mxu0 %v2288
        %v2697 = vpop.f32.mrf.mxu0
        %v2698 = vadd.f32 0.0, %v2697
        %v2699 = vpop.f32.mrf.mxu0
        %v2700 = vadd.f32 0.0, %v2699
        %2701 = vmatmul.bf16.gmra.mxu0 %v2653
        %v2702 = vpop.f32.mrf.mxu0
        %v2703 = vadd.f32 0.0, %v2702
        %v2704 = vpop.f32.mrf.mxu0
        %v2705 = vadd.f32 0.0, %v2704
        %2706 = vdwg.mxu0
        %v2707 = vadd.f32 %v2626, %v2668
        %v2708 = vadd.f32 %v2627, %v2670
        %v2709 = vadd.f32 %v2628, %v2673
        %v2710 = vadd.f32 %v2629, %v2675
        %v2711 = vadd.f32 %v2630, %v2678
        %v2712 = vadd.f32 %v2631, %v2680
        %v2713 = vadd.f32 %v2632, %v2683
        %v2714 = vadd.f32 %v2633, %v2685
        %v2715 = vadd.f32 %v2634, %v2688
        %v2716 = vadd.f32 %v2635, %v2690
        %v2717 = vadd.f32 %v2636, %v2693
        %v2718 = vadd.f32 %v2637, %v2695
        %v2719 = vadd.f32 %v2638, %v2698
        %v2720 = vadd.f32 %v2639, %v2700
        %v2721 = vadd.f32 %v2640, %v2703
        %v2722 = vadd.f32 %v2641, %v2705
        %v2723 = vpack.c.bf16 %v304, %v303
        %s2724 = scalar_lea.vmem %s1, 50
        %v2725 = vld [vmem:[%s2724] sm:$0x3]
        %v2727 = vsel %vm401, %v2723, 0
        %v2730 = vsel %vm426, %v2725, 0
        %2732 = vmatpush.bf16.msra.mxu0 0
        %2733 = vmatpush.bf16.msra.mxu0 0
        %2734 = vmatpush.bf16.msra.mxu0 0
        %2735 = vmatpush.bf16.msra.mxu0 0
        %2736 = vmatpush.bf16.msra.mxu0 0
        %2737 = vmatpush.bf16.msra.mxu0 0
        %2738 = vmatpush.bf16.msra.mxu0 0
        %2739 = vmatpush.bf16.msra.mxu0 %v2730
        %2740 = vmatmul.bf16.gmra.mxu0 %v1606
        %v2741 = vpop.f32.mrf.mxu0
        %v2742 = vadd.f32 0.0, %v2741
        %v2743 = vpop.f32.mrf.mxu0
        %v2744 = vadd.f32 0.0, %v2743
        %2745 = vmatmul.bf16.gmra.mxu0 %v1609
        %v2746 = vpop.f32.mrf.mxu0
        %v2747 = vadd.f32 0.0, %v2746
        %v2748 = vpop.f32.mrf.mxu0
        %v2749 = vadd.f32 0.0, %v2748
        %2750 = vmatmul.bf16.gmra.mxu0 %v1612
        %v2751 = vpop.f32.mrf.mxu0
        %v2752 = vadd.f32 0.0, %v2751
        %v2753 = vpop.f32.mrf.mxu0
        %v2754 = vadd.f32 0.0, %v2753
        %2755 = vmatmul.bf16.gmra.mxu0 %v1615
        %v2756 = vpop.f32.mrf.mxu0
        %v2757 = vadd.f32 0.0, %v2756
        %v2758 = vpop.f32.mrf.mxu0
        %v2759 = vadd.f32 0.0, %v2758
        %2760 = vmatmul.bf16.gmra.mxu0 %v1618
        %v2761 = vpop.f32.mrf.mxu0
        %v2762 = vadd.f32 0.0, %v2761
        %v2763 = vpop.f32.mrf.mxu0
        %v2764 = vadd.f32 0.0, %v2763
        %2765 = vmatmul.bf16.gmra.mxu0 %v1997
        %v2766 = vpop.f32.mrf.mxu0
        %v2767 = vadd.f32 0.0, %v2766
        %v2768 = vpop.f32.mrf.mxu0
        %v2769 = vadd.f32 0.0, %v2768
        %2770 = vmatmul.bf16.gmra.mxu0 %v2362
        %v2771 = vpop.f32.mrf.mxu0
        %v2772 = vadd.f32 0.0, %v2771
        %v2773 = vpop.f32.mrf.mxu0
        %v2774 = vadd.f32 0.0, %v2773
        %2775 = vmatmul.bf16.gmra.mxu0 %v2727
        %v2776 = vpop.f32.mrf.mxu0
        %v2777 = vadd.f32 0.0, %v2776
        %v2778 = vpop.f32.mrf.mxu0
        %v2779 = vadd.f32 0.0, %v2778
        %2780 = vdwg.mxu0
        %v2781 = vadd.f32 %v2707, %v2742
        %v2782 = vadd.f32 %v2708, %v2744
        %v2783 = vadd.f32 %v2709, %v2747
        %v2784 = vadd.f32 %v2710, %v2749
        %v2785 = vadd.f32 %v2711, %v2752
        %v2786 = vadd.f32 %v2712, %v2754
        %v2787 = vadd.f32 %v2713, %v2757
        %v2788 = vadd.f32 %v2714, %v2759
        %v2789 = vadd.f32 %v2715, %v2762
        %v2790 = vadd.f32 %v2716, %v2764
        %v2791 = vadd.f32 %v2717, %v2767
        %v2792 = vadd.f32 %v2718, %v2769
        %v2793 = vadd.f32 %v2719, %v2772
        %v2794 = vadd.f32 %v2720, %v2774
        %v2795 = vadd.f32 %v2721, %v2777
        %v2796 = vadd.f32 %v2722, %v2779
        %s2797 = scalar_lea.vmem %s1, 52
        %v2798 = vld [vmem:[%s2797] sm:$0x3]
        %v2800 = vsel %vm426, %v2798, 0
        %2802 = vmatpush.bf16.msra.mxu0 0
        %2803 = vmatpush.bf16.msra.mxu0 0
        %2804 = vmatpush.bf16.msra.mxu0 0
        %2805 = vmatpush.bf16.msra.mxu0 0
        %2806 = vmatpush.bf16.msra.mxu0 0
        %2807 = vmatpush.bf16.msra.mxu0 0
        %2808 = vmatpush.bf16.msra.mxu0 0
        %2809 = vmatpush.bf16.msra.mxu0 %v2800
        %2810 = vmatmul.bf16.gmra.mxu0 %v708
        %v2811 = vpop.f32.mrf.mxu0
        %v2812 = vadd.f32 0.0, %v2811
        %v2813 = vpop.f32.mrf.mxu0
        %v2814 = vadd.f32 0.0, %v2813
        %2815 = vmatmul.bf16.gmra.mxu0 %v711
        %v2816 = vpop.f32.mrf.mxu0
        %v2817 = vadd.f32 0.0, %v2816
        %v2818 = vpop.f32.mrf.mxu0
        %v2819 = vadd.f32 0.0, %v2818
        %2820 = vmatmul.bf16.gmra.mxu0 %v714
        %v2821 = vpop.f32.mrf.mxu0
        %v2822 = vadd.f32 0.0, %v2821
        %v2823 = vpop.f32.mrf.mxu0
        %v2824 = vadd.f32 0.0, %v2823
        %2825 = vmatmul.bf16.gmra.mxu0 %v717
        %v2826 = vpop.f32.mrf.mxu0
        %v2827 = vadd.f32 0.0, %v2826
        %v2828 = vpop.f32.mrf.mxu0
        %v2829 = vadd.f32 0.0, %v2828
        %2830 = vmatmul.bf16.gmra.mxu0 %v720
        %v2831 = vpop.f32.mrf.mxu0
        %v2832 = vadd.f32 0.0, %v2831
        %v2833 = vpop.f32.mrf.mxu0
        %v2834 = vadd.f32 0.0, %v2833
        %2835 = vmatmul.bf16.gmra.mxu0 %v723
        %v2836 = vpop.f32.mrf.mxu0
        %v2837 = vadd.f32 0.0, %v2836
        %v2838 = vpop.f32.mrf.mxu0
        %v2839 = vadd.f32 0.0, %v2838
        %2840 = vmatmul.bf16.gmra.mxu0 %v947
        %v2841 = vpop.f32.mrf.mxu0
        %v2842 = vadd.f32 0.0, %v2841
        %v2843 = vpop.f32.mrf.mxu0
        %v2844 = vadd.f32 0.0, %v2843
        %2845 = vmatmul.bf16.gmra.mxu0 %v1182
        %v2846 = vpop.f32.mrf.mxu0
        %v2847 = vadd.f32 0.0, %v2846
        %v2848 = vpop.f32.mrf.mxu0
        %v2849 = vadd.f32 0.0, %v2848
        %2850 = vdwg.mxu0
        %v2851 = vadd.f32 %v2781, %v2812
        %v2852 = vadd.f32 %v2782, %v2814
        %v2853 = vadd.f32 %v2783, %v2817
        %v2854 = vadd.f32 %v2784, %v2819
        %v2855 = vadd.f32 %v2785, %v2822
        %v2856 = vadd.f32 %v2786, %v2824
        %v2857 = vadd.f32 %v2787, %v2827
        %v2858 = vadd.f32 %v2788, %v2829
        %v2859 = vadd.f32 %v2789, %v2832
        %v2860 = vadd.f32 %v2790, %v2834
        %v2861 = vadd.f32 %v2791, %v2837
        %v2862 = vadd.f32 %v2792, %v2839
        %v2863 = vadd.f32 %v2793, %v2842
        %v2864 = vadd.f32 %v2794, %v2844
        %v2865 = vadd.f32 %v2795, %v2847
        %v2866 = vadd.f32 %v2796, %v2849
        %s2867 = scalar_lea.vmem %s1, 54
        %v2868 = vld [vmem:[%s2867] sm:$0x3]
        %v2870 = vsel %vm426, %v2868, 0
        %2872 = vmatpush.bf16.msra.mxu0 0
        %2873 = vmatpush.bf16.msra.mxu0 0
        %2874 = vmatpush.bf16.msra.mxu0 0
        %2875 = vmatpush.bf16.msra.mxu0 0
        %2876 = vmatpush.bf16.msra.mxu0 0
        %2877 = vmatpush.bf16.msra.mxu0 0
        %2878 = vmatpush.bf16.msra.mxu0 0
        %2879 = vmatpush.bf16.msra.mxu0 %v2870
        %2880 = vmatmul.bf16.gmra.mxu0 %v406
        %v2881 = vpop.f32.mrf.mxu0
        %v2882 = vadd.f32 0.0, %v2881
        %v2883 = vpop.f32.mrf.mxu0
        %v2884 = vadd.f32 0.0, %v2883
        %2885 = vmatmul.bf16.gmra.mxu0 %v409
        %v2886 = vpop.f32.mrf.mxu0
        %v2887 = vadd.f32 0.0, %v2886
        %v2888 = vpop.f32.mrf.mxu0
        %v2889 = vadd.f32 0.0, %v2888
        %2890 = vmatmul.bf16.gmra.mxu0 %v412
        %v2891 = vpop.f32.mrf.mxu0
        %v2892 = vadd.f32 0.0, %v2891
        %v2893 = vpop.f32.mrf.mxu0
        %v2894 = vadd.f32 0.0, %v2893
        %2895 = vmatmul.bf16.gmra.mxu0 %v415
        %v2896 = vpop.f32.mrf.mxu0
        %v2897 = vadd.f32 0.0, %v2896
        %v2898 = vpop.f32.mrf.mxu0
        %v2899 = vadd.f32 0.0, %v2898
        %2900 = vmatmul.bf16.gmra.mxu0 %v418
        %v2901 = vpop.f32.mrf.mxu0
        %v2902 = vadd.f32 0.0, %v2901
        %v2903 = vpop.f32.mrf.mxu0
        %v2904 = vadd.f32 0.0, %v2903
        %2905 = vmatmul.bf16.gmra.mxu0 %v421
        %v2906 = vpop.f32.mrf.mxu0
        %v2907 = vadd.f32 0.0, %v2906
        %v2908 = vpop.f32.mrf.mxu0
        %v2909 = vadd.f32 0.0, %v2908
        %2910 = vmatmul.bf16.gmra.mxu0 %v424
        %v2911 = vpop.f32.mrf.mxu0
        %v2912 = vadd.f32 0.0, %v2911
        %v2913 = vpop.f32.mrf.mxu0
        %v2914 = vadd.f32 0.0, %v2913
        %2915 = vmatmul.bf16.gmra.mxu0 %v1263
        %v2916 = vpop.f32.mrf.mxu0
        %v2917 = vadd.f32 0.0, %v2916
        %v2918 = vpop.f32.mrf.mxu0
        %v2919 = vadd.f32 0.0, %v2918
        %2920 = vdwg.mxu0
        %v2921 = vadd.f32 %v2851, %v2882
        %v2922 = vadd.f32 %v2852, %v2884
        %v2923 = vadd.f32 %v2853, %v2887
        %v2924 = vadd.f32 %v2854, %v2889
        %v2925 = vadd.f32 %v2855, %v2892
        %v2926 = vadd.f32 %v2856, %v2894
        %v2927 = vadd.f32 %v2857, %v2897
        %v2928 = vadd.f32 %v2858, %v2899
        %v2929 = vadd.f32 %v2859, %v2902
        %v2930 = vadd.f32 %v2860, %v2904
        %v2931 = vadd.f32 %v2861, %v2907
        %v2932 = vadd.f32 %v2862, %v2909
        %v2933 = vadd.f32 %v2863, %v2912
        %v2934 = vadd.f32 %v2864, %v2914
        %v2935 = vadd.f32 %v2865, %v2917
        %v2936 = vadd.f32 %v2866, %v2919
        %s2937 = scalar_lea.vmem %s1, 56
        %v2938 = vld [vmem:[%s2937] sm:$0x3]
        %v2940 = vsel %vm426, %v2938, 0
        %2942 = vmatpush.bf16.msra.mxu0 0
        %2943 = vmatpush.bf16.msra.mxu0 0
        %2944 = vmatpush.bf16.msra.mxu0 0
        %2945 = vmatpush.bf16.msra.mxu0 0
        %2946 = vmatpush.bf16.msra.mxu0 0
        %2947 = vmatpush.bf16.msra.mxu0 0
        %2948 = vmatpush.bf16.msra.mxu0 0
        %2949 = vmatpush.bf16.msra.mxu0 %v2940
        %2950 = vmatmul.bf16.gmra.mxu0 %v851
        %v2951 = vpop.f32.mrf.mxu0
        %v2952 = vadd.f32 0.0, %v2951
        %v2953 = vpop.f32.mrf.mxu0
        %v2954 = vadd.f32 0.0, %v2953
        %2955 = vmatmul.bf16.gmra.mxu0 %v854
        %v2956 = vpop.f32.mrf.mxu0
        %v2957 = vadd.f32 0.0, %v2956
        %v2958 = vpop.f32.mrf.mxu0
        %v2959 = vadd.f32 0.0, %v2958
        %2960 = vmatmul.bf16.gmra.mxu0 %v857
        %v2961 = vpop.f32.mrf.mxu0
        %v2962 = vadd.f32 0.0, %v2961
        %v2963 = vpop.f32.mrf.mxu0
        %v2964 = vadd.f32 0.0, %v2963
        %2965 = vmatmul.bf16.gmra.mxu0 %v860
        %v2966 = vpop.f32.mrf.mxu0
        %v2967 = vadd.f32 0.0, %v2966
        %v2968 = vpop.f32.mrf.mxu0
        %v2969 = vadd.f32 0.0, %v2968
        %2970 = vmatmul.bf16.gmra.mxu0 %v863
        %v2971 = vpop.f32.mrf.mxu0
        %v2972 = vadd.f32 0.0, %v2971
        %v2973 = vpop.f32.mrf.mxu0
        %v2974 = vadd.f32 0.0, %v2973
        %2975 = vmatmul.bf16.gmra.mxu0 %v866
        %v2976 = vpop.f32.mrf.mxu0
        %v2977 = vadd.f32 0.0, %v2976
        %v2978 = vpop.f32.mrf.mxu0
        %v2979 = vadd.f32 0.0, %v2978
        %2980 = vmatmul.bf16.gmra.mxu0 %v1098
        %v2981 = vpop.f32.mrf.mxu0
        %v2982 = vadd.f32 0.0, %v2981
        %v2983 = vpop.f32.mrf.mxu0
        %v2984 = vadd.f32 0.0, %v2983
        %2985 = vmatmul.bf16.gmra.mxu0 %v1344
        %v2986 = vpop.f32.mrf.mxu0
        %v2987 = vadd.f32 0.0, %v2986
        %v2988 = vpop.f32.mrf.mxu0
        %v2989 = vadd.f32 0.0, %v2988
        %2990 = vdwg.mxu0
        %v2991 = vadd.f32 %v2921, %v2952
        %v2992 = vadd.f32 %v2922, %v2954
        %v2993 = vadd.f32 %v2923, %v2957
        %v2994 = vadd.f32 %v2924, %v2959
        %v2995 = vadd.f32 %v2925, %v2962
        %v2996 = vadd.f32 %v2926, %v2964
        %v2997 = vadd.f32 %v2927, %v2967
        %v2998 = vadd.f32 %v2928, %v2969
        %v2999 = vadd.f32 %v2929, %v2972
        %v3000 = vadd.f32 %v2930, %v2974
        %v3001 = vadd.f32 %v2931, %v2977
        %v3002 = vadd.f32 %v2932, %v2979
        %v3003 = vadd.f32 %v2933, %v2982
        %v3004 = vadd.f32 %v2934, %v2984
        %v3005 = vadd.f32 %v2935, %v2987
        %v3006 = vadd.f32 %v2936, %v2989
        %v3007 = vrot.slane %v303, 4
        %v3008 = vrot.slane %v304, 4
        %v3009 = vsel %vm1834, %v3007, %v3008
        %v3010 = vrot.slane %v305, 4
        %v3011 = vsel %vm1834, %v3008, %v3010
        %v3014 = vpack.c.bf16 %v3011, %v3009
        %s3015 = scalar_lea.vmem %s1, 58
        %v3016 = vld [vmem:[%s3015] sm:$0x3]
        %v3018 = vsel %vm401, %v3014, 0
        %v3021 = vsel %vm426, %v3016, 0
        %3023 = vmatpush.bf16.msra.mxu0 0
        %3024 = vmatpush.bf16.msra.mxu0 0
        %3025 = vmatpush.bf16.msra.mxu0 0
        %3026 = vmatpush.bf16.msra.mxu0 0
        %3027 = vmatpush.bf16.msra.mxu0 0
        %3028 = vmatpush.bf16.msra.mxu0 0
        %3029 = vmatpush.bf16.msra.mxu0 0
        %3030 = vmatpush.bf16.msra.mxu0 %v3021
        %3031 = vmatmul.bf16.gmra.mxu0 %v1911
        %v3032 = vpop.f32.mrf.mxu0
        %v3033 = vadd.f32 0.0, %v3032
        %v3034 = vpop.f32.mrf.mxu0
        %v3035 = vadd.f32 0.0, %v3034
        %3036 = vmatmul.bf16.gmra.mxu0 %v1914
        %v3037 = vpop.f32.mrf.mxu0
        %v3038 = vadd.f32 0.0, %v3037
        %v3039 = vpop.f32.mrf.mxu0
        %v3040 = vadd.f32 0.0, %v3039
        %3041 = vmatmul.bf16.gmra.mxu0 %v1917
        %v3042 = vpop.f32.mrf.mxu0
        %v3043 = vadd.f32 0.0, %v3042
        %v3044 = vpop.f32.mrf.mxu0
        %v3045 = vadd.f32 0.0, %v3044
        %3046 = vmatmul.bf16.gmra.mxu0 %v1920
        %v3047 = vpop.f32.mrf.mxu0
        %v3048 = vadd.f32 0.0, %v3047
        %v3049 = vpop.f32.mrf.mxu0
        %v3050 = vadd.f32 0.0, %v3049
        %3051 = vmatmul.bf16.gmra.mxu0 %v1923
        %v3052 = vpop.f32.mrf.mxu0
        %v3053 = vadd.f32 0.0, %v3052
        %v3054 = vpop.f32.mrf.mxu0
        %v3055 = vadd.f32 0.0, %v3054
        %3056 = vmatmul.bf16.gmra.mxu0 %v2288
        %v3057 = vpop.f32.mrf.mxu0
        %v3058 = vadd.f32 0.0, %v3057
        %v3059 = vpop.f32.mrf.mxu0
        %v3060 = vadd.f32 0.0, %v3059
        %3061 = vmatmul.bf16.gmra.mxu0 %v2653
        %v3062 = vpop.f32.mrf.mxu0
        %v3063 = vadd.f32 0.0, %v3062
        %v3064 = vpop.f32.mrf.mxu0
        %v3065 = vadd.f32 0.0, %v3064
        %3066 = vmatmul.bf16.gmra.mxu0 %v3018
        %v3067 = vpop.f32.mrf.mxu0
        %v3068 = vadd.f32 0.0, %v3067
        %v3069 = vpop.f32.mrf.mxu0
        %v3070 = vadd.f32 0.0, %v3069
        %3071 = vdwg.mxu0
        %v3072 = vadd.f32 %v2991, %v3033
        %v3073 = vadd.f32 %v2992, %v3035
        %v3074 = vadd.f32 %v2993, %v3038
        %v3075 = vadd.f32 %v2994, %v3040
        %v3076 = vadd.f32 %v2995, %v3043
        %v3077 = vadd.f32 %v2996, %v3045
        %v3078 = vadd.f32 %v2997, %v3048
        %v3079 = vadd.f32 %v2998, %v3050
        %v3080 = vadd.f32 %v2999, %v3053
        %v3081 = vadd.f32 %v3000, %v3055
        %v3082 = vadd.f32 %v3001, %v3058
        %v3083 = vadd.f32 %v3002, %v3060
        %v3084 = vadd.f32 %v3003, %v3063
        %v3085 = vadd.f32 %v3004, %v3065
        %v3086 = vadd.f32 %v3005, %v3068
        %v3087 = vadd.f32 %v3006, %v3070
        %v3088 = vpack.c.bf16 %v307, %v306
        %s3089 = scalar_lea.vmem %s1, 60
        %v3090 = vld [vmem:[%s3089] sm:$0x3]
        %v3092 = vsel %vm401, %v3088, 0
        %v3095 = vsel %vm426, %v3090, 0
        %3097 = vmatpush.bf16.msra.mxu0 0
        %3098 = vmatpush.bf16.msra.mxu0 0
        %3099 = vmatpush.bf16.msra.mxu0 0
        %3100 = vmatpush.bf16.msra.mxu0 0
        %3101 = vmatpush.bf16.msra.mxu0 0
        %3102 = vmatpush.bf16.msra.mxu0 0
        %3103 = vmatpush.bf16.msra.mxu0 0
        %3104 = vmatpush.bf16.msra.mxu0 %v3095
        %3105 = vmatmul.bf16.gmra.mxu0 %v1609
        %v3106 = vpop.f32.mrf.mxu0
        %v3107 = vadd.f32 0.0, %v3106
        %v3108 = vpop.f32.mrf.mxu0
        %v3109 = vadd.f32 0.0, %v3108
        %3110 = vmatmul.bf16.gmra.mxu0 %v1612
        %v3111 = vpop.f32.mrf.mxu0
        %v3112 = vadd.f32 0.0, %v3111
        %v3113 = vpop.f32.mrf.mxu0
        %v3114 = vadd.f32 0.0, %v3113
        %3115 = vmatmul.bf16.gmra.mxu0 %v1615
        %v3116 = vpop.f32.mrf.mxu0
        %v3117 = vadd.f32 0.0, %v3116
        %v3118 = vpop.f32.mrf.mxu0
        %v3119 = vadd.f32 0.0, %v3118
        %3120 = vmatmul.bf16.gmra.mxu0 %v1618
        %v3121 = vpop.f32.mrf.mxu0
        %v3122 = vadd.f32 0.0, %v3121
        %v3123 = vpop.f32.mrf.mxu0
        %v3124 = vadd.f32 0.0, %v3123
        %3125 = vmatmul.bf16.gmra.mxu0 %v1997
        %v3126 = vpop.f32.mrf.mxu0
        %v3127 = vadd.f32 0.0, %v3126
        %v3128 = vpop.f32.mrf.mxu0
        %v3129 = vadd.f32 0.0, %v3128
        %3130 = vmatmul.bf16.gmra.mxu0 %v2362
        %v3131 = vpop.f32.mrf.mxu0
        %v3132 = vadd.f32 0.0, %v3131
        %v3133 = vpop.f32.mrf.mxu0
        %v3134 = vadd.f32 0.0, %v3133
        %3135 = vmatmul.bf16.gmra.mxu0 %v2727
        %v3136 = vpop.f32.mrf.mxu0
        %v3137 = vadd.f32 0.0, %v3136
        %v3138 = vpop.f32.mrf.mxu0
        %v3139 = vadd.f32 0.0, %v3138
        %3140 = vmatmul.bf16.gmra.mxu0 %v3092
        %v3141 = vpop.f32.mrf.mxu0
        %v3142 = vadd.f32 0.0, %v3141
        %v3143 = vpop.f32.mrf.mxu0
        %v3144 = vadd.f32 0.0, %v3143
        %3145 = vdwg.mxu0
        %v3146 = vadd.f32 %v3072, %v3107
        %v3147 = vadd.f32 %v3073, %v3109
        %v3148 = vadd.f32 %v3074, %v3112
        %v3149 = vadd.f32 %v3075, %v3114
        %v3150 = vadd.f32 %v3076, %v3117
        %v3151 = vadd.f32 %v3077, %v3119
        %v3152 = vadd.f32 %v3078, %v3122
        %v3153 = vadd.f32 %v3079, %v3124
        %v3154 = vadd.f32 %v3080, %v3127
        %v3155 = vadd.f32 %v3081, %v3129
        %v3156 = vadd.f32 %v3082, %v3132
        %v3157 = vadd.f32 %v3083, %v3134
        %v3158 = vadd.f32 %v3084, %v3137
        %v3159 = vadd.f32 %v3085, %v3139
        %v3160 = vadd.f32 %v3086, %v3142
        %v3161 = vadd.f32 %v3087, %v3144
        %v3165 = vrot.slane %v306, 1
        %v3166 = vrot.slane %v307, 1
        %v3167 = vsel %vm569, %v3165, %v3166
        %v3168 = vrot.slane %v308, 1
        %v3169 = vsel %vm569, %v3166, %v3168
        %v3172 = vpack.c.bf16 %v3169, %v3167
        %s3173 = scalar_lea.vmem %s1, 62
        %v3174 = vld [vmem:[%s3173] sm:$0x3]
        %v3176 = vsel %vm401, %v3172, 0
        %v3179 = vsel %vm426, %v3174, 0
        %3181 = vmatpush.bf16.msra.mxu0 0
        %3182 = vmatpush.bf16.msra.mxu0 0
        %3183 = vmatpush.bf16.msra.mxu0 0
        %3184 = vmatpush.bf16.msra.mxu0 0
        %3185 = vmatpush.bf16.msra.mxu0 0
        %3186 = vmatpush.bf16.msra.mxu0 0
        %3187 = vmatpush.bf16.msra.mxu0 0
        %3188 = vmatpush.bf16.msra.mxu0 %v3179
        %3189 = vmatmul.bf16.gmra.mxu0 %v711
        %v3190 = vpop.f32.mrf.mxu0
        %v3191 = vadd.f32 0.0, %v3190
        %v3192 = vpop.f32.mrf.mxu0
        %v3193 = vadd.f32 0.0, %v3192
        %3194 = vmatmul.bf16.gmra.mxu0 %v714
        %v3195 = vpop.f32.mrf.mxu0
        %v3196 = vadd.f32 0.0, %v3195
        %v3197 = vpop.f32.mrf.mxu0
        %v3198 = vadd.f32 0.0, %v3197
        %3199 = vmatmul.bf16.gmra.mxu0 %v717
        %v3200 = vpop.f32.mrf.mxu0
        %v3201 = vadd.f32 0.0, %v3200
        %v3202 = vpop.f32.mrf.mxu0
        %v3203 = vadd.f32 0.0, %v3202
        %3204 = vmatmul.bf16.gmra.mxu0 %v720
        %v3205 = vpop.f32.mrf.mxu0
        %v3206 = vadd.f32 0.0, %v3205
        %v3207 = vpop.f32.mrf.mxu0
        %v3208 = vadd.f32 0.0, %v3207
        %3209 = vmatmul.bf16.gmra.mxu0 %v723
        %v3210 = vpop.f32.mrf.mxu0
        %v3211 = vadd.f32 0.0, %v3210
        %v3212 = vpop.f32.mrf.mxu0
        %v3213 = vadd.f32 0.0, %v3212
        %3214 = vmatmul.bf16.gmra.mxu0 %v947
        %v3215 = vpop.f32.mrf.mxu0
        %v3216 = vadd.f32 0.0, %v3215
        %v3217 = vpop.f32.mrf.mxu0
        %v3218 = vadd.f32 0.0, %v3217
        %3219 = vmatmul.bf16.gmra.mxu0 %v1182
        %v3220 = vpop.f32.mrf.mxu0
        %v3221 = vadd.f32 0.0, %v3220
        %v3222 = vpop.f32.mrf.mxu0
        %v3223 = vadd.f32 0.0, %v3222
        %3224 = vmatmul.bf16.gmra.mxu0 %v3176
        %v3225 = vpop.f32.mrf.mxu0
        %v3226 = vadd.f32 0.0, %v3225
        %v3227 = vpop.f32.mrf.mxu0
        %v3228 = vadd.f32 0.0, %v3227
        %3229 = vdwg.mxu0
        %v3230 = vadd.f32 %v3146, %v3191
        %v3231 = vadd.f32 %v3147, %v3193
        %v3232 = vadd.f32 %v3148, %v3196
        %v3233 = vadd.f32 %v3149, %v3198
        %v3234 = vadd.f32 %v3150, %v3201
        %v3235 = vadd.f32 %v3151, %v3203
        %v3236 = vadd.f32 %v3152, %v3206
        %v3237 = vadd.f32 %v3153, %v3208
        %v3238 = vadd.f32 %v3154, %v3211
        %v3239 = vadd.f32 %v3155, %v3213
        %v3240 = vadd.f32 %v3156, %v3216
        %v3241 = vadd.f32 %v3157, %v3218
        %v3242 = vadd.f32 %v3158, %v3221
        %v3243 = vadd.f32 %v3159, %v3223
        %v3244 = vadd.f32 %v3160, %v3226
        %v3245 = vadd.f32 %v3161, %v3228
        %v3246 = vrot.slane %v306, 2
        %v3247 = vrot.slane %v307, 2
        %v3248 = vsel %vm334, %v3246, %v3247
        %v3249 = vrot.slane %v308, 2
        %v3250 = vsel %vm334, %v3247, %v3249
        %v3253 = vpack.c.bf16 %v3250, %v3248
        %s3254 = scalar_lea.vmem %s1, 64
        %v3255 = vld [vmem:[%s3254] sm:$0x3]
        %v3257 = vsel %vm401, %v3253, 0
        %v3260 = vsel %vm426, %v3255, 0
        %3262 = vmatpush.bf16.msra.mxu0 0
        %3263 = vmatpush.bf16.msra.mxu0 0
        %3264 = vmatpush.bf16.msra.mxu0 0
        %3265 = vmatpush.bf16.msra.mxu0 0
        %3266 = vmatpush.bf16.msra.mxu0 0
        %3267 = vmatpush.bf16.msra.mxu0 0
        %3268 = vmatpush.bf16.msra.mxu0 0
        %3269 = vmatpush.bf16.msra.mxu0 %v3260
        %3270 = vmatmul.bf16.gmra.mxu0 %v409
        %v3271 = vpop.f32.mrf.mxu0
        %v3272 = vadd.f32 0.0, %v3271
        %v3273 = vpop.f32.mrf.mxu0
        %v3274 = vadd.f32 0.0, %v3273
        %3275 = vmatmul.bf16.gmra.mxu0 %v412
        %v3276 = vpop.f32.mrf.mxu0
        %v3277 = vadd.f32 0.0, %v3276
        %v3278 = vpop.f32.mrf.mxu0
        %v3279 = vadd.f32 0.0, %v3278
        %3280 = vmatmul.bf16.gmra.mxu0 %v415
        %v3281 = vpop.f32.mrf.mxu0
        %v3282 = vadd.f32 0.0, %v3281
        %v3283 = vpop.f32.mrf.mxu0
        %v3284 = vadd.f32 0.0, %v3283
        %3285 = vmatmul.bf16.gmra.mxu0 %v418
        %v3286 = vpop.f32.mrf.mxu0
        %v3287 = vadd.f32 0.0, %v3286
        %v3288 = vpop.f32.mrf.mxu0
        %v3289 = vadd.f32 0.0, %v3288
        %3290 = vmatmul.bf16.gmra.mxu0 %v421
        %v3291 = vpop.f32.mrf.mxu0
        %v3292 = vadd.f32 0.0, %v3291
        %v3293 = vpop.f32.mrf.mxu0
        %v3294 = vadd.f32 0.0, %v3293
        %3295 = vmatmul.bf16.gmra.mxu0 %v424
        %v3296 = vpop.f32.mrf.mxu0
        %v3297 = vadd.f32 0.0, %v3296
        %v3298 = vpop.f32.mrf.mxu0
        %v3299 = vadd.f32 0.0, %v3298
        %3300 = vmatmul.bf16.gmra.mxu0 %v1263
        %v3301 = vpop.f32.mrf.mxu0
        %v3302 = vadd.f32 0.0, %v3301
        %v3303 = vpop.f32.mrf.mxu0
        %v3304 = vadd.f32 0.0, %v3303
        %3305 = vmatmul.bf16.gmra.mxu0 %v3257
        %v3306 = vpop.f32.mrf.mxu0
        %v3307 = vadd.f32 0.0, %v3306
        %v3308 = vpop.f32.mrf.mxu0
        %v3309 = vadd.f32 0.0, %v3308
        %3310 = vdwg.mxu0
        %v3311 = vadd.f32 %v3230, %v3272
        %v3312 = vadd.f32 %v3231, %v3274
        %v3313 = vadd.f32 %v3232, %v3277
        %v3314 = vadd.f32 %v3233, %v3279
        %v3315 = vadd.f32 %v3234, %v3282
        %v3316 = vadd.f32 %v3235, %v3284
        %v3317 = vadd.f32 %v3236, %v3287
        %v3318 = vadd.f32 %v3237, %v3289
        %v3319 = vadd.f32 %v3238, %v3292
        %v3320 = vadd.f32 %v3239, %v3294
        %v3321 = vadd.f32 %v3240, %v3297
        %v3322 = vadd.f32 %v3241, %v3299
        %v3323 = vadd.f32 %v3242, %v3302
        %v3324 = vadd.f32 %v3243, %v3304
        %v3325 = vadd.f32 %v3244, %v3307
        %v3326 = vadd.f32 %v3245, %v3309
        %v3327 = vrot.slane %v306, 3
        %v3328 = vrot.slane %v307, 3
        %v3329 = vsel %vm777, %v3327, %v3328
        %v3330 = vrot.slane %v308, 3
        %v3331 = vsel %vm777, %v3328, %v3330
        %v3334 = vpack.c.bf16 %v3331, %v3329
        %s3335 = scalar_lea.vmem %s1, 66
        %v3336 = vld [vmem:[%s3335] sm:$0x3]
        %v3338 = vsel %vm401, %v3334, 0
        %v3341 = vsel %vm426, %v3336, 0
        %3343 = vmatpush.bf16.msra.mxu0 0
        %3344 = vmatpush.bf16.msra.mxu0 0
        %3345 = vmatpush.bf16.msra.mxu0 0
        %3346 = vmatpush.bf16.msra.mxu0 0
        %3347 = vmatpush.bf16.msra.mxu0 0
        %3348 = vmatpush.bf16.msra.mxu0 0
        %3349 = vmatpush.bf16.msra.mxu0 0
        %3350 = vmatpush.bf16.msra.mxu0 %v3341
        %3351 = vmatmul.bf16.gmra.mxu0 %v854
        %v3352 = vpop.f32.mrf.mxu0
        %v3353 = vadd.f32 0.0, %v3352
        %v3354 = vpop.f32.mrf.mxu0
        %v3355 = vadd.f32 0.0, %v3354
        %3356 = vmatmul.bf16.gmra.mxu0 %v857
        %v3357 = vpop.f32.mrf.mxu0
        %v3358 = vadd.f32 0.0, %v3357
        %v3359 = vpop.f32.mrf.mxu0
        %v3360 = vadd.f32 0.0, %v3359
        %3361 = vmatmul.bf16.gmra.mxu0 %v860
        %v3362 = vpop.f32.mrf.mxu0
        %v3363 = vadd.f32 0.0, %v3362
        %v3364 = vpop.f32.mrf.mxu0
        %v3365 = vadd.f32 0.0, %v3364
        %3366 = vmatmul.bf16.gmra.mxu0 %v863
        %v3367 = vpop.f32.mrf.mxu0
        %v3368 = vadd.f32 0.0, %v3367
        %v3369 = vpop.f32.mrf.mxu0
        %v3370 = vadd.f32 0.0, %v3369
        %3371 = vmatmul.bf16.gmra.mxu0 %v866
        %v3372 = vpop.f32.mrf.mxu0
        %v3373 = vadd.f32 0.0, %v3372
        %v3374 = vpop.f32.mrf.mxu0
        %v3375 = vadd.f32 0.0, %v3374
        %3376 = vmatmul.bf16.gmra.mxu0 %v1098
        %v3377 = vpop.f32.mrf.mxu0
        %v3378 = vadd.f32 0.0, %v3377
        %v3379 = vpop.f32.mrf.mxu0
        %v3380 = vadd.f32 0.0, %v3379
        %3381 = vmatmul.bf16.gmra.mxu0 %v1344
        %v3382 = vpop.f32.mrf.mxu0
        %v3383 = vadd.f32 0.0, %v3382
        %v3384 = vpop.f32.mrf.mxu0
        %v3385 = vadd.f32 0.0, %v3384
        %3386 = vmatmul.bf16.gmra.mxu0 %v3338
        %v3387 = vpop.f32.mrf.mxu0
        %v3388 = vadd.f32 0.0, %v3387
        %v3389 = vpop.f32.mrf.mxu0
        %v3390 = vadd.f32 0.0, %v3389
        %3391 = vdwg.mxu0
        %v3392 = vadd.f32 %v3311, %v3353
        %v3393 = vadd.f32 %v3312, %v3355
        %v3394 = vadd.f32 %v3313, %v3358
        %v3395 = vadd.f32 %v3314, %v3360
        %v3396 = vadd.f32 %v3315, %v3363
        %v3397 = vadd.f32 %v3316, %v3365
        %v3398 = vadd.f32 %v3317, %v3368
        %v3399 = vadd.f32 %v3318, %v3370
        %v3400 = vadd.f32 %v3319, %v3373
        %v3401 = vadd.f32 %v3320, %v3375
        %v3402 = vadd.f32 %v3321, %v3378
        %v3403 = vadd.f32 %v3322, %v3380
        %v3404 = vadd.f32 %v3323, %v3383
        %v3405 = vadd.f32 %v3324, %v3385
        %v3406 = vadd.f32 %v3325, %v3388
        %v3407 = vadd.f32 %v3326, %v3390
        %v3408 = vrot.slane %v306, 4
        %v3409 = vrot.slane %v307, 4
        %v3410 = vsel %vm1834, %v3408, %v3409
        %v3411 = vrot.slane %v308, 4
        %v3412 = vsel %vm1834, %v3409, %v3411
        %v3415 = vpack.c.bf16 %v3412, %v3410
        %s3416 = scalar_lea.vmem %s1, 68
        %v3417 = vld [vmem:[%s3416] sm:$0x3]
        %v3419 = vsel %vm401, %v3415, 0
        %v3422 = vsel %vm426, %v3417, 0
        %3424 = vmatpush.bf16.msra.mxu0 0
        %3425 = vmatpush.bf16.msra.mxu0 0
        %3426 = vmatpush.bf16.msra.mxu0 0
        %3427 = vmatpush.bf16.msra.mxu0 0
        %3428 = vmatpush.bf16.msra.mxu0 0
        %3429 = vmatpush.bf16.msra.mxu0 0
        %3430 = vmatpush.bf16.msra.mxu0 0
        %3431 = vmatpush.bf16.msra.mxu0 %v3422
        %3432 = vmatmul.bf16.gmra.mxu0 %v1914
        %v3433 = vpop.f32.mrf.mxu0
        %v3434 = vadd.f32 0.0, %v3433
        %v3435 = vpop.f32.mrf.mxu0
        %v3436 = vadd.f32 0.0, %v3435
        %3437 = vmatmul.bf16.gmra.mxu0 %v1917
        %v3438 = vpop.f32.mrf.mxu0
        %v3439 = vadd.f32 0.0, %v3438
        %v3440 = vpop.f32.mrf.mxu0
        %v3441 = vadd.f32 0.0, %v3440
        %3442 = vmatmul.bf16.gmra.mxu0 %v1920
        %v3443 = vpop.f32.mrf.mxu0
        %v3444 = vadd.f32 0.0, %v3443
        %v3445 = vpop.f32.mrf.mxu0
        %v3446 = vadd.f32 0.0, %v3445
        %3447 = vmatmul.bf16.gmra.mxu0 %v1923
        %v3448 = vpop.f32.mrf.mxu0
        %v3449 = vadd.f32 0.0, %v3448
        %v3450 = vpop.f32.mrf.mxu0
        %v3451 = vadd.f32 0.0, %v3450
        %3452 = vmatmul.bf16.gmra.mxu0 %v2288
        %v3453 = vpop.f32.mrf.mxu0
        %v3454 = vadd.f32 0.0, %v3453
        %v3455 = vpop.f32.mrf.mxu0
        %v3456 = vadd.f32 0.0, %v3455
        %3457 = vmatmul.bf16.gmra.mxu0 %v2653
        %v3458 = vpop.f32.mrf.mxu0
        %v3459 = vadd.f32 0.0, %v3458
        %v3460 = vpop.f32.mrf.mxu0
        %v3461 = vadd.f32 0.0, %v3460
        %3462 = vmatmul.bf16.gmra.mxu0 %v3018
        %v3463 = vpop.f32.mrf.mxu0
        %v3464 = vadd.f32 0.0, %v3463
        %v3465 = vpop.f32.mrf.mxu0
        %v3466 = vadd.f32 0.0, %v3465
        %3467 = vmatmul.bf16.gmra.mxu0 %v3419
        %v3468 = vpop.f32.mrf.mxu0
        %v3469 = vadd.f32 0.0, %v3468
        %v3470 = vpop.f32.mrf.mxu0
        %v3471 = vadd.f32 0.0, %v3470
        %3472 = vdwg.mxu0
        %v3473 = vadd.f32 %v3392, %v3434
        %v3474 = vadd.f32 %v3393, %v3436
        %v3475 = vadd.f32 %v3394, %v3439
        %v3476 = vadd.f32 %v3395, %v3441
        %v3477 = vadd.f32 %v3396, %v3444
        %v3478 = vadd.f32 %v3397, %v3446
        %v3479 = vadd.f32 %v3398, %v3449
        %v3480 = vadd.f32 %v3399, %v3451
        %v3481 = vadd.f32 %v3400, %v3454
        %v3482 = vadd.f32 %v3401, %v3456
        %v3483 = vadd.f32 %v3402, %v3459
        %v3484 = vadd.f32 %v3403, %v3461
        %v3485 = vadd.f32 %v3404, %v3464
        %v3486 = vadd.f32 %v3405, %v3466
        %v3487 = vadd.f32 %v3406, %v3469
        %v3488 = vadd.f32 %v3407, %v3471
        %v3489 = vperm.slane %v309, 2
        %v3490 = vadd.f32 %v3473, %v3489
        %v3491 = vadd.f32 %v3474, %v3489
        %v3492 = vadd.f32 %v3475, %v3489
        %v3493 = vadd.f32 %v3476, %v3489
        %v3494 = vadd.f32 %v3477, %v3489
        %v3495 = vadd.f32 %v3478, %v3489
        %v3496 = vadd.f32 %v3479, %v3489
        %v3497 = vadd.f32 %v3480, %v3489
        %v3498 = vadd.f32 %v3481, %v3489
        %v3499 = vadd.f32 %v3482, %v3489
        %v3500 = vadd.f32 %v3483, %v3489
        %v3501 = vadd.f32 %v3484, %v3489
        %v3502 = vadd.f32 %v3485, %v3489
        %v3503 = vadd.f32 %v3486, %v3489
        %v3504 = vadd.f32 %v3487, %v3489
        %v3505 = vadd.f32 %v3488, %v3489
        %v3506 = vmax.f32 %v3490, 0.0
        %v3507 = vmax.f32 %v3491, 0.0
        %v3508 = vmax.f32 %v3492, 0.0
        %v3509 = vmax.f32 %v3493, 0.0
        %v3510 = vmax.f32 %v3494, 0.0
        %v3511 = vmax.f32 %v3495, 0.0
        %v3512 = vmax.f32 %v3496, 0.0
        %v3513 = vmax.f32 %v3497, 0.0
        %v3514 = vmax.f32 %v3498, 0.0
        %v3515 = vmax.f32 %v3499, 0.0
        %v3516 = vmax.f32 %v3500, 0.0
        %v3517 = vmax.f32 %v3501, 0.0
        %v3518 = vmax.f32 %v3502, 0.0
        %v3519 = vmax.f32 %v3503, 0.0
        %v3520 = vmax.f32 %v3504, 0.0
        %v3521 = vmax.f32 %v3505, 0.0
        %v3522 = vpack.c.bf16 %v3506, %v3506
        %v3523 = vpack.c.bf16 %v3507, %v3507
        %v3524 = vpack.c.bf16 %v3508, %v3508
        %v3525 = vpack.c.bf16 %v3509, %v3509
        %v3526 = vpack.c.bf16 %v3510, %v3510
        %v3527 = vpack.c.bf16 %v3511, %v3511
        %v3528 = vpack.c.bf16 %v3512, %v3512
        %v3529 = vpack.c.bf16 %v3513, %v3513
        %v3530 = vpack.c.bf16 %v3514, %v3514
        %v3531 = vpack.c.bf16 %v3515, %v3515
        %v3532 = vpack.c.bf16 %v3516, %v3516
        %v3533 = vpack.c.bf16 %v3517, %v3517
        %v3534 = vpack.c.bf16 %v3518, %v3518
        %v3535 = vpack.c.bf16 %v3519, %v3519
        %v3536 = vpack.c.bf16 %v3520, %v3520
        %v3537 = vpack.c.bf16 %v3521, %v3521
        %s3538 = scalar_lea.vmem %s211, 128 [#allocation2]
        %3539 = vst.msk [vmem:[%s3538] sm:$0xf] %vm511, %v3522
        %3540 = vst.msk [vmem:[%s3538 + $0x4] sm:$0xf] %vm511, %v3523
        %3541 = vst.msk [vmem:[%s3538 + $0x8] sm:$0xf] %vm511, %v3524
        %3542 = vst.msk [vmem:[%s3538 + $0xc] sm:$0xf] %vm511, %v3525
        %3543 = vst.msk [vmem:[%s3538 + $0x10] sm:$0xf] %vm511, %v3526
        %3544 = vst.msk [vmem:[%s3538 + $0x14] sm:$0xf] %vm511, %v3527
        %3545 = vst.msk [vmem:[%s3538 + $0x18] sm:$0xf] %vm511, %v3528
        %3546 = vst.msk [vmem:[%s3538 + $0x1c] sm:$0xf] %vm511, %v3529
        %3547 = vst.msk [vmem:[%s3538 + $0x20] sm:$0xf] %vm511, %v3530
        %3548 = vst.msk [vmem:[%s3538 + $0x24] sm:$0xf] %vm511, %v3531
        %3549 = vst.msk [vmem:[%s3538 + $0x28] sm:$0xf] %vm511, %v3532
        %3550 = vst.msk [vmem:[%s3538 + $0x2c] sm:$0xf] %vm511, %v3533
        %3551 = vst.msk [vmem:[%s3538 + $0x30] sm:$0xf] %vm511, %v3534
        %3552 = vst.msk [vmem:[%s3538 + $0x34] sm:$0xf] %vm511, %v3535
        %3553 = vst.msk [vmem:[%s3538 + $0x38] sm:$0xf] %vm511, %v3536
        %3554 = vst.msk [vmem:[%s3538 + $0x3c] sm:$0xf] %vm511, %v3537
        %v3555 = vsel %vm401, %v3506, 0.0
        %v3556 = vsel %vm401, %v3507, 0.0
        %v3557 = vadd.f32 %v3555, %v3556
        %v3558 = vsel %vm401, %v3508, 0.0
        %v3559 = vadd.f32 %v3557, %v3558
        %v3560 = vsel %vm401, %v3509, 0.0
        %v3561 = vadd.f32 %v3559, %v3560
        %v3562 = vsel %vm401, %v3510, 0.0
        %v3563 = vadd.f32 %v3561, %v3562
        %v3564 = vsel %vm401, %v3511, 0.0
        %v3565 = vadd.f32 %v3563, %v3564
        %v3566 = vsel %vm401, %v3512, 0.0
        %v3567 = vadd.f32 %v3565, %v3566
        %v3568 = vsel %vm401, %v3513, 0.0
        %v3569 = vadd.f32 %v3567, %v3568
        %v3570 = vsel %vm401, %v3514, 0.0
        %v3571 = vadd.f32 %v3569, %v3570
        %v3572 = vsel %vm401, %v3515, 0.0
        %v3573 = vadd.f32 %v3571, %v3572
        %v3574 = vsel %vm401, %v3516, 0.0
        %v3575 = vadd.f32 %v3573, %v3574
        %v3576 = vsel %vm401, %v3517, 0.0
        %v3577 = vadd.f32 %v3575, %v3576
        %v3578 = vsel %vm401, %v3518, 0.0
        %v3579 = vadd.f32 %v3577, %v3578
        %v3580 = vsel %vm401, %v3519, 0.0
        %v3581 = vadd.f32 %v3579, %v3580
        %v3582 = vsel %vm401, %v3520, 0.0
        %v3583 = vadd.f32 %v3581, %v3582
        %v3584 = vsel %vm401, %v3521, 0.0
        %v3585 = vadd.f32 %v3583, %v3584
        %v3586 = vrot.slane %v3585, 4
        %v3587 = vadd.f32 %v3585, %v3586
        %v3588 = vrot.slane %v3587, 2
        %v3589 = vadd.f32 %v3587, %v3588
        %v3590 = vrot.slane %v3589, 1
        %v3591 = vadd.f32 %v3589, %v3590
        %v3592 = vadd.f32 %v1517, %v3591
        %v3593 = vld [vmem:[%s229] sm:$0x1]
        %v3594 = vadd.f32 %v3593, %v3592
        %vm3595 = vcmask 24576
        %3596 = vst.msk [vmem:[%s229] sm:$0x1] %vm3595, %v3594
        %s3597 = sand.u32 %s108, 1
        %s3598 = sand.u32 %s108, 1
        %s3599 = smul.addr %s3598, 192
        %s3600 = scalar_lea.vmem [#allocation2], %s3599
        %p3601 = scmp.lt.s32.totalorder %s20, 1
        %s3602 = scalar_select %p3601, %s20, 1
        %s3603 = scalar_lea.vmem %s4, %s3602
        // Predicated region
        $region37: #{sk_attention_pallas.3} parent=31 // pred_check
          %p3604 = pneg %p118
        $region38: #{sk_attention_pallas.3} parent=31 // pred_check_branch
          %3606 = sbr.rel (%p3604) target = $region40
        $region39: #{sk_attention_pallas.3} parent=31 // pred_region
          %s3607 = smul.u32 16, %s21
          %s3608 = smul.addr %s20, 32
          %s3609 = sadd.s32 %s3607, %s3608
          %s3610 = smul.addr %s3609, 4
          %s3611 = scalar_lea.vmem %s3, %s3610
          // Predicated region
          $region41: #{sk_attention_pallas.3} parent=39 // pred_check
            _
          $region42: #{sk_attention_pallas.3} parent=39 // pred_check_branch
            %3613 = sbr.rel (0) target = $region44
          $region43: #{sk_attention_pallas.3} parent=39 // pred_region
            // Predicated region
            $region45: #{sk_attention_pallas.3} parent=43 // pred_check
              _
            $region46: #{sk_attention_pallas.3} parent=43 // pred_check_branch
              %3615 = sbr.rel target = $region48
            $region47: #{sk_attention_pallas.3} parent=43 // pred_region
              // Predicated region
              $region60: #{sk_attention_pallas.3} parent=47 // pred_check
                _
              $region61: #{sk_attention_pallas.3} parent=47 // pred_check_branch
                %3725 = sbr.rel (0) target = $region63
              $region62: #{sk_attention_pallas.3} parent=47 // pred_region
                loop: start=0, step=1, limit=1
                $region64: #{sk_attention_pallas.3} parent=62 // loop_pre_header
                  _
                $region65: #{sk_attention_pallas.3} parent=62 // loop_header
                  %s3727 = sphi 0, %s3731
                  %p3728 = scmp.ge.s32.totalorder %s3727, 1
                  %s3732 = sphi %s3600, %s3600
                  %s3733 = sphi %s3611, %s3611
                $region66: #{sk_attention_pallas.3} parent=62 // loop_header_branch
                  %3730 = sbr.rel (%p3728) target = $region70
                $region67: #{sk_attention_pallas.3} parent=62 // loop_body
                  _
                $region68: #{sk_attention_pallas.3} parent=62 // loop_footer
                  %s3731 = sadd.s32 1, %s3727
                $region69: #{sk_attention_pallas.3} parent=62 // loop_footer_branch
                  %3726 = sbr.rel target = $region65
                $region70: #{sk_attention_pallas.3} parent=62 // loop_exit
                  _
                %s3735 = ssub.s32 16, 1
                loop: start=0, step=1, limit=1
                $region71: #{sk_attention_pallas.3} parent=62 // loop_pre_header
                  _
                $region72: #{sk_attention_pallas.3} parent=62 // loop_header
                  %s3737 = sphi 0, %s3741
                  %p3738 = scmp.ge.s32.totalorder %s3737, 1
                  %s3742 = sphi %s3600, %s3600
                  %s3743 = sphi %s3611, %s3611
                $region73: #{sk_attention_pallas.3} parent=62 // loop_header_branch
                  %3740 = sbr.rel (%p3738) target = $region77
                $region74: #{sk_attention_pallas.3} parent=62 // loop_body
                  %v3744 = vld [vmem:[%s3742] sm:%s3735]
                  %3745 = vst [vmem:[%s3743] sm:%s3735] %v3744
                  %v3746 = vld [vmem:[%s3742 + $0x4] sm:%s3735]
                  %3747 = vst [vmem:[%s3743 + $0x4] sm:%s3735] %v3746
                  %v3748 = vld [vmem:[%s3742 + $0x8] sm:%s3735]
                  %3749 = vst [vmem:[%s3743 + $0x8] sm:%s3735] %v3748
                  %v3750 = vld [vmem:[%s3742 + $0xc] sm:%s3735]
                  %3751 = vst [vmem:[%s3743 + $0xc] sm:%s3735] %v3750
                  %v3752 = vld [vmem:[%s3742 + $0x10] sm:%s3735]
                  %3753 = vst [vmem:[%s3743 + $0x10] sm:%s3735] %v3752
                  %v3754 = vld [vmem:[%s3742 + $0x14] sm:%s3735]
                  %3755 = vst [vmem:[%s3743 + $0x14] sm:%s3735] %v3754
                  %v3756 = vld [vmem:[%s3742 + $0x18] sm:%s3735]
                  %3757 = vst [vmem:[%s3743 + $0x18] sm:%s3735] %v3756
                  %v3758 = vld [vmem:[%s3742 + $0x1c] sm:%s3735]
                  %3759 = vst [vmem:[%s3743 + $0x1c] sm:%s3735] %v3758
                  %v3760 = vld [vmem:[%s3742 + $0x20] sm:%s3735]
                  %3761 = vst [vmem:[%s3743 + $0x20] sm:%s3735] %v3760
                  %v3762 = vld [vmem:[%s3742 + $0x24] sm:%s3735]
                  %3763 = vst [vmem:[%s3743 + $0x24] sm:%s3735] %v3762
                  %v3764 = vld [vmem:[%s3742 + $0x28] sm:%s3735]
                  %3765 = vst [vmem:[%s3743 + $0x28] sm:%s3735] %v3764
                  %v3766 = vld [vmem:[%s3742 + $0x2c] sm:%s3735]
                  %3767 = vst [vmem:[%s3743 + $0x2c] sm:%s3735] %v3766
                  %v3768 = vld [vmem:[%s3742 + $0x30] sm:%s3735]
                  %3769 = vst [vmem:[%s3743 + $0x30] sm:%s3735] %v3768
                  %v3770 = vld [vmem:[%s3742 + $0x34] sm:%s3735]
                  %3771 = vst [vmem:[%s3743 + $0x34] sm:%s3735] %v3770
                  %v3772 = vld [vmem:[%s3742 + $0x38] sm:%s3735]
                  %3773 = vst [vmem:[%s3743 + $0x38] sm:%s3735] %v3772
                  %v3774 = vld [vmem:[%s3742 + $0x3c] sm:%s3735]
                  %3775 = vst [vmem:[%s3743 + $0x3c] sm:%s3735] %v3774
                  %v3776 = vld [vmem:[%s3742 + $0x40] sm:%s3735]
                  %3777 = vst [vmem:[%s3743 + $0x100] sm:%s3735] %v3776
                  %v3778 = vld [vmem:[%s3742 + $0x44] sm:%s3735]
                  %3779 = vst [vmem:[%s3743 + $0x104] sm:%s3735] %v3778
                  %v3780 = vld [vmem:[%s3742 + $0x48] sm:%s3735]
                  %3781 = vst [vmem:[%s3743 + $0x108] sm:%s3735] %v3780
                  %v3782 = vld [vmem:[%s3742 + $0x4c] sm:%s3735]
                  %3783 = vst [vmem:[%s3743 + $0x10c] sm:%s3735] %v3782
                  %v3784 = vld [vmem:[%s3742 + $0x50] sm:%s3735]
                  %3785 = vst [vmem:[%s3743 + $0x110] sm:%s3735] %v3784
                  %v3786 = vld [vmem:[%s3742 + $0x54] sm:%s3735]
                  %3787 = vst [vmem:[%s3743 + $0x114] sm:%s3735] %v3786
                  %v3788 = vld [vmem:[%s3742 + $0x58] sm:%s3735]
                  %3789 = vst [vmem:[%s3743 + $0x118] sm:%s3735] %v3788
                  %v3790 = vld [vmem:[%s3742 + $0x5c] sm:%s3735]
                  %3791 = vst [vmem:[%s3743 + $0x11c] sm:%s3735] %v3790
                  %v3792 = vld [vmem:[%s3742 + $0x60] sm:%s3735]
                  %3793 = vst [vmem:[%s3743 + $0x120] sm:%s3735] %v3792
                  %v3794 = vld [vmem:[%s3742 + $0x64] sm:%s3735]
                  %3795 = vst [vmem:[%s3743 + $0x124] sm:%s3735] %v3794
                  %v3796 = vld [vmem:[%s3742 + $0x68] sm:%s3735]
                  %3797 = vst [vmem:[%s3743 + $0x128] sm:%s3735] %v3796
                  %v3798 = vld [vmem:[%s3742 + $0x6c] sm:%s3735]
                  %3799 = vst [vmem:[%s3743 + $0x12c] sm:%s3735] %v3798
                  %v3800 = vld [vmem:[%s3742 + $0x70] sm:%s3735]
                  %3801 = vst [vmem:[%s3743 + $0x130] sm:%s3735] %v3800
                  %v3802 = vld [vmem:[%s3742 + $0x74] sm:%s3735]
                  %3803 = vst [vmem:[%s3743 + $0x134] sm:%s3735] %v3802
                  %v3804 = vld [vmem:[%s3742 + $0x78] sm:%s3735]
                  %3805 = vst [vmem:[%s3743 + $0x138] sm:%s3735] %v3804
                  %v3806 = vld [vmem:[%s3742 + $0x7c] sm:%s3735]
                  %3807 = vst [vmem:[%s3743 + $0x13c] sm:%s3735] %v3806
                  %v3808 = vld [vmem:[%s3742 + $0x80] sm:%s3735]
                  %3809 = vst [vmem:[%s3743 + $0x200] sm:%s3735] %v3808
                  %v3810 = vld [vmem:[%s3742 + $0x84] sm:%s3735]
                  %3811 = vst [vmem:[%s3743 + $0x204] sm:%s3735] %v3810
                  %v3812 = vld [vmem:[%s3742 + $0x88] sm:%s3735]
                  %3813 = vst [vmem:[%s3743 + $0x208] sm:%s3735] %v3812
                  %v3814 = vld [vmem:[%s3742 + $0x8c] sm:%s3735]
                  %3815 = vst [vmem:[%s3743 + $0x20c] sm:%s3735] %v3814
                  %v3816 = vld [vmem:[%s3742 + $0x90] sm:%s3735]
                  %3817 = vst [vmem:[%s3743 + $0x210] sm:%s3735] %v3816
                  %v3818 = vld [vmem:[%s3742 + $0x94] sm:%s3735]
                  %3819 = vst [vmem:[%s3743 + $0x214] sm:%s3735] %v3818
                  %v3820 = vld [vmem:[%s3742 + $0x98] sm:%s3735]
                  %3821 = vst [vmem:[%s3743 + $0x218] sm:%s3735] %v3820
                  %v3822 = vld [vmem:[%s3742 + $0x9c] sm:%s3735]
                  %3823 = vst [vmem:[%s3743 + $0x21c] sm:%s3735] %v3822
                  %v3824 = vld [vmem:[%s3742 + $0xa0] sm:%s3735]
                  %3825 = vst [vmem:[%s3743 + $0x220] sm:%s3735] %v3824
                  %v3826 = vld [vmem:[%s3742 + $0xa4] sm:%s3735]
                  %3827 = vst [vmem:[%s3743 + $0x224] sm:%s3735] %v3826
                  %v3828 = vld [vmem:[%s3742 + $0xa8] sm:%s3735]
                  %3829 = vst [vmem:[%s3743 + $0x228] sm:%s3735] %v3828
                  %v3830 = vld [vmem:[%s3742 + $0xac] sm:%s3735]
                  %3831 = vst [vmem:[%s3743 + $0x22c] sm:%s3735] %v3830
                  %v3832 = vld [vmem:[%s3742 + $0xb0] sm:%s3735]
                  %3833 = vst [vmem:[%s3743 + $0x230] sm:%s3735] %v3832
                  %v3834 = vld [vmem:[%s3742 + $0xb4] sm:%s3735]
                  %3835 = vst [vmem:[%s3743 + $0x234] sm:%s3735] %v3834
                  %v3836 = vld [vmem:[%s3742 + $0xb8] sm:%s3735]
                  %3837 = vst [vmem:[%s3743 + $0x238] sm:%s3735] %v3836
                  %v3838 = vld [vmem:[%s3742 + $0xbc] sm:%s3735]
                  %3839 = vst [vmem:[%s3743 + $0x23c] sm:%s3735] %v3838
                $region75: #{sk_attention_pallas.3} parent=62 // loop_footer
                  %s3741 = sadd.s32 1, %s3737
                $region76: #{sk_attention_pallas.3} parent=62 // loop_footer_branch
                  %3736 = sbr.rel target = $region72
                $region77: #{sk_attention_pallas.3} parent=62 // loop_exit
                  _
              $region63: #{sk_attention_pallas.3} parent=47 // pred_fallthru
                _
            $region48: #{sk_attention_pallas.3} parent=43 // pred_fallthru
              _
            // Predicated region
            $region49: #{sk_attention_pallas.3} parent=43 // pred_check
              _
            $region50: #{sk_attention_pallas.3} parent=43 // pred_check_branch
              %3617 = sbr.rel (0) target = $region52
            $region51: #{sk_attention_pallas.3} parent=43 // pred_region
              %s3619 = ssub.s32 16, 1
              loop: start=0, step=1, limit=1
              $region53: #{sk_attention_pallas.3} parent=51 // loop_pre_header
                _
              $region54: #{sk_attention_pallas.3} parent=51 // loop_header
                %s3621 = sphi 0, %s3625
                %p3622 = scmp.ge.s32.totalorder %s3621, 1
                %s3626 = sphi %s3600, %s3600
                %s3627 = sphi %s3611, %s3611
              $region55: #{sk_attention_pallas.3} parent=51 // loop_header_branch
                %3624 = sbr.rel (%p3622) target = $region59
              $region56: #{sk_attention_pallas.3} parent=51 // loop_body
                %v3628 = vld [vmem:[%s3626] sm:%s3619]
                %3629 = vst [vmem:[%s3627] sm:%s3619] %v3628
                %v3630 = vld [vmem:[%s3626 + $0x4] sm:%s3619]
                %3631 = vst [vmem:[%s3627 + $0x4] sm:%s3619] %v3630
                %v3632 = vld [vmem:[%s3626 + $0x8] sm:%s3619]
                %3633 = vst [vmem:[%s3627 + $0x8] sm:%s3619] %v3632
                %v3634 = vld [vmem:[%s3626 + $0xc] sm:%s3619]
                %3635 = vst [vmem:[%s3627 + $0xc] sm:%s3619] %v3634
                %v3636 = vld [vmem:[%s3626 + $0x10] sm:%s3619]
                %3637 = vst [vmem:[%s3627 + $0x10] sm:%s3619] %v3636
                %v3638 = vld [vmem:[%s3626 + $0x14] sm:%s3619]
                %3639 = vst [vmem:[%s3627 + $0x14] sm:%s3619] %v3638
                %v3640 = vld [vmem:[%s3626 + $0x18] sm:%s3619]
                %3641 = vst [vmem:[%s3627 + $0x18] sm:%s3619] %v3640
                %v3642 = vld [vmem:[%s3626 + $0x1c] sm:%s3619]
                %3643 = vst [vmem:[%s3627 + $0x1c] sm:%s3619] %v3642
                %v3644 = vld [vmem:[%s3626 + $0x20] sm:%s3619]
                %3645 = vst [vmem:[%s3627 + $0x20] sm:%s3619] %v3644
                %v3646 = vld [vmem:[%s3626 + $0x24] sm:%s3619]
                %3647 = vst [vmem:[%s3627 + $0x24] sm:%s3619] %v3646
                %v3648 = vld [vmem:[%s3626 + $0x28] sm:%s3619]
                %3649 = vst [vmem:[%s3627 + $0x28] sm:%s3619] %v3648
                %v3650 = vld [vmem:[%s3626 + $0x2c] sm:%s3619]
                %3651 = vst [vmem:[%s3627 + $0x2c] sm:%s3619] %v3650
                %v3652 = vld [vmem:[%s3626 + $0x30] sm:%s3619]
                %3653 = vst [vmem:[%s3627 + $0x30] sm:%s3619] %v3652
                %v3654 = vld [vmem:[%s3626 + $0x34] sm:%s3619]
                %3655 = vst [vmem:[%s3627 + $0x34] sm:%s3619] %v3654
                %v3656 = vld [vmem:[%s3626 + $0x38] sm:%s3619]
                %3657 = vst [vmem:[%s3627 + $0x38] sm:%s3619] %v3656
                %v3658 = vld [vmem:[%s3626 + $0x3c] sm:%s3619]
                %3659 = vst [vmem:[%s3627 + $0x3c] sm:%s3619] %v3658
                %v3660 = vld [vmem:[%s3626 + $0x40] sm:%s3619]
                %3661 = vst [vmem:[%s3627 + $0x100] sm:%s3619] %v3660
                %v3662 = vld [vmem:[%s3626 + $0x44] sm:%s3619]
                %3663 = vst [vmem:[%s3627 + $0x104] sm:%s3619] %v3662
                %v3664 = vld [vmem:[%s3626 + $0x48] sm:%s3619]
                %3665 = vst [vmem:[%s3627 + $0x108] sm:%s3619] %v3664
                %v3666 = vld [vmem:[%s3626 + $0x4c] sm:%s3619]
                %3667 = vst [vmem:[%s3627 + $0x10c] sm:%s3619] %v3666
                %v3668 = vld [vmem:[%s3626 + $0x50] sm:%s3619]
                %3669 = vst [vmem:[%s3627 + $0x110] sm:%s3619] %v3668
                %v3670 = vld [vmem:[%s3626 + $0x54] sm:%s3619]
                %3671 = vst [vmem:[%s3627 + $0x114] sm:%s3619] %v3670
                %v3672 = vld [vmem:[%s3626 + $0x58] sm:%s3619]
                %3673 = vst [vmem:[%s3627 + $0x118] sm:%s3619] %v3672
                %v3674 = vld [vmem:[%s3626 + $0x5c] sm:%s3619]
                %3675 = vst [vmem:[%s3627 + $0x11c] sm:%s3619] %v3674
                %v3676 = vld [vmem:[%s3626 + $0x60] sm:%s3619]
                %3677 = vst [vmem:[%s3627 + $0x120] sm:%s3619] %v3676
                %v3678 = vld [vmem:[%s3626 + $0x64] sm:%s3619]
                %3679 = vst [vmem:[%s3627 + $0x124] sm:%s3619] %v3678
                %v3680 = vld [vmem:[%s3626 + $0x68] sm:%s3619]
                %3681 = vst [vmem:[%s3627 + $0x128] sm:%s3619] %v3680
                %v3682 = vld [vmem:[%s3626 + $0x6c] sm:%s3619]
                %3683 = vst [vmem:[%s3627 + $0x12c] sm:%s3619] %v3682
                %v3684 = vld [vmem:[%s3626 + $0x70] sm:%s3619]
                %3685 = vst [vmem:[%s3627 + $0x130] sm:%s3619] %v3684
                %v3686 = vld [vmem:[%s3626 + $0x74] sm:%s3619]
                %3687 = vst [vmem:[%s3627 + $0x134] sm:%s3619] %v3686
                %v3688 = vld [vmem:[%s3626 + $0x78] sm:%s3619]
                %3689 = vst [vmem:[%s3627 + $0x138] sm:%s3619] %v3688
                %v3690 = vld [vmem:[%s3626 + $0x7c] sm:%s3619]
                %3691 = vst [vmem:[%s3627 + $0x13c] sm:%s3619] %v3690
                %v3692 = vld [vmem:[%s3626 + $0x80] sm:%s3619]
                %3693 = vst [vmem:[%s3627 + $0x200] sm:%s3619] %v3692
                %v3694 = vld [vmem:[%s3626 + $0x84] sm:%s3619]
                %3695 = vst [vmem:[%s3627 + $0x204] sm:%s3619] %v3694
                %v3696 = vld [vmem:[%s3626 + $0x88] sm:%s3619]
                %3697 = vst [vmem:[%s3627 + $0x208] sm:%s3619] %v3696
                %v3698 = vld [vmem:[%s3626 + $0x8c] sm:%s3619]
                %3699 = vst [vmem:[%s3627 + $0x20c] sm:%s3619] %v3698
                %v3700 = vld [vmem:[%s3626 + $0x90] sm:%s3619]
                %3701 = vst [vmem:[%s3627 + $0x210] sm:%s3619] %v3700
                %v3702 = vld [vmem:[%s3626 + $0x94] sm:%s3619]
                %3703 = vst [vmem:[%s3627 + $0x214] sm:%s3619] %v3702
                %v3704 = vld [vmem:[%s3626 + $0x98] sm:%s3619]
                %3705 = vst [vmem:[%s3627 + $0x218] sm:%s3619] %v3704
                %v3706 = vld [vmem:[%s3626 + $0x9c] sm:%s3619]
                %3707 = vst [vmem:[%s3627 + $0x21c] sm:%s3619] %v3706
                %v3708 = vld [vmem:[%s3626 + $0xa0] sm:%s3619]
                %3709 = vst [vmem:[%s3627 + $0x220] sm:%s3619] %v3708
                %v3710 = vld [vmem:[%s3626 + $0xa4] sm:%s3619]
                %3711 = vst [vmem:[%s3627 + $0x224] sm:%s3619] %v3710
                %v3712 = vld [vmem:[%s3626 + $0xa8] sm:%s3619]
                %3713 = vst [vmem:[%s3627 + $0x228] sm:%s3619] %v3712
                %v3714 = vld [vmem:[%s3626 + $0xac] sm:%s3619]
                %3715 = vst [vmem:[%s3627 + $0x22c] sm:%s3619] %v3714
                %v3716 = vld [vmem:[%s3626 + $0xb0] sm:%s3619]
                %3717 = vst [vmem:[%s3627 + $0x230] sm:%s3619] %v3716
                %v3718 = vld [vmem:[%s3626 + $0xb4] sm:%s3619]
                %3719 = vst [vmem:[%s3627 + $0x234] sm:%s3619] %v3718
                %v3720 = vld [vmem:[%s3626 + $0xb8] sm:%s3619]
                %3721 = vst [vmem:[%s3627 + $0x238] sm:%s3619] %v3720
                %v3722 = vld [vmem:[%s3626 + $0xbc] sm:%s3619]
                %3723 = vst [vmem:[%s3627 + $0x23c] sm:%s3619] %v3722
              $region57: #{sk_attention_pallas.3} parent=51 // loop_footer
                %s3625 = sadd.s32 1, %s3621
              $region58: #{sk_attention_pallas.3} parent=51 // loop_footer_branch
                %3620 = sbr.rel target = $region54
              $region59: #{sk_attention_pallas.3} parent=51 // loop_exit
                _
            $region52: #{sk_attention_pallas.3} parent=43 // pred_fallthru
              _
          $region44: #{sk_attention_pallas.3} parent=39 // pred_fallthru
            _
          %3840 = vnop
        $region40: #{sk_attention_pallas.3} parent=31 // pred_fallthru
          _
        // Predicated region
        $region78: #{sk_attention_pallas.3} parent=31 // pred_check
          %p3841 = pneg %p144
        $region79: #{sk_attention_pallas.3} parent=31 // pred_check_branch
          %3843 = sbr.rel (%p3841) target = $region81
        $region80: #{sk_attention_pallas.3} parent=31 // pred_region
          _
        $region81: #{sk_attention_pallas.3} parent=31 // pred_fallthru
          _
      $region32: #{sk_attention_pallas.3} parent=5 // pred_fallthru
        _
      %p3844 = scmp.le.s32.totalorder 2, %s11
      // Predicated region
      $region82: #{sk_attention_pallas.3} parent=5 // pred_check
        %p3845 = pneg %p3844
      $region83: #{sk_attention_pallas.3} parent=5 // pred_check_branch
        %3847 = sbr.rel (%p3845) target = $region85
      $region84: #{sk_attention_pallas.3} parent=5 // pred_region
        %s3848 = ssub.s32 %s11, 2
        // Predicated region
        $region86: #{sk_attention_pallas.3} parent=84 // pred_check
          %p3849 = pneg %p124
        $region87: #{sk_attention_pallas.3} parent=84 // pred_check_branch
          %3851 = sbr.rel (%p3849) target = $region89
        $region88: #{sk_attention_pallas.3} parent=84 // pred_region
          %s3852 = sand.u32 %s109, 1
          %s3853 = sand.u32 %s109, 1
          %s3854 = smul.addr %s3853, 192
          %s3855 = scalar_lea.vmem [#allocation2], %s3854
        $region89: #{sk_attention_pallas.3} parent=84 // pred_fallthru
          _
        // Predicated region
        $region90: #{sk_attention_pallas.3} parent=84 // pred_check
          %p3856 = pneg %p150
        $region91: #{sk_attention_pallas.3} parent=84 // pred_check_branch
          %3858 = sbr.rel (%p3856) target = $region93
        $region92: #{sk_attention_pallas.3} parent=84 // pred_region
          %p3859 = scmp.lt.s32.totalorder %s22, 1
          %s3860 = scalar_select %p3859, %s22, 1
          %s3861 = scalar_lea.vmem %s4, %s3860
        $region93: #{sk_attention_pallas.3} parent=84 // pred_fallthru
          _
      $region85: #{sk_attention_pallas.3} parent=5 // pred_fallthru
        _
    $region6: #{sk_attention_pallas.3} parent=1 // loop_footer
      %s15 = sadd.s32 1, %s11
    $region7: #{sk_attention_pallas.3} parent=1 // loop_footer_branch
      %10 = sbr.rel target = $region3
    $region8: #{sk_attention_pallas.3} parent=1 // loop_exit
      _

</llo_original>
